<compile_context>
chip_gen: v7x
topology: tpu7x:2x2x1
jax: 0.10.0
libtpu: 0.0.40
codegen_flags: <defaults>
</compile_context>

<pallas_src>
import jax
import jax.numpy as jnp
from jax.experimental import pallas as pl
from jax.experimental.pallas import tpu as pltpu


def _round_up(x, m):
    return ((x + m - 1) // m) * m


def _pick_tile_h(H):
    # Largest tile height that (a) divides H and (b) still gives >= 2 tiles so
    # the pipeline has depth; falls back to any divisor / whole H.  For real
    # VGG shapes re-derive from the per-generation VMEM budget:
    #   2 inputs * 2 buffers * (TH+2)*Wp*C*4B  <= ~24 MB (v7x) / ~64 MB (v6e).
    for th in (64, 32, 16, 8):
        if H % th == 0 and H // th >= 2:
            return th
    for th in (64, 32, 16, 8):
        if H % th == 0:
            return th
    return H


# ------------------------------ Pallas wrapper -------------------------------
def perceptual_loss_pallas(real_x, recon_x, w1, b1, w2, b2):
    """real_x, recon_x: (N, C, H, W) f32 (PyTorch NCHW convention).
    w1: (C1, C, 3, 3), b1: (C1,), w2: (C2, C, 3, 3), b2: (C2,) (PyTorch OIHW).
    b1/b2 are accepted for API parity but cancel inside every L1 difference."""
    del b1, b2  # biases cancel: |conv(a)+b - (conv(c)+b)| = |conv(a-c)|
    N, C, H, W = real_x.shape
    C1, C2 = w1.shape[0], w2.shape[0]
    Hp, Wp = H + 2, W + 2
    C1p, C2p = _round_up(C1, 128), _round_up(C2, 128)
    K = 9 * C

    TH = _pick_tile_h(H)
    nH = H // TH
    G = N * nH                       # total grid steps (batch x H-tiles)

    def prep_x(x):
        # NCHW -> NHWC (channels on lanes), zero pad H/W by 1 (3x3, pad=1),
        # then cut nH overlapping row windows of TH+2 rows (2-row halo).
        x = jnp.transpose(x.astype(jnp.float32), (0, 2, 3, 1))
        x = jnp.pad(x, ((0, 0), (1, 1), (1, 1), (0, 0)))           # (N, Hp, Wp, C)
        rows = jnp.arange(nH)[:, None] * TH + jnp.arange(TH + 2)[None, :]
        x = x[:, rows]                                              # (N, nH, TH+2, Wp, C)
        return x.reshape(G, TH + 2, Wp, C)

    # OIHW -> (kh, kw, Cin, Cout) -> (9*Cin, Cout_pad) bf16; row index is
    # (kh*3 + kw)*C + cin, matching the in-kernel tap offsets; zero-padded
    # output columns give exactly-zero outputs so the L1 sums are unaffected.
    def prep_w(w, cout_pad):
        cout = w.shape[0]
        wt = jnp.transpose(w, (2, 3, 1, 0)).reshape(K, cout)
        wt = jnp.pad(wt, ((0, 0), (0, cout_pad - cout)))
        return wt.astype(jnp.bfloat16)

    xr = prep_x(real_x)
    xf = prep_x(recon_x)
    w1p = prep_w(w1, C1p)
    w2p = prep_w(w2, C2p)

    m_total = N * H * W
    inv1 = 1.0 / (m_total * C1)      # mean denominators use TRUE channel counts
    inv2 = 1.0 / (m_total * C)
    inv3 = 1.0 / (m_total * C2)

    def kernel(xr_ref, xf_ref, w1_ref, w2_ref, out_ref):
        xr_t = xr_ref[0]                                      # (TH+2, Wp, C) f32
        xf_t = xf_ref[0]
        d = xf_t - xr_t                                       # conv diff operand
        rd = jnp.maximum(xf_t, 0.0) - jnp.maximum(xr_t, 0.0)  # relu'd diff
        # (zero pad ring: relu(0)-relu(0)=0, so conv-of-diff stays exact.)

        # ReLU L1 term: interior rows only (halo rows are counted by the
        # neighbouring tile / are the zero pad ring).  Leading-dim slice, so
        # no sublane/lane relayout; zero W-pad columns contribute nothing.
        s2 = jnp.sum(jnp.abs(rd[1:1 + TH]))

        # Cast MXU operands to bf16 ONCE, before the nine shifted views.
        d16 = d.astype(jnp.bfloat16)
        rd16 = rd.astype(jnp.bfloat16)
        w1b = w1_ref[...]                                     # (9C, C1p) bf16
        w2b = w2_ref[...]                                     # (9C, C2p) bf16

        acc1 = jnp.zeros((TH * W, C1p), jnp.float32)
        acc2 = jnp.zeros((TH * W, C2p), jnp.float32)
        # Nine accumulated shifted-view dots (no K-axis concat): kh is an
        # outer-dim slice, kw a small sublane shift; weight offsets are static
        # multiples of C so the sub-blocks are aligned.  MXU accumulates f32.
        for kh in range(3):
            for kw in range(3):
                off = (kh * 3 + kw) * C
                tap_d = d16[kh:kh + TH, kw:kw + W, :].reshape(TH * W, C)
                tap_r = rd16[kh:kh + TH, kw:kw + W, :].reshape(TH * W, C)
                acc1 = acc1 + jnp.dot(tap_d, w1b[off:off + C, :],
                                      preferred_element_type=jnp.float32)
                acc2 = acc2 + jnp.dot(tap_r, w2b[off:off + C, :],
                                      preferred_element_type=jnp.float32)

        s1 = jnp.sum(jnp.abs(acc1))                           # padded cols == 0
        s3 = jnp.sum(jnp.abs(acc2))

        partial = (s1 * inv1 + s2 * inv2 + s3 * inv3) * (1.0 / 3.0)
        # lane-dense, unmasked store of this tile's partial loss contribution
        out_ref[...] = jnp.full(out_ref.shape, partial, jnp.float32)

    flops = 2 * m_total * K * (C1p + C2p) + 12 * m_total * C
    bytes_accessed = (2 * G * (TH + 2) * Wp * C * 4      # two activation slabs
                      + K * (C1p + C2p) * 2              # bf16 weights (resident)
                      + G * 8 * 128 * 4)                 # partial-loss output

    out = pl.pallas_call(
        kernel,
        out_shape=jax.ShapeDtypeStruct((G, 8, 128), jnp.float32),
        grid=(G,),
        in_specs=[
            pl.BlockSpec((1, TH + 2, Wp, C), lambda g: (g, 0, 0, 0)),  # real tile
            pl.BlockSpec((1, TH + 2, Wp, C), lambda g: (g, 0, 0, 0)),  # recon tile
            pl.BlockSpec((K, C1p), lambda g: (0, 0)),                  # resident w1
            pl.BlockSpec((K, C2p), lambda g: (0, 0)),                  # resident w2
        ],
        out_specs=pl.BlockSpec((1, 8, 128), lambda g: (g, 0, 0)),
        compiler_params=pltpu.CompilerParams(
            dimension_semantics=("parallel",),     # batch/H tiles across TCs
            # Tiny working set here; 32 MiB is above the v5e 16 MiB default
            # and within every generation's scoped budget (keep <= ~48-56 MB
            # on v7x, can be raised on v6e when TH grows).
            vmem_limit_bytes=32 * 1024 * 1024),
        cost_estimate=pl.CostEstimate(
            flops=flops, transcendentals=0, bytes_accessed=bytes_accessed),
    )(xr, xf, w1p, w2p)

    # each tile's block holds its partial loss broadcast across lanes
    return jnp.sum(out[:, 0, 0])


# ------------------------- plain-JAX reference check --------------------------
def perceptual_loss_ref(real_x, recon_x, w1, b1, w2, b2):
    def conv(x, w, b):
        y = jax.lax.conv_general_dilated(
            x, w, window_strides=(1, 1), padding=((1, 1), (1, 1)),
            dimension_numbers=('NCHW', 'OIHW', 'NCHW'))
        return y + b[None, :, None, None]

    l1 = jnp.mean(jnp.abs(conv(recon_x, w1, b1) - conv(real_x, w1, b1)))
    r_real = jnp.maximum(real_x, 0.0)
    r_recon = jnp.maximum(recon_x, 0.0)
    l2 = jnp.mean(jnp.abs(r_recon - r_real))
    l3 = jnp.mean(jnp.abs(conv(r_recon, w2, b2) - conv(r_real, w2, b2)))
    return (l1 + l2 + l3) / 3.0


# ------------------------------------ main ------------------------------------
if __name__ == "__main__":
    key = jax.random.PRNGKey(0)
    k = jax.random.split(key, 6)

    # Small, consistent shapes (stand-ins for vgg19: conv[5] 64->128, conv[25] 512->512).
    N, C, H, W = 2, 8, 16, 16
    C1, C2 = 16, 8

    real_x = jax.random.normal(k[0], (N, C, H, W), jnp.float32)
    recon_x = jax.random.normal(k[1], (N, C, H, W), jnp.float32)

    # Deterministic synthetic "VGG" weights (Kaiming-ish scale), frozen.
    w1 = jax.random.normal(k[2], (C1, C, 3, 3), jnp.float32) * (2.0 / (C * 9)) ** 0.5
    b1 = jax.random.normal(k[3], (C1,), jnp.float32) * 0.01
    w2 = jax.random.normal(k[4], (C2, C, 3, 3), jnp.float32) * (2.0 / (C * 9)) ** 0.5
    b2 = jax.random.normal(k[5], (C2,), jnp.float32) * 0.01

    loss = perceptual_loss_pallas(real_x, recon_x, w1, b1, w2, b2)
    jax.block_until_ready(loss)

    ref = perceptual_loss_ref(real_x, recon_x, w1, b1, w2, b2)
    assert jnp.allclose(loss, ref, rtol=2e-2, atol=2e-3), (float(loss), float(ref))

    print("KERNEL_OK")
</pallas_src>

<mosaic_0001>
module attributes {stable_mosaic.version = 11 : i64} {
  func.func @kernel(%arg0: i32, %arg1: memref<1x10x18x8xf32, #tpu.memory_space<vmem>>, %arg2: memref<1x10x18x8xf32, #tpu.memory_space<vmem>>, %arg3: memref<72x128xbf16, #tpu.memory_space<vmem>>, %arg4: memref<72x128xbf16, #tpu.memory_space<vmem>>, %arg5: memref<1x8x128xf32, #tpu.memory_space<vmem>>) attributes {dimension_semantics = [#tpu.dimension_semantics<parallel>], iteration_bounds = array<i64: 4>, scalar_prefetch = 0 : i64, scratch_operands = 0 : i64, tpu.core_type = #tpu.core_type<tc>, window_params = [{transform_indices = @transform_0, window_bounds = array<i64: 1, 10, 18, 8>}, {transform_indices = @transform_1, window_bounds = array<i64: 1, 10, 18, 8>}, {pipeline_mode = #tpu.pipeline_mode<synchronous>, transform_indices = @transform_2, window_bounds = array<i64: 72, 128>}, {pipeline_mode = #tpu.pipeline_mode<synchronous>, transform_indices = @transform_3, window_bounds = array<i64: 72, 128>}, {transform_indices = @transform_4, window_bounds = array<i64: 1, 8, 128>}]} {
    %c0 = arith.constant 0 : index
    %c0_0 = arith.constant 0 : index
    %c0_1 = arith.constant 0 : index
    %c0_2 = arith.constant 0 : index
    %0 = vector.load %arg1[%c0, %c0_0, %c0_1, %c0_2] : memref<1x10x18x8xf32, #tpu.memory_space<vmem>>, vector<1x10x18x8xf32>
    %1 = vector.shape_cast %0 : vector<1x10x18x8xf32> to vector<10x18x8xf32>
    %c0_3 = arith.constant 0 : index
    %c0_4 = arith.constant 0 : index
    %c0_5 = arith.constant 0 : index
    %c0_6 = arith.constant 0 : index
    %2 = vector.load %arg2[%c0_3, %c0_4, %c0_5, %c0_6] : memref<1x10x18x8xf32, #tpu.memory_space<vmem>>, vector<1x10x18x8xf32>
    %3 = vector.shape_cast %2 : vector<1x10x18x8xf32> to vector<10x18x8xf32>
    %4 = arith.subf %3, %1 : vector<10x18x8xf32>
    %cst = arith.constant 0.000000e+00 : f32
    %5 = vector.broadcast %cst : f32 to vector<10x18x8xf32>
    %6 = arith.maximumf %3, %5 : vector<10x18x8xf32>
    %cst_7 = arith.constant 0.000000e+00 : f32
    %7 = vector.broadcast %cst_7 : f32 to vector<10x18x8xf32>
    %8 = arith.maximumf %1, %7 : vector<10x18x8xf32>
    %9 = arith.subf %6, %8 : vector<10x18x8xf32>
    %10 = vector.extract_strided_slice %9 {offsets = [1, 0, 0], sizes = [8, 18, 8], strides = [1, 1, 1]} : vector<10x18x8xf32> to vector<8x18x8xf32>
    %11 = math.absf %10 : vector<8x18x8xf32>
    %12 = vector.shape_cast %11 : vector<8x18x8xf32> to vector<1x8x18x8xf32>
    %cst_8 = arith.constant dense<0.000000e+00> : vector<1xf32>
    %13 = vector.multi_reduction <add>, %12, %cst_8 [1, 2, 3] : vector<1x8x18x8xf32> to vector<1xf32>
    %14 = vector.shape_cast %13 : vector<1xf32> to vector<1x1x1x1xf32>
    %15 = vector.extract %14[0, 0, 0, 0] : f32 from vector<1x1x1x1xf32>
    %16 = arith.truncf %4 : vector<10x18x8xf32> to vector<10x18x8xbf16>
    %17 = arith.truncf %9 : vector<10x18x8xf32> to vector<10x18x8xbf16>
    %c0_9 = arith.constant 0 : index
    %c0_10 = arith.constant 0 : index
    %18 = vector.load %arg3[%c0_9, %c0_10] : memref<72x128xbf16, #tpu.memory_space<vmem>>, vector<72x128xbf16>
    %c0_11 = arith.constant 0 : index
    %c0_12 = arith.constant 0 : index
    %19 = vector.load %arg4[%c0_11, %c0_12] : memref<72x128xbf16, #tpu.memory_space<vmem>>, vector<72x128xbf16>
    %cst_13 = arith.constant 0.000000e+00 : f32
    %20 = vector.broadcast %cst_13 : f32 to vector<128x128xf32>
    %cst_14 = arith.constant 0.000000e+00 : f32
    %21 = vector.broadcast %cst_14 : f32 to vector<128x128xf32>
    %22 = vector.extract_strided_slice %16 {offsets = [0, 0, 0], sizes = [8, 16, 8], strides = [1, 1, 1]} : vector<10x18x8xbf16> to vector<8x16x8xbf16>
    %23 = vector.shape_cast %22 : vector<8x16x8xbf16> to vector<128x8xbf16>
    %24 = vector.extract_strided_slice %17 {offsets = [0, 0, 0], sizes = [8, 16, 8], strides = [1, 1, 1]} : vector<10x18x8xbf16> to vector<8x16x8xbf16>
    %25 = vector.shape_cast %24 : vector<8x16x8xbf16> to vector<128x8xbf16>
    %26 = vector.extract_strided_slice %18 {offsets = [0, 0], sizes = [8, 128], strides = [1, 1]} : vector<72x128xbf16> to vector<8x128xbf16>
    %cst_15 = arith.constant dense<0.000000e+00> : vector<128x128xf32>
    %27 = tpu.matmul %23, %26, %cst_15 {dimension_numbers = #tpu.dot_dimension_numbers<[1], [0], [0], [1], [0, 0, 1, 1], [], []>} : vector<128x8xbf16>, vector<8x128xbf16>, vector<128x128xf32> -> vector<128x128xf32>
    %28 = arith.addf %20, %27 : vector<128x128xf32>
    %29 = vector.extract_strided_slice %19 {offsets = [0, 0], sizes = [8, 128], strides = [1, 1]} : vector<72x128xbf16> to vector<8x128xbf16>
    %cst_16 = arith.constant dense<0.000000e+00> : vector<128x128xf32>
    %30 = tpu.matmul %25, %29, %cst_16 {dimension_numbers = #tpu.dot_dimension_numbers<[1], [0], [0], [1], [0, 0, 1, 1], [], []>} : vector<128x8xbf16>, vector<8x128xbf16>, vector<128x128xf32> -> vector<128x128xf32>
    %31 = arith.addf %21, %30 : vector<128x128xf32>
    %32 = vector.extract_strided_slice %16 {offsets = [0, 1, 0], sizes = [8, 16, 8], strides = [1, 1, 1]} : vector<10x18x8xbf16> to vector<8x16x8xbf16>
    %33 = vector.shape_cast %32 : vector<8x16x8xbf16> to vector<128x8xbf16>
    %34 = vector.extract_strided_slice %17 {offsets = [0, 1, 0], sizes = [8, 16, 8], strides = [1, 1, 1]} : vector<10x18x8xbf16> to vector<8x16x8xbf16>
    %35 = vector.shape_cast %34 : vector<8x16x8xbf16> to vector<128x8xbf16>
    %36 = vector.extract_strided_slice %18 {offsets = [8, 0], sizes = [8, 128], strides = [1, 1]} : vector<72x128xbf16> to vector<8x128xbf16>
    %cst_17 = arith.constant dense<0.000000e+00> : vector<128x128xf32>
    %37 = tpu.matmul %33, %36, %cst_17 {dimension_numbers = #tpu.dot_dimension_numbers<[1], [0], [0], [1], [0, 0, 1, 1], [], []>} : vector<128x8xbf16>, vector<8x128xbf16>, vector<128x128xf32> -> vector<128x128xf32>
    %38 = arith.addf %28, %37 : vector<128x128xf32>
    %39 = vector.extract_strided_slice %19 {offsets = [8, 0], sizes = [8, 128], strides = [1, 1]} : vector<72x128xbf16> to vector<8x128xbf16>
    %cst_18 = arith.constant dense<0.000000e+00> : vector<128x128xf32>
    %40 = tpu.matmul %35, %39, %cst_18 {dimension_numbers = #tpu.dot_dimension_numbers<[1], [0], [0], [1], [0, 0, 1, 1], [], []>} : vector<128x8xbf16>, vector<8x128xbf16>, vector<128x128xf32> -> vector<128x128xf32>
    %41 = arith.addf %31, %40 : vector<128x128xf32>
    %42 = vector.extract_strided_slice %16 {offsets = [0, 2, 0], sizes = [8, 16, 8], strides = [1, 1, 1]} : vector<10x18x8xbf16> to vector<8x16x8xbf16>
    %43 = vector.shape_cast %42 : vector<8x16x8xbf16> to vector<128x8xbf16>
    %44 = vector.extract_strided_slice %17 {offsets = [0, 2, 0], sizes = [8, 16, 8], strides = [1, 1, 1]} : vector<10x18x8xbf16> to vector<8x16x8xbf16>
    %45 = vector.shape_cast %44 : vector<8x16x8xbf16> to vector<128x8xbf16>
    %46 = vector.extract_strided_slice %18 {offsets = [16, 0], sizes = [8, 128], strides = [1, 1]} : vector<72x128xbf16> to vector<8x128xbf16>
    %cst_19 = arith.constant dense<0.000000e+00> : vector<128x128xf32>
    %47 = tpu.matmul %43, %46, %cst_19 {dimension_numbers = #tpu.dot_dimension_numbers<[1], [0], [0], [1], [0, 0, 1, 1], [], []>} : vector<128x8xbf16>, vector<8x128xbf16>, vector<128x128xf32> -> vector<128x128xf32>
    %48 = arith.addf %38, %47 : vector<128x128xf32>
    %49 = vector.extract_strided_slice %19 {offsets = [16, 0], sizes = [8, 128], strides = [1, 1]} : vector<72x128xbf16> to vector<8x128xbf16>
    %cst_20 = arith.constant dense<0.000000e+00> : vector<128x128xf32>
    %50 = tpu.matmul %45, %49, %cst_20 {dimension_numbers = #tpu.dot_dimension_numbers<[1], [0], [0], [1], [0, 0, 1, 1], [], []>} : vector<128x8xbf16>, vector<8x128xbf16>, vector<128x128xf32> -> vector<128x128xf32>
    %51 = arith.addf %41, %50 : vector<128x128xf32>
    %52 = vector.extract_strided_slice %16 {offsets = [1, 0, 0], sizes = [8, 16, 8], strides = [1, 1, 1]} : vector<10x18x8xbf16> to vector<8x16x8xbf16>
    %53 = vector.shape_cast %52 : vector<8x16x8xbf16> to vector<128x8xbf16>
    %54 = vector.extract_strided_slice %17 {offsets = [1, 0, 0], sizes = [8, 16, 8], strides = [1, 1, 1]} : vector<10x18x8xbf16> to vector<8x16x8xbf16>
    %55 = vector.shape_cast %54 : vector<8x16x8xbf16> to vector<128x8xbf16>
    %56 = vector.extract_strided_slice %18 {offsets = [24, 0], sizes = [8, 128], strides = [1, 1]} : vector<72x128xbf16> to vector<8x128xbf16>
    %cst_21 = arith.constant dense<0.000000e+00> : vector<128x128xf32>
    %57 = tpu.matmul %53, %56, %cst_21 {dimension_numbers = #tpu.dot_dimension_numbers<[1], [0], [0], [1], [0, 0, 1, 1], [], []>} : vector<128x8xbf16>, vector<8x128xbf16>, vector<128x128xf32> -> vector<128x128xf32>
    %58 = arith.addf %48, %57 : vector<128x128xf32>
    %59 = vector.extract_strided_slice %19 {offsets = [24, 0], sizes = [8, 128], strides = [1, 1]} : vector<72x128xbf16> to vector<8x128xbf16>
    %cst_22 = arith.constant dense<0.000000e+00> : vector<128x128xf32>
    %60 = tpu.matmul %55, %59, %cst_22 {dimension_numbers = #tpu.dot_dimension_numbers<[1], [0], [0], [1], [0, 0, 1, 1], [], []>} : vector<128x8xbf16>, vector<8x128xbf16>, vector<128x128xf32> -> vector<128x128xf32>
    %61 = arith.addf %51, %60 : vector<128x128xf32>
    %62 = vector.extract_strided_slice %16 {offsets = [1, 1, 0], sizes = [8, 16, 8], strides = [1, 1, 1]} : vector<10x18x8xbf16> to vector<8x16x8xbf16>
    %63 = vector.shape_cast %62 : vector<8x16x8xbf16> to vector<128x8xbf16>
    %64 = vector.extract_strided_slice %17 {offsets = [1, 1, 0], sizes = [8, 16, 8], strides = [1, 1, 1]} : vector<10x18x8xbf16> to vector<8x16x8xbf16>
    %65 = vector.shape_cast %64 : vector<8x16x8xbf16> to vector<128x8xbf16>
    %66 = vector.extract_strided_slice %18 {offsets = [32, 0], sizes = [8, 128], strides = [1, 1]} : vector<72x128xbf16> to vector<8x128xbf16>
    %cst_23 = arith.constant dense<0.000000e+00> : vector<128x128xf32>
    %67 = tpu.matmul %63, %66, %cst_23 {dimension_numbers = #tpu.dot_dimension_numbers<[1], [0], [0], [1], [0, 0, 1, 1], [], []>} : vector<128x8xbf16>, vector<8x128xbf16>, vector<128x128xf32> -> vector<128x128xf32>
    %68 = arith.addf %58, %67 : vector<128x128xf32>
    %69 = vector.extract_strided_slice %19 {offsets = [32, 0], sizes = [8, 128], strides = [1, 1]} : vector<72x128xbf16> to vector<8x128xbf16>
    %cst_24 = arith.constant dense<0.000000e+00> : vector<128x128xf32>
    %70 = tpu.matmul %65, %69, %cst_24 {dimension_numbers = #tpu.dot_dimension_numbers<[1], [0], [0], [1], [0, 0, 1, 1], [], []>} : vector<128x8xbf16>, vector<8x128xbf16>, vector<128x128xf32> -> vector<128x128xf32>
    %71 = arith.addf %61, %70 : vector<128x128xf32>
    %72 = vector.extract_strided_slice %16 {offsets = [1, 2, 0], sizes = [8, 16, 8], strides = [1, 1, 1]} : vector<10x18x8xbf16> to vector<8x16x8xbf16>
    %73 = vector.shape_cast %72 : vector<8x16x8xbf16> to vector<128x8xbf16>
    %74 = vector.extract_strided_slice %17 {offsets = [1, 2, 0], sizes = [8, 16, 8], strides = [1, 1, 1]} : vector<10x18x8xbf16> to vector<8x16x8xbf16>
    %75 = vector.shape_cast %74 : vector<8x16x8xbf16> to vector<128x8xbf16>
    %76 = vector.extract_strided_slice %18 {offsets = [40, 0], sizes = [8, 128], strides = [1, 1]} : vector<72x128xbf16> to vector<8x128xbf16>
    %cst_25 = arith.constant dense<0.000000e+00> : vector<128x128xf32>
    %77 = tpu.matmul %73, %76, %cst_25 {dimension_numbers = #tpu.dot_dimension_numbers<[1], [0], [0], [1], [0, 0, 1, 1], [], []>} : vector<128x8xbf16>, vector<8x128xbf16>, vector<128x128xf32> -> vector<128x128xf32>
    %78 = arith.addf %68, %77 : vector<128x128xf32>
    %79 = vector.extract_strided_slice %19 {offsets = [40, 0], sizes = [8, 128], strides = [1, 1]} : vector<72x128xbf16> to vector<8x128xbf16>
    %cst_26 = arith.constant dense<0.000000e+00> : vector<128x128xf32>
    %80 = tpu.matmul %75, %79, %cst_26 {dimension_numbers = #tpu.dot_dimension_numbers<[1], [0], [0], [1], [0, 0, 1, 1], [], []>} : vector<128x8xbf16>, vector<8x128xbf16>, vector<128x128xf32> -> vector<128x128xf32>
    %81 = arith.addf %71, %80 : vector<128x128xf32>
    %82 = vector.extract_strided_slice %16 {offsets = [2, 0, 0], sizes = [8, 16, 8], strides = [1, 1, 1]} : vector<10x18x8xbf16> to vector<8x16x8xbf16>
    %83 = vector.shape_cast %82 : vector<8x16x8xbf16> to vector<128x8xbf16>
    %84 = vector.extract_strided_slice %17 {offsets = [2, 0, 0], sizes = [8, 16, 8], strides = [1, 1, 1]} : vector<10x18x8xbf16> to vector<8x16x8xbf16>
    %85 = vector.shape_cast %84 : vector<8x16x8xbf16> to vector<128x8xbf16>
    %86 = vector.extract_strided_slice %18 {offsets = [48, 0], sizes = [8, 128], strides = [1, 1]} : vector<72x128xbf16> to vector<8x128xbf16>
    %cst_27 = arith.constant dense<0.000000e+00> : vector<128x128xf32>
    %87 = tpu.matmul %83, %86, %cst_27 {dimension_numbers = #tpu.dot_dimension_numbers<[1], [0], [0], [1], [0, 0, 1, 1], [], []>} : vector<128x8xbf16>, vector<8x128xbf16>, vector<128x128xf32> -> vector<128x128xf32>
    %88 = arith.addf %78, %87 : vector<128x128xf32>
    %89 = vector.extract_strided_slice %19 {offsets = [48, 0], sizes = [8, 128], strides = [1, 1]} : vector<72x128xbf16> to vector<8x128xbf16>
    %cst_28 = arith.constant dense<0.000000e+00> : vector<128x128xf32>
    %90 = tpu.matmul %85, %89, %cst_28 {dimension_numbers = #tpu.dot_dimension_numbers<[1], [0], [0], [1], [0, 0, 1, 1], [], []>} : vector<128x8xbf16>, vector<8x128xbf16>, vector<128x128xf32> -> vector<128x128xf32>
    %91 = arith.addf %81, %90 : vector<128x128xf32>
    %92 = vector.extract_strided_slice %16 {offsets = [2, 1, 0], sizes = [8, 16, 8], strides = [1, 1, 1]} : vector<10x18x8xbf16> to vector<8x16x8xbf16>
    %93 = vector.shape_cast %92 : vector<8x16x8xbf16> to vector<128x8xbf16>
    %94 = vector.extract_strided_slice %17 {offsets = [2, 1, 0], sizes = [8, 16, 8], strides = [1, 1, 1]} : vector<10x18x8xbf16> to vector<8x16x8xbf16>
    %95 = vector.shape_cast %94 : vector<8x16x8xbf16> to vector<128x8xbf16>
    %96 = vector.extract_strided_slice %18 {offsets = [56, 0], sizes = [8, 128], strides = [1, 1]} : vector<72x128xbf16> to vector<8x128xbf16>
    %cst_29 = arith.constant dense<0.000000e+00> : vector<128x128xf32>
    %97 = tpu.matmul %93, %96, %cst_29 {dimension_numbers = #tpu.dot_dimension_numbers<[1], [0], [0], [1], [0, 0, 1, 1], [], []>} : vector<128x8xbf16>, vector<8x128xbf16>, vector<128x128xf32> -> vector<128x128xf32>
    %98 = arith.addf %88, %97 : vector<128x128xf32>
    %99 = vector.extract_strided_slice %19 {offsets = [56, 0], sizes = [8, 128], strides = [1, 1]} : vector<72x128xbf16> to vector<8x128xbf16>
    %cst_30 = arith.constant dense<0.000000e+00> : vector<128x128xf32>
    %100 = tpu.matmul %95, %99, %cst_30 {dimension_numbers = #tpu.dot_dimension_numbers<[1], [0], [0], [1], [0, 0, 1, 1], [], []>} : vector<128x8xbf16>, vector<8x128xbf16>, vector<128x128xf32> -> vector<128x128xf32>
    %101 = arith.addf %91, %100 : vector<128x128xf32>
    %102 = vector.extract_strided_slice %16 {offsets = [2, 2, 0], sizes = [8, 16, 8], strides = [1, 1, 1]} : vector<10x18x8xbf16> to vector<8x16x8xbf16>
    %103 = vector.shape_cast %102 : vector<8x16x8xbf16> to vector<128x8xbf16>
    %104 = vector.extract_strided_slice %17 {offsets = [2, 2, 0], sizes = [8, 16, 8], strides = [1, 1, 1]} : vector<10x18x8xbf16> to vector<8x16x8xbf16>
    %105 = vector.shape_cast %104 : vector<8x16x8xbf16> to vector<128x8xbf16>
    %106 = vector.extract_strided_slice %18 {offsets = [64, 0], sizes = [8, 128], strides = [1, 1]} : vector<72x128xbf16> to vector<8x128xbf16>
    %cst_31 = arith.constant dense<0.000000e+00> : vector<128x128xf32>
    %107 = tpu.matmul %103, %106, %cst_31 {dimension_numbers = #tpu.dot_dimension_numbers<[1], [0], [0], [1], [0, 0, 1, 1], [], []>} : vector<128x8xbf16>, vector<8x128xbf16>, vector<128x128xf32> -> vector<128x128xf32>
    %108 = arith.addf %98, %107 : vector<128x128xf32>
    %109 = vector.extract_strided_slice %19 {offsets = [64, 0], sizes = [8, 128], strides = [1, 1]} : vector<72x128xbf16> to vector<8x128xbf16>
    %cst_32 = arith.constant dense<0.000000e+00> : vector<128x128xf32>
    %110 = tpu.matmul %105, %109, %cst_32 {dimension_numbers = #tpu.dot_dimension_numbers<[1], [0], [0], [1], [0, 0, 1, 1], [], []>} : vector<128x8xbf16>, vector<8x128xbf16>, vector<128x128xf32> -> vector<128x128xf32>
    %111 = arith.addf %101, %110 : vector<128x128xf32>
    %112 = math.absf %108 : vector<128x128xf32>
    %113 = vector.shape_cast %112 : vector<128x128xf32> to vector<1x128x128xf32>
    %cst_33 = arith.constant dense<0.000000e+00> : vector<1xf32>
    %114 = vector.multi_reduction <add>, %113, %cst_33 [1, 2] : vector<1x128x128xf32> to vector<1xf32>
    %115 = vector.shape_cast %114 : vector<1xf32> to vector<1x1x1xf32>
    %116 = vector.extract %115[0, 0, 0] : f32 from vector<1x1x1xf32>
    %117 = math.absf %111 : vector<128x128xf32>
    %118 = vector.shape_cast %117 : vector<128x128xf32> to vector<1x128x128xf32>
    %cst_34 = arith.constant dense<0.000000e+00> : vector<1xf32>
    %119 = vector.multi_reduction <add>, %118, %cst_34 [1, 2] : vector<1x128x128xf32> to vector<1xf32>
    %120 = vector.shape_cast %119 : vector<1xf32> to vector<1x1x1xf32>
    %121 = vector.extract %120[0, 0, 0] : f32 from vector<1x1x1xf32>
    %cst_35 = arith.constant 1.22070313E-4 : f32
    %122 = arith.mulf %116, %cst_35 : f32
    %cst_36 = arith.constant 2.44140625E-4 : f32
    %123 = arith.mulf %15, %cst_36 : f32
    %124 = arith.addf %122, %123 : f32
    %cst_37 = arith.constant 2.44140625E-4 : f32
    %125 = arith.mulf %121, %cst_37 : f32
    %126 = arith.addf %124, %125 : f32
    %cst_38 = arith.constant 0.333333343 : f32
    %127 = arith.mulf %126, %cst_38 : f32
    %128 = vector.broadcast %127 : f32 to vector<1x8x128xf32>
    %c0_39 = arith.constant 0 : index
    %c0_40 = arith.constant 0 : index
    %c0_41 = arith.constant 0 : index
    %129 = vector.load %arg5[%c0_39, %c0_40, %c0_41] : memref<1x8x128xf32, #tpu.memory_space<vmem>>, vector<1x8x128xf32>
    tpu.vector_store %arg5[%c0_39, %c0_40, %c0_41], %128 {strides = array<i32>} : memref<1x8x128xf32, #tpu.memory_space<vmem>>, vector<1x8x128xf32>,
    return
  }
  func.func @transform_0(%arg0: i32) -> (i32, i32, i32, i32) {
    %c0_i32 = arith.constant 0 : i32
    %c0_i32_0 = arith.constant 0 : i32
    %c0_i32_1 = arith.constant 0 : i32
    %c0_i32_2 = arith.constant 0 : i32
    return %arg0, %c0_i32, %c0_i32_0, %c0_i32_1 : i32, i32, i32, i32
  }
  func.func @transform_1(%arg0: i32) -> (i32, i32, i32, i32) {
    %c0_i32 = arith.constant 0 : i32
    %c0_i32_0 = arith.constant 0 : i32
    %c0_i32_1 = arith.constant 0 : i32
    %c0_i32_2 = arith.constant 0 : i32
    return %arg0, %c0_i32, %c0_i32_0, %c0_i32_1 : i32, i32, i32, i32
  }
  func.func @transform_2(%arg0: i32) -> (i32, i32) {
    %c0_i32 = arith.constant 0 : i32
    %c0_i32_0 = arith.constant 0 : i32
    %c0_i32_1 = arith.constant 0 : i32
    return %c0_i32, %c0_i32_0 : i32, i32
  }
  func.func @transform_3(%arg0: i32) -> (i32, i32) {
    %c0_i32 = arith.constant 0 : i32
    %c0_i32_0 = arith.constant 0 : i32
    %c0_i32_1 = arith.constant 0 : i32
    return %c0_i32, %c0_i32_0 : i32, i32
  }
  func.func @transform_4(%arg0: i32) -> (i32, i32, i32) {
    %c0_i32 = arith.constant 0 : i32
    %c0_i32_0 = arith.constant 0 : i32
    %c0_i32_1 = arith.constant 0 : i32
    return %arg0, %c0_i32, %c0_i32_0 : i32, i32, i32
  }
}

</mosaic_0001>

<llo_original>
// kernel: tpu_custom_call.1
$region0: #{tpu_custom_call.1}
  #allocation0 [shape = 'u32[]', space=smem, size = 0x4, offset = 0x4, fixed_abs, tag = 'smem constant byte address 0x4 - core index']
  #allocation1 [shape = 'u32[144,128]{1,0:T(1,128)}', space=vmem, size = 0x12000, scoped, tag = 'internal scratch']
  %s0 = inlined_call_operand.vmem [shape: f32[4,10,18,8], index: 0, kind: input, shape index: {}]
  %s1 = inlined_call_operand.vmem [shape: f32[4,10,18,8], index: 1, kind: input, shape index: {}]
  %s2 = inlined_call_operand.vmem [shape: bf16[72,128], index: 2, kind: input, shape index: {}]
  %s3 = inlined_call_operand.vmem [shape: bf16[72,128], index: 3, kind: input, shape index: {}]
  %s4 = inlined_call_operand.hbm [shape: f32[4,8,128], index: 4, kind: output, shape index: {}]
  %s5 = sld [smem:[#allocation0]]
  $region49: #{tpu_custom_call.1} parent=0
    _
  %s7 = ssub.s32 1, %s5
  %s8 = scalar_select 0, %s7, %s5
  $region1: #{tpu_custom_call.1} parent=0
    #allocation2 [shape = 'u8[8192]{0}', space=vmem, size = 0x2000, scoped, tag = 'output window, operand 0']
    #allocation3 [shape = 's32[2]{0}', space=sflag, size = 0x8, scoped, tag = 'scoped memory for tpu_custom_call.1']
    %9 = vsyncpa [#allocation3], 0
    %s10 = scalar_lea.sflag [#allocation3], 1
    %11 = vsyncpa %s10, 0
    loop: start=0, step=1, limit=6
    $region2: #{tpu_custom_call.1} parent=1 // loop_pre_header
      _
    $region3: #{tpu_custom_call.1} parent=1 // loop_header
      %s13 = sphi 0, %s17
      %p14 = scmp.ge.s32.totalorder %s13, 6
      %s23 = sphi 0, %s25
      %s26 = sphi 0, %s23
      %s27 = sphi 0, %s26
      %s43 = sphi 0, %s27
      %s49 = sphi 0, %s51
      %s52 = sphi 0, %s49
      %s53 = sphi 0, %s52
      %s69 = sphi 0, %s53
      %s73 = sphi 0, %s73
      %s75 = sphi 0, %s73
      %s76 = sphi 0, %s75
      %s90 = sphi 0, %s76
      %s94 = sphi 0, %s94
      %s96 = sphi 0, %s94
      %s97 = sphi 0, %s96
      %s111 = sphi 0, %s97
      %s117 = sphi 0, %s119
      %s120 = sphi 0, %s117
      %s121 = sphi 0, %s120
      %s137 = sphi 0, %s121
    $region4: #{tpu_custom_call.1} parent=1 // loop_header_branch
      %16 = sbr.rel (%p14) target = $region8
    $region5: #{tpu_custom_call.1} parent=1 // loop_body
      %s18 = ssub.s32 %s13, 1
      %s19 = ssub.s32 %s13, 2
      %s20 = sadd.s32 %s13, 1
      %s21 = ssub.s32 %s13, %s20
      %p22 = scmp.eq.s32.totalorder %s21, 0
      %s24 = sadd.s32 %s23, 1
      %s25 = scalar_select %p22, %s23, %s24
      %p28 = pneg %p22
      %p29 = scmp.eq.s32.totalorder %s13, 3
      %p30 = por %p28, %p29
      %p31 = scmp.ne.s32.totalorder %s23, %s26
      %p32 = scmp.eq.s32.totalorder %s13, 0
      %p33 = por %p31, %p32
      %p34 = scmp.ne.s32.totalorder %s23, %s26
      %p35 = scmp.eq.s32.totalorder %s18, 3
      %p36 = por %p34, %p35
      %p37 = scmp.ne.s32.totalorder %s26, %s27
      %p38 = scmp.eq.s32.totalorder %s18, 0
      %p39 = por %p37, %p38
      %p40 = scmp.ne.s32.totalorder %s26, %s27
      %p41 = scmp.eq.s32.totalorder %s19, 3
      %p42 = por %p40, %p41
      %p44 = scmp.ne.s32.totalorder %s27, %s43
      %p45 = scmp.eq.s32.totalorder %s19, 0
      %p46 = por %p44, %p45
      %s47 = ssub.s32 %s13, %s20
      %p48 = scmp.eq.s32.totalorder %s47, 0
      %s50 = sadd.s32 %s49, 1
      %s51 = scalar_select %p48, %s49, %s50
      %p54 = pneg %p48
      %p55 = scmp.eq.s32.totalorder %s13, 3
      %p56 = por %p54, %p55
      %p57 = scmp.ne.s32.totalorder %s49, %s52
      %p58 = scmp.eq.s32.totalorder %s13, 0
      %p59 = por %p57, %p58
      %p60 = scmp.ne.s32.totalorder %s49, %s52
      %p61 = scmp.eq.s32.totalorder %s18, 3
      %p62 = por %p60, %p61
      %p63 = scmp.ne.s32.totalorder %s52, %s53
      %p64 = scmp.eq.s32.totalorder %s18, 0
      %p65 = por %p63, %p64
      %p66 = scmp.ne.s32.totalorder %s52, %s53
      %p67 = scmp.eq.s32.totalorder %s19, 3
      %p68 = por %p66, %p67
      %p70 = scmp.ne.s32.totalorder %s53, %s69
      %p71 = scmp.eq.s32.totalorder %s19, 0
      %p72 = por %p70, %p71
      %s74 = sadd.s32 %s73, 1
      %p77 = scmp.eq.s32.totalorder %s13, 3
      %p78 = scmp.ne.s32.totalorder %s73, %s75
      %p79 = scmp.eq.s32.totalorder %s13, 0
      %p80 = por %p78, %p79
      %p81 = scmp.ne.s32.totalorder %s73, %s75
      %p82 = scmp.eq.s32.totalorder %s18, 3
      %p83 = por %p81, %p82
      %p84 = scmp.ne.s32.totalorder %s75, %s76
      %p85 = scmp.eq.s32.totalorder %s18, 0
      %p86 = por %p84, %p85
      %p87 = scmp.ne.s32.totalorder %s75, %s76
      %p88 = scmp.eq.s32.totalorder %s19, 3
      %p89 = por %p87, %p88
      %p91 = scmp.ne.s32.totalorder %s76, %s90
      %p92 = scmp.eq.s32.totalorder %s19, 0
      %p93 = por %p91, %p92
      %s95 = sadd.s32 %s94, 1
      %p98 = scmp.eq.s32.totalorder %s13, 3
      %p99 = scmp.ne.s32.totalorder %s94, %s96
      %p100 = scmp.eq.s32.totalorder %s13, 0
      %p101 = por %p99, %p100
      %p102 = scmp.ne.s32.totalorder %s94, %s96
      %p103 = scmp.eq.s32.totalorder %s18, 3
      %p104 = por %p102, %p103
      %p105 = scmp.ne.s32.totalorder %s96, %s97
      %p106 = scmp.eq.s32.totalorder %s18, 0
      %p107 = por %p105, %p106
      %p108 = scmp.ne.s32.totalorder %s96, %s97
      %p109 = scmp.eq.s32.totalorder %s19, 3
      %p110 = por %p108, %p109
      %p112 = scmp.ne.s32.totalorder %s97, %s111
      %p113 = scmp.eq.s32.totalorder %s19, 0
      %p114 = por %p112, %p113
      %s115 = ssub.s32 %s13, %s20
      %p116 = scmp.eq.s32.totalorder %s115, 0
      %s118 = sadd.s32 %s117, 1
      %s119 = scalar_select %p116, %s117, %s118
      %p122 = pneg %p116
      %p123 = scmp.eq.s32.totalorder %s13, 3
      %p124 = por %p122, %p123
      %p125 = scmp.ne.s32.totalorder %s117, %s120
      %p126 = scmp.eq.s32.totalorder %s13, 0
      %p127 = por %p125, %p126
      %p128 = scmp.ne.s32.totalorder %s117, %s120
      %p129 = scmp.eq.s32.totalorder %s18, 3
      %p130 = por %p128, %p129
      %p131 = scmp.ne.s32.totalorder %s120, %s121
      %p132 = scmp.eq.s32.totalorder %s18, 0
      %p133 = por %p131, %p132
      %p134 = scmp.ne.s32.totalorder %s120, %s121
      %p135 = scmp.eq.s32.totalorder %s19, 3
      %p136 = por %p134, %p135
      %p138 = scmp.ne.s32.totalorder %s121, %s137
      %p139 = scmp.eq.s32.totalorder %s19, 0
      %p140 = por %p138, %p139
      %p141 = scmp.le.s32.totalorder 1, %s13
      %p142 = scmp.lt.s32.totalorder %s13, 5
      %p143 = pnand %p141, %p142
      %p144 = pneg %p143
      // Predicated region
      $region9: #{tpu_custom_call.1} parent=5 // pred_check
        _
      $region10: #{tpu_custom_call.1} parent=5 // pred_check_branch
        %146 = sbr.rel (%p143) target = $region12
      $region11: #{tpu_custom_call.1} parent=5 // pred_region
        %s147 = ssub.s32 %s13, 1
        // Predicated region
        $region13: #{tpu_custom_call.1} parent=11 // pred_check
          %p148 = pneg %p86
        $region14: #{tpu_custom_call.1} parent=11 // pred_check_branch
          %150 = sbr.rel (%p148) target = $region16
        $region15: #{tpu_custom_call.1} parent=11 // pred_region
          _
        $region16: #{tpu_custom_call.1} parent=11 // pred_fallthru
          _
        // Predicated region
        $region17: #{tpu_custom_call.1} parent=11 // pred_check
          %p151 = pneg %p107
        $region18: #{tpu_custom_call.1} parent=11 // pred_check_branch
          %153 = sbr.rel (%p151) target = $region20
        $region19: #{tpu_custom_call.1} parent=11 // pred_region
          _
        $region20: #{tpu_custom_call.1} parent=11 // pred_fallthru
          _
      $region12: #{tpu_custom_call.1} parent=5 // pred_fallthru
        _
      %p154 = scmp.lt.s32.totalorder %s13, 4
      // Predicated region
      $region21: #{tpu_custom_call.1} parent=5 // pred_check
        %p155 = pneg %p154
      $region22: #{tpu_custom_call.1} parent=5 // pred_check_branch
        %157 = sbr.rel (%p155) target = $region24
      $region23: #{tpu_custom_call.1} parent=5 // pred_region
        // Predicated region
        $region25: #{tpu_custom_call.1} parent=23 // pred_check
          %p158 = pneg %p33
        $region26: #{tpu_custom_call.1} parent=23 // pred_check_branch
          %160 = sbr.rel (%p158) target = $region28
        $region27: #{tpu_custom_call.1} parent=23 // pred_region
          %p161 = scmp.lt.s32.totalorder %s13, 3
          %s162 = scalar_select %p161, %s13, 3
          %s163 = smul.addr %s162, 30
          %s164 = smul.addr %s163, 8
          %s165 = scalar_lea.vmem %s0, %s164
        $region28: #{tpu_custom_call.1} parent=23 // pred_fallthru
          _
        // Predicated region
        $region29: #{tpu_custom_call.1} parent=23 // pred_check
          %p166 = pneg %p59
        $region30: #{tpu_custom_call.1} parent=23 // pred_check_branch
          %168 = sbr.rel (%p166) target = $region32
        $region31: #{tpu_custom_call.1} parent=23 // pred_region
          %p169 = scmp.lt.s32.totalorder %s13, 3
          %s170 = scalar_select %p169, %s13, 3
          %s171 = smul.addr %s170, 30
          %s172 = smul.addr %s171, 8
          %s173 = scalar_lea.vmem %s1, %s172
        $region32: #{tpu_custom_call.1} parent=23 // pred_fallthru
          _
      $region24: #{tpu_custom_call.1} parent=5 // pred_fallthru
        _
      %p174 = scmp.le.s32.totalorder 1, %s13
      %p175 = scmp.lt.s32.totalorder %s13, 5
      %p176 = pnand %p174, %p175
      %p177 = pneg %p176
      // Predicated region
      $region33: #{tpu_custom_call.1} parent=5 // pred_check
        _
      $region34: #{tpu_custom_call.1} parent=5 // pred_check_branch
        %179 = sbr.rel (%p176) target = $region36
      $region35: #{tpu_custom_call.1} parent=5 // pred_region
        %s180 = ssub.s32 %s13, 1
        %p181 = scmp.lt.s32.totalorder %s18, 3
        %s182 = scalar_select %p181, %s18, 3
        %s183 = smul.addr %s182, 30
        %s184 = smul.addr %s183, 8
        %s185 = scalar_lea.vmem %s0, %s184
        %p186 = pneg %p39
        %p187 = pneg %p36
        %p188 = scmp.lt.s32.totalorder %s18, 3
        %s189 = scalar_select %p188, %s18, 3
        %s190 = smul.addr %s189, 30
        %s191 = smul.addr %s190, 8
        %s192 = scalar_lea.vmem %s1, %s191
        %p193 = pneg %p65
        %p194 = pneg %p62
        %p195 = pneg %p86
        %p196 = pneg %p83
        %p197 = pneg %p107
        %p198 = pneg %p104
        %p199 = pneg %p133
        %p200 = pneg %p130
        %s201 = sand.u32 %s120, 1
        %s202 = scalar_lea.sflag [#allocation3], %s201
        %s203 = sand.u32 %s120, 1
        %s204 = smul.addr %s203, 8
        %s205 = scalar_lea.vmem [#allocation2], %s204
        %p206 = scmp.lt.s32.totalorder %s18, 3
        %s207 = scalar_select %p206, %s18, 3
        %s208 = smul.addr %s207, 30
        %s209 = smul.addr %s208, 8
        %s210 = scalar_lea.vmem %s0, %s209
        %p211 = scmp.lt.s32.totalorder %s18, 3
        %s212 = scalar_select %p211, %s18, 3
        %s213 = smul.addr %s212, 30
        %s214 = smul.addr %s213, 8
        %s215 = scalar_lea.vmem %s1, %s214
        %v217 = vld [vmem:[%s210] sm:$0xff]
        %v218 = vld [vmem:[%s210 + $0x8] sm:$0xff]
        %v219 = vld [vmem:[%s210 + $0x10] sm:$0x3]
        %v220 = vld [vmem:[%s210 + $0x18] sm:$0xff]
        %v221 = vld [vmem:[%s210 + $0x20] sm:$0xff]
        %v222 = vld [vmem:[%s210 + $0x28] sm:$0x3]
        %v223 = vld [vmem:[%s210 + $0x30] sm:$0xff]
        %v224 = vld [vmem:[%s210 + $0x38] sm:$0xff]
        %v225 = vld [vmem:[%s210 + $0x40] sm:$0x3]
        %v226 = vld [vmem:[%s210 + $0x48] sm:$0xff]
        %v227 = vld [vmem:[%s210 + $0x50] sm:$0xff]
        %v228 = vld [vmem:[%s210 + $0x58] sm:$0x3]
        %v229 = vld [vmem:[%s210 + $0x60] sm:$0xff]
        %v230 = vld [vmem:[%s210 + $0x68] sm:$0xff]
        %v231 = vld [vmem:[%s210 + $0x70] sm:$0x3]
        %v232 = vld [vmem:[%s210 + $0x78] sm:$0xff]
        %v233 = vld [vmem:[%s210 + $0x80] sm:$0xff]
        %v234 = vld [vmem:[%s210 + $0x88] sm:$0x3]
        %v235 = vld [vmem:[%s210 + $0x90] sm:$0xff]
        %v236 = vld [vmem:[%s210 + $0x98] sm:$0xff]
        %v237 = vld [vmem:[%s210 + $0xa0] sm:$0x3]
        %v238 = vld [vmem:[%s210 + $0xa8] sm:$0xff]
        %v239 = vld [vmem:[%s210 + $0xb0] sm:$0xff]
        %v240 = vld [vmem:[%s210 + $0xb8] sm:$0x3]
        %v241 = vld [vmem:[%s210 + $0xc0] sm:$0xff]
        %v242 = vld [vmem:[%s210 + $0xc8] sm:$0xff]
        %v243 = vld [vmem:[%s210 + $0xd0] sm:$0x3]
        %v244 = vld [vmem:[%s210 + $0xd8] sm:$0xff]
        %v245 = vld [vmem:[%s210 + $0xe0] sm:$0xff]
        %v246 = vld [vmem:[%s210 + $0xe8] sm:$0x3]
        %v247 = vld [vmem:[%s215] sm:$0xff]
        %v248 = vld [vmem:[%s215 + $0x8] sm:$0xff]
        %v249 = vld [vmem:[%s215 + $0x10] sm:$0x3]
        %v250 = vld [vmem:[%s215 + $0x18] sm:$0xff]
        %v251 = vld [vmem:[%s215 + $0x20] sm:$0xff]
        %v252 = vld [vmem:[%s215 + $0x28] sm:$0x3]
        %v253 = vld [vmem:[%s215 + $0x30] sm:$0xff]
        %v254 = vld [vmem:[%s215 + $0x38] sm:$0xff]
        %v255 = vld [vmem:[%s215 + $0x40] sm:$0x3]
        %v256 = vld [vmem:[%s215 + $0x48] sm:$0xff]
        %v257 = vld [vmem:[%s215 + $0x50] sm:$0xff]
        %v258 = vld [vmem:[%s215 + $0x58] sm:$0x3]
        %v259 = vld [vmem:[%s215 + $0x60] sm:$0xff]
        %v260 = vld [vmem:[%s215 + $0x68] sm:$0xff]
        %v261 = vld [vmem:[%s215 + $0x70] sm:$0x3]
        %v262 = vld [vmem:[%s215 + $0x78] sm:$0xff]
        %v263 = vld [vmem:[%s215 + $0x80] sm:$0xff]
        %v264 = vld [vmem:[%s215 + $0x88] sm:$0x3]
        %v265 = vld [vmem:[%s215 + $0x90] sm:$0xff]
        %v266 = vld [vmem:[%s215 + $0x98] sm:$0xff]
        %v267 = vld [vmem:[%s215 + $0xa0] sm:$0x3]
        %v268 = vld [vmem:[%s215 + $0xa8] sm:$0xff]
        %v269 = vld [vmem:[%s215 + $0xb0] sm:$0xff]
        %v270 = vld [vmem:[%s215 + $0xb8] sm:$0x3]
        %v271 = vld [vmem:[%s215 + $0xc0] sm:$0xff]
        %v272 = vld [vmem:[%s215 + $0xc8] sm:$0xff]
        %v273 = vld [vmem:[%s215 + $0xd0] sm:$0x3]
        %v274 = vld [vmem:[%s215 + $0xd8] sm:$0xff]
        %v275 = vld [vmem:[%s215 + $0xe0] sm:$0xff]
        %v276 = vld [vmem:[%s215 + $0xe8] sm:$0x3]
        %v277 = vsub.f32 %v247, %v217
        %v278 = vsub.f32 %v248, %v218
        %v279 = vsub.f32 %v249, %v219
        %v280 = vsub.f32 %v250, %v220
        %v281 = vsub.f32 %v251, %v221
        %v282 = vsub.f32 %v252, %v222
        %v283 = vsub.f32 %v253, %v223
        %v284 = vsub.f32 %v254, %v224
        %v285 = vsub.f32 %v255, %v225
        %v286 = vsub.f32 %v256, %v226
        %v287 = vsub.f32 %v257, %v227
        %v288 = vsub.f32 %v258, %v228
        %v289 = vsub.f32 %v259, %v229
        %v290 = vsub.f32 %v260, %v230
        %v291 = vsub.f32 %v261, %v231
        %v292 = vsub.f32 %v262, %v232
        %v293 = vsub.f32 %v263, %v233
        %v294 = vsub.f32 %v264, %v234
        %v295 = vsub.f32 %v265, %v235
        %v296 = vsub.f32 %v266, %v236
        %v297 = vsub.f32 %v267, %v237
        %v298 = vsub.f32 %v268, %v238
        %v299 = vsub.f32 %v269, %v239
        %v300 = vsub.f32 %v270, %v240
        %v301 = vsub.f32 %v271, %v241
        %v302 = vsub.f32 %v272, %v242
        %v303 = vsub.f32 %v273, %v243
        %v304 = vsub.f32 %v274, %v244
        %v305 = vsub.f32 %v275, %v245
        %v306 = vsub.f32 %v276, %v246
        %v307 = vmax.f32 %v247, 0.0
        %v308 = vmax.f32 %v248, 0.0
        %v309 = vmax.f32 %v249, 0.0
        %v310 = vmax.f32 %v250, 0.0
        %v311 = vmax.f32 %v251, 0.0
        %v312 = vmax.f32 %v252, 0.0
        %v313 = vmax.f32 %v253, 0.0
        %v314 = vmax.f32 %v254, 0.0
        %v315 = vmax.f32 %v255, 0.0
        %v316 = vmax.f32 %v256, 0.0
        %v317 = vmax.f32 %v257, 0.0
        %v318 = vmax.f32 %v258, 0.0
        %v319 = vmax.f32 %v259, 0.0
        %v320 = vmax.f32 %v260, 0.0
        %v321 = vmax.f32 %v261, 0.0
        %v322 = vmax.f32 %v262, 0.0
        %v323 = vmax.f32 %v263, 0.0
        %v324 = vmax.f32 %v264, 0.0
        %v325 = vmax.f32 %v265, 0.0
        %v326 = vmax.f32 %v266, 0.0
        %v327 = vmax.f32 %v267, 0.0
        %v328 = vmax.f32 %v268, 0.0
        %v329 = vmax.f32 %v269, 0.0
        %v330 = vmax.f32 %v270, 0.0
        %v331 = vmax.f32 %v271, 0.0
        %v332 = vmax.f32 %v272, 0.0
        %v333 = vmax.f32 %v273, 0.0
        %v334 = vmax.f32 %v274, 0.0
        %v335 = vmax.f32 %v275, 0.0
        %v336 = vmax.f32 %v276, 0.0
        %v337 = vmax.f32 %v217, 0.0
        %v338 = vmax.f32 %v218, 0.0
        %v339 = vmax.f32 %v219, 0.0
        %v340 = vmax.f32 %v220, 0.0
        %v341 = vmax.f32 %v221, 0.0
        %v342 = vmax.f32 %v222, 0.0
        %v343 = vmax.f32 %v223, 0.0
        %v344 = vmax.f32 %v224, 0.0
        %v345 = vmax.f32 %v225, 0.0
        %v346 = vmax.f32 %v226, 0.0
        %v347 = vmax.f32 %v227, 0.0
        %v348 = vmax.f32 %v228, 0.0
        %v349 = vmax.f32 %v229, 0.0
        %v350 = vmax.f32 %v230, 0.0
        %v351 = vmax.f32 %v231, 0.0
        %v352 = vmax.f32 %v232, 0.0
        %v353 = vmax.f32 %v233, 0.0
        %v354 = vmax.f32 %v234, 0.0
        %v355 = vmax.f32 %v235, 0.0
        %v356 = vmax.f32 %v236, 0.0
        %v357 = vmax.f32 %v237, 0.0
        %v358 = vmax.f32 %v238, 0.0
        %v359 = vmax.f32 %v239, 0.0
        %v360 = vmax.f32 %v240, 0.0
        %v361 = vmax.f32 %v241, 0.0
        %v362 = vmax.f32 %v242, 0.0
        %v363 = vmax.f32 %v243, 0.0
        %v364 = vmax.f32 %v244, 0.0
        %v365 = vmax.f32 %v245, 0.0
        %v366 = vmax.f32 %v246, 0.0
        %v367 = vsub.f32 %v307, %v337
        %v368 = vsub.f32 %v308, %v338
        %v369 = vsub.f32 %v309, %v339
        %v370 = vsub.f32 %v310, %v340
        %v371 = vsub.f32 %v311, %v341
        %v372 = vsub.f32 %v312, %v342
        %v373 = vsub.f32 %v313, %v343
        %v374 = vsub.f32 %v314, %v344
        %v375 = vsub.f32 %v315, %v345
        %v376 = vsub.f32 %v316, %v346
        %v377 = vsub.f32 %v317, %v347
        %v378 = vsub.f32 %v318, %v348
        %v379 = vsub.f32 %v319, %v349
        %v380 = vsub.f32 %v320, %v350
        %v381 = vsub.f32 %v321, %v351
        %v382 = vsub.f32 %v322, %v352
        %v383 = vsub.f32 %v323, %v353
        %v384 = vsub.f32 %v324, %v354
        %v385 = vsub.f32 %v325, %v355
        %v386 = vsub.f32 %v326, %v356
        %v387 = vsub.f32 %v327, %v357
        %v388 = vsub.f32 %v328, %v358
        %v389 = vsub.f32 %v329, %v359
        %v390 = vsub.f32 %v330, %v360
        %v391 = vsub.f32 %v331, %v361
        %v392 = vsub.f32 %v332, %v362
        %v393 = vsub.f32 %v333, %v363
        %v394 = vsub.f32 %v334, %v364
        %v395 = vsub.f32 %v335, %v365
        %v396 = vsub.f32 %v336, %v366
        %v397 = vand.u32 2147483647, %v370
        %v398 = vand.u32 2147483647, %v371
        %v399 = vand.u32 2147483647, %v372
        %v400 = vand.u32 2147483647, %v373
        %v401 = vand.u32 2147483647, %v374
        %v402 = vand.u32 2147483647, %v375
        %v403 = vand.u32 2147483647, %v376
        %v404 = vand.u32 2147483647, %v377
        %v405 = vand.u32 2147483647, %v378
        %v406 = vand.u32 2147483647, %v379
        %v407 = vand.u32 2147483647, %v380
        %v408 = vand.u32 2147483647, %v381
        %v409 = vand.u32 2147483647, %v382
        %v410 = vand.u32 2147483647, %v383
        %v411 = vand.u32 2147483647, %v384
        %v412 = vand.u32 2147483647, %v385
        %v413 = vand.u32 2147483647, %v386
        %v414 = vand.u32 2147483647, %v387
        %v415 = vand.u32 2147483647, %v388
        %v416 = vand.u32 2147483647, %v389
        %v417 = vand.u32 2147483647, %v390
        %v418 = vand.u32 2147483647, %v391
        %v419 = vand.u32 2147483647, %v392
        %v420 = vand.u32 2147483647, %v393
        %vm421 = vcmask 64512
        %v422 = vsel %vm421, %v397, 0.0
        %v423 = vsel %vm421, %v398, 0.0
        %v424 = vadd.f32 %v422, %v423
        %vm425 = vcmask 58368
        %v426 = vsel %vm425, %v399, 0.0
        %v427 = vadd.f32 %v424, %v426
        %v428 = vsel %vm421, %v400, 0.0
        %v429 = vadd.f32 %v427, %v428
        %v430 = vsel %vm421, %v401, 0.0
        %v431 = vadd.f32 %v429, %v430
        %v432 = vsel %vm425, %v402, 0.0
        %v433 = vadd.f32 %v431, %v432
        %v434 = vsel %vm421, %v403, 0.0
        %v435 = vadd.f32 %v433, %v434
        %v436 = vsel %vm421, %v404, 0.0
        %v437 = vadd.f32 %v435, %v436
        %v438 = vsel %vm425, %v405, 0.0
        %v439 = vadd.f32 %v437, %v438
        %v440 = vsel %vm421, %v406, 0.0
        %v441 = vadd.f32 %v439, %v440
        %v442 = vsel %vm421, %v407, 0.0
        %v443 = vadd.f32 %v441, %v442
        %v444 = vsel %vm425, %v408, 0.0
        %v445 = vadd.f32 %v443, %v444
        %v446 = vsel %vm421, %v409, 0.0
        %v447 = vadd.f32 %v445, %v446
        %v448 = vsel %vm421, %v410, 0.0
        %v449 = vadd.f32 %v447, %v448
        %v450 = vsel %vm425, %v411, 0.0
        %v451 = vadd.f32 %v449, %v450
        %v452 = vsel %vm421, %v412, 0.0
        %v453 = vadd.f32 %v451, %v452
        %v454 = vsel %vm421, %v413, 0.0
        %v455 = vadd.f32 %v453, %v454
        %v456 = vsel %vm425, %v414, 0.0
        %v457 = vadd.f32 %v455, %v456
        %v458 = vsel %vm421, %v415, 0.0
        %v459 = vadd.f32 %v457, %v458
        %v460 = vsel %vm421, %v416, 0.0
        %v461 = vadd.f32 %v459, %v460
        %v462 = vsel %vm425, %v417, 0.0
        %v463 = vadd.f32 %v461, %v462
        %v464 = vsel %vm421, %v418, 0.0
        %v465 = vadd.f32 %v463, %v464
        %v466 = vsel %vm421, %v419, 0.0
        %v467 = vadd.f32 %v465, %v466
        %v468 = vsel %vm425, %v420, 0.0
        %v469 = vadd.f32 %v467, %v468
        %470 = vadd.xlane.f32.xlu0 %v469
        %v471 = vpop.xlane.xlu0 %470
        %v472 = vrot.slane %v471, 4
        %v473 = vadd.f32 %v471, %v472
        %v474 = vrot.slane %v473, 2
        %v475 = vadd.f32 %v473, %v474
        %v476 = vrot.slane %v475, 1
        %v477 = vadd.f32 %v475, %v476
        %s478 = vtos %v477
        %v479 = vpack.c.bf16 %v278, %v277
        %v480 = vpack.c.bf16 %v279, %v279
        %v481 = vpack.c.bf16 %v281, %v280
        %v482 = vpack.c.bf16 %v282, %v282
        %v483 = vpack.c.bf16 %v284, %v283
        %v484 = vpack.c.bf16 %v285, %v285
        %v485 = vpack.c.bf16 %v287, %v286
        %v486 = vpack.c.bf16 %v288, %v288
        %v487 = vpack.c.bf16 %v290, %v289
        %v488 = vpack.c.bf16 %v291, %v291
        %v489 = vpack.c.bf16 %v293, %v292
        %v490 = vpack.c.bf16 %v294, %v294
        %v491 = vpack.c.bf16 %v296, %v295
        %v492 = vpack.c.bf16 %v297, %v297
        %v493 = vpack.c.bf16 %v299, %v298
        %v494 = vpack.c.bf16 %v300, %v300
        %v495 = vpack.c.bf16 %v302, %v301
        %v496 = vpack.c.bf16 %v303, %v303
        %v497 = vpack.c.bf16 %v305, %v304
        %v498 = vpack.c.bf16 %v306, %v306
        %v499 = vpack.c.bf16 %v368, %v367
        %v500 = vpack.c.bf16 %v369, %v369
        %v501 = vpack.c.bf16 %v371, %v370
        %v502 = vpack.c.bf16 %v372, %v372
        %v503 = vpack.c.bf16 %v374, %v373
        %v504 = vpack.c.bf16 %v375, %v375
        %v505 = vpack.c.bf16 %v377, %v376
        %v506 = vpack.c.bf16 %v378, %v378
        %v507 = vpack.c.bf16 %v380, %v379
        %v508 = vpack.c.bf16 %v381, %v381
        %v509 = vpack.c.bf16 %v383, %v382
        %v510 = vpack.c.bf16 %v384, %v384
        %v511 = vpack.c.bf16 %v386, %v385
        %v512 = vpack.c.bf16 %v387, %v387
        %v513 = vpack.c.bf16 %v389, %v388
        %v514 = vpack.c.bf16 %v390, %v390
        %v515 = vpack.c.bf16 %v392, %v391
        %v516 = vpack.c.bf16 %v393, %v393
        %v517 = vpack.c.bf16 %v395, %v394
        %v518 = vpack.c.bf16 %v396, %v396
        %v519 = vld [vmem:[%s2] sm:$0xf]
        %v520 = vld [vmem:[%s2 + $0x4] sm:$0xf]
        %v521 = vld [vmem:[%s2 + $0x8] sm:$0xf]
        %v522 = vld [vmem:[%s2 + $0xc] sm:$0xf]
        %v523 = vld [vmem:[%s2 + $0x10] sm:$0xf]
        %v524 = vld [vmem:[%s2 + $0x14] sm:$0xf]
        %v525 = vld [vmem:[%s2 + $0x18] sm:$0xf]
        %v526 = vld [vmem:[%s2 + $0x1c] sm:$0xf]
        %v527 = vld [vmem:[%s2 + $0x20] sm:$0xf]
        %v528 = vld [vmem:[%s3] sm:$0xf]
        %v529 = vld [vmem:[%s3 + $0x4] sm:$0xf]
        %v530 = vld [vmem:[%s3 + $0x8] sm:$0xf]
        %v531 = vld [vmem:[%s3 + $0xc] sm:$0xf]
        %v532 = vld [vmem:[%s3 + $0x10] sm:$0xf]
        %v533 = vld [vmem:[%s3 + $0x14] sm:$0xf]
        %v534 = vld [vmem:[%s3 + $0x18] sm:$0xf]
        %v535 = vld [vmem:[%s3 + $0x1c] sm:$0xf]
        %v536 = vld [vmem:[%s3 + $0x20] sm:$0xf]
        %vm537 = vsmask.f32 7424
        %v539 = vshrl.u32 %v479, 16
        %v541 = vshll.u32 %v479, 16
        %v543 = vrot.slane %v541, 1
        %v544 = vor.u32 %v539, %v543
        %v546 = vshll.u32 %v480, 16
        %v548 = vrot.slane %v546, 1
        %v549 = vsel %vm537, %v544, %v548
        %v551 = vshrl.u32 %v481, 16
        %v553 = vshll.u32 %v481, 16
        %v555 = vrot.slane %v553, 1
        %v556 = vor.u32 %v551, %v555
        %v558 = vshll.u32 %v482, 16
        %v560 = vrot.slane %v558, 1
        %v561 = vsel %vm537, %v556, %v560
        %v563 = vshrl.u32 %v483, 16
        %v565 = vshll.u32 %v483, 16
        %v567 = vrot.slane %v565, 1
        %v568 = vor.u32 %v563, %v567
        %v570 = vshll.u32 %v484, 16
        %v572 = vrot.slane %v570, 1
        %v573 = vsel %vm537, %v568, %v572
        %v575 = vshrl.u32 %v485, 16
        %v577 = vshll.u32 %v485, 16
        %v579 = vrot.slane %v577, 1
        %v580 = vor.u32 %v575, %v579
        %v582 = vshll.u32 %v486, 16
        %v584 = vrot.slane %v582, 1
        %v585 = vsel %vm537, %v580, %v584
        %v587 = vshrl.u32 %v487, 16
        %v589 = vshll.u32 %v487, 16
        %v591 = vrot.slane %v589, 1
        %v592 = vor.u32 %v587, %v591
        %v594 = vshll.u32 %v488, 16
        %v596 = vrot.slane %v594, 1
        %v597 = vsel %vm537, %v592, %v596
        %v599 = vshrl.u32 %v489, 16
        %v601 = vshll.u32 %v489, 16
        %v603 = vrot.slane %v601, 1
        %v604 = vor.u32 %v599, %v603
        %v606 = vshll.u32 %v490, 16
        %v608 = vrot.slane %v606, 1
        %v609 = vsel %vm537, %v604, %v608
        %v611 = vshrl.u32 %v491, 16
        %v613 = vshll.u32 %v491, 16
        %v615 = vrot.slane %v613, 1
        %v616 = vor.u32 %v611, %v615
        %v618 = vshll.u32 %v492, 16
        %v620 = vrot.slane %v618, 1
        %v621 = vsel %vm537, %v616, %v620
        %v623 = vshrl.u32 %v493, 16
        %v625 = vshll.u32 %v493, 16
        %v627 = vrot.slane %v625, 1
        %v628 = vor.u32 %v623, %v627
        %v630 = vshll.u32 %v494, 16
        %v632 = vrot.slane %v630, 1
        %v633 = vsel %vm537, %v628, %v632
        %v635 = vshrl.u32 %v499, 16
        %v637 = vshll.u32 %v499, 16
        %v639 = vrot.slane %v637, 1
        %v640 = vor.u32 %v635, %v639
        %v642 = vshll.u32 %v500, 16
        %v644 = vrot.slane %v642, 1
        %v645 = vsel %vm537, %v640, %v644
        %v647 = vshrl.u32 %v501, 16
        %v649 = vshll.u32 %v501, 16
        %v651 = vrot.slane %v649, 1
        %v652 = vor.u32 %v647, %v651
        %v654 = vshll.u32 %v502, 16
        %v656 = vrot.slane %v654, 1
        %v657 = vsel %vm537, %v652, %v656
        %v659 = vshrl.u32 %v503, 16
        %v661 = vshll.u32 %v503, 16
        %v663 = vrot.slane %v661, 1
        %v664 = vor.u32 %v659, %v663
        %v666 = vshll.u32 %v504, 16
        %v668 = vrot.slane %v666, 1
        %v669 = vsel %vm537, %v664, %v668
        %v671 = vshrl.u32 %v505, 16
        %v673 = vshll.u32 %v505, 16
        %v675 = vrot.slane %v673, 1
        %v676 = vor.u32 %v671, %v675
        %v678 = vshll.u32 %v506, 16
        %v680 = vrot.slane %v678, 1
        %v681 = vsel %vm537, %v676, %v680
        %v683 = vshrl.u32 %v507, 16
        %v685 = vshll.u32 %v507, 16
        %v687 = vrot.slane %v685, 1
        %v688 = vor.u32 %v683, %v687
        %v690 = vshll.u32 %v508, 16
        %v692 = vrot.slane %v690, 1
        %v693 = vsel %vm537, %v688, %v692
        %v695 = vshrl.u32 %v509, 16
        %v697 = vshll.u32 %v509, 16
        %v699 = vrot.slane %v697, 1
        %v700 = vor.u32 %v695, %v699
        %v702 = vshll.u32 %v510, 16
        %v704 = vrot.slane %v702, 1
        %v705 = vsel %vm537, %v700, %v704
        %v707 = vshrl.u32 %v511, 16
        %v709 = vshll.u32 %v511, 16
        %v711 = vrot.slane %v709, 1
        %v712 = vor.u32 %v707, %v711
        %v714 = vshll.u32 %v512, 16
        %v716 = vrot.slane %v714, 1
        %v717 = vsel %vm537, %v712, %v716
        %v719 = vshrl.u32 %v513, 16
        %v721 = vshll.u32 %v513, 16
        %v723 = vrot.slane %v721, 1
        %v724 = vor.u32 %v719, %v723
        %v726 = vshll.u32 %v514, 16
        %v728 = vrot.slane %v726, 1
        %v729 = vsel %vm537, %v724, %v728
        %v731 = vsel %vm421, %v549, 0
        %v734 = vsel %vm421, %v561, 0
        %v737 = vsel %vm421, %v573, 0
        %v740 = vsel %vm421, %v585, 0
        %v743 = vsel %vm421, %v597, 0
        %v746 = vsel %vm421, %v609, 0
        %v749 = vsel %vm421, %v621, 0
        %v752 = vsel %vm421, %v633, 0
        %vm754 = vcmask 1043456
        %v756 = vsel %vm754, %v520, 0
        %758 = vmatprep.subr.bf16.mxu0 0
        %759 = vmatpush1.bf16.msra.mxu0 %v756
        %760 = vmatprep.subr.bf16.mxu0 0
        %761 = vmatpush1.bf16.msra.mxu0 0
        %762 = vmatprep.subr.bf16.mxu0 0
        %763 = vmatpush1.bf16.msra.mxu0 0
        %764 = vmatprep.subr.bf16.mxu0 0
        %765 = vmatpush1.bf16.msra.mxu0 0
        %766 = vmatprep.subr.bf16.mxu0 0
        %767 = vmatpush1.bf16.msra.mxu0 0
        %768 = vmatprep.subr.bf16.mxu0 0
        %769 = vmatpush1.bf16.msra.mxu0 0
        %770 = vmatprep.subr.bf16.mxu0 0
        %771 = vmatpush1.bf16.msra.mxu0 0
        %772 = vmatprep.subr.bf16.mxu0 0
        %773 = vmatpush1.bf16.msra.mxu0 0
        %774 = vmatprep.subr.bf16.mxu0 0
        %775 = vmatpush1.bf16.msra.mxu0 0
        %776 = vmatprep.subr.bf16.mxu0 0
        %777 = vmatpush1.bf16.msra.mxu0 0
        %778 = vmatprep.subr.bf16.mxu0 0
        %779 = vmatpush1.bf16.msra.mxu0 0
        %780 = vmatprep.subr.bf16.mxu0 0
        %781 = vmatpush1.bf16.msra.mxu0 0
        %782 = vmatprep.subr.bf16.mxu0 0
        %783 = vmatpush1.bf16.msra.mxu0 0
        %784 = vmatprep.subr.bf16.mxu0 0
        %785 = vmatpush1.bf16.msra.mxu0 0
        %786 = vmatprep.subr.bf16.mxu0 0
        %787 = vmatpush1.bf16.msra.mxu0 0
        %788 = vmatprep.subr.bf16.mxu0 0
        %789 = vmatpush1.bf16.msra.mxu0 0
        %790 = vmatprep.mubr.bf16.mxu0 0
        %791 = vmatmul.mubr.bf16.gmra.mrb[0].mxu0 %v731
        %v792 = vpop.f32.mrb[0].mxu0
        %v793 = vadd.f32 0.0, %v792
        %v794 = vpop.f32.mrb[0].mxu0
        %v795 = vpop.f32.mrb[0].mxu0
        %v796 = vadd.f32 0.0, %v795
        %v797 = vpop.f32.mrb[0].mxu0
        %798 = vmatprep.mubr.bf16.mxu0 0
        %799 = vmatmul.mubr.bf16.gmra.mrb[0].mxu0 %v734
        %v800 = vpop.f32.mrb[0].mxu0
        %v801 = vadd.f32 0.0, %v800
        %v802 = vpop.f32.mrb[0].mxu0
        %v803 = vpop.f32.mrb[0].mxu0
        %v804 = vadd.f32 0.0, %v803
        %v805 = vpop.f32.mrb[0].mxu0
        %806 = vmatprep.mubr.bf16.mxu0 0
        %807 = vmatmul.mubr.bf16.gmra.mrb[0].mxu0 %v737
        %v808 = vpop.f32.mrb[0].mxu0
        %v809 = vadd.f32 0.0, %v808
        %v810 = vpop.f32.mrb[0].mxu0
        %v811 = vpop.f32.mrb[0].mxu0
        %v812 = vadd.f32 0.0, %v811
        %v813 = vpop.f32.mrb[0].mxu0
        %814 = vmatprep.mubr.bf16.mxu0 0
        %815 = vmatmul.mubr.bf16.gmra.mrb[0].mxu0 %v740
        %v816 = vpop.f32.mrb[0].mxu0
        %v817 = vadd.f32 0.0, %v816
        %v818 = vpop.f32.mrb[0].mxu0
        %v819 = vpop.f32.mrb[0].mxu0
        %v820 = vadd.f32 0.0, %v819
        %v821 = vpop.f32.mrb[0].mxu0
        %822 = vmatprep.mubr.bf16.mxu0 0
        %823 = vmatmul.mubr.bf16.gmra.mrb[0].mxu0 %v743
        %v824 = vpop.f32.mrb[0].mxu0
        %v825 = vadd.f32 0.0, %v824
        %v826 = vpop.f32.mrb[0].mxu0
        %v827 = vpop.f32.mrb[0].mxu0
        %v828 = vadd.f32 0.0, %v827
        %v829 = vpop.f32.mrb[0].mxu0
        %830 = vmatprep.mubr.bf16.mxu0 0
        %831 = vmatmul.mubr.bf16.gmra.mrb[0].mxu0 %v746
        %v832 = vpop.f32.mrb[0].mxu0
        %v833 = vadd.f32 0.0, %v832
        %v834 = vpop.f32.mrb[0].mxu0
        %v835 = vpop.f32.mrb[0].mxu0
        %v836 = vadd.f32 0.0, %v835
        %v837 = vpop.f32.mrb[0].mxu0
        %838 = vmatprep.mubr.bf16.mxu0 0
        %839 = vmatmul.mubr.bf16.gmra.mrb[0].mxu0 %v749
        %v840 = vpop.f32.mrb[0].mxu0
        %v841 = vadd.f32 0.0, %v840
        %v842 = vpop.f32.mrb[0].mxu0
        %v843 = vpop.f32.mrb[0].mxu0
        %v844 = vadd.f32 0.0, %v843
        %v845 = vpop.f32.mrb[0].mxu0
        %846 = vmatprep.mubr.bf16.mxu0 0
        %847 = vmatmul.mubr.bf16.gmra.mrb[0].mxu0 %v752
        %v848 = vpop.f32.mrb[0].mxu0
        %v849 = vadd.f32 0.0, %v848
        %v850 = vpop.f32.mrb[0].mxu0
        %v851 = vpop.f32.mrb[0].mxu0
        %v852 = vadd.f32 0.0, %v851
        %v853 = vpop.f32.mrb[0].mxu0
        %854 = vdwg.mxu0
        %v855 = vsel %vm421, %v479, 0
        %v857 = vsel %vm421, %v481, 0
        %v859 = vsel %vm421, %v483, 0
        %v861 = vsel %vm421, %v485, 0
        %v863 = vsel %vm421, %v487, 0
        %v865 = vsel %vm421, %v489, 0
        %v867 = vsel %vm421, %v491, 0
        %v869 = vsel %vm421, %v493, 0
        %v872 = vsel %vm754, %v519, 0
        %874 = vmatprep.subr.bf16.mxu0 0
        %875 = vmatpush1.bf16.msra.mxu0 %v872
        %876 = vmatprep.subr.bf16.mxu0 0
        %877 = vmatpush1.bf16.msra.mxu0 0
        %878 = vmatprep.subr.bf16.mxu0 0
        %879 = vmatpush1.bf16.msra.mxu0 0
        %880 = vmatprep.subr.bf16.mxu0 0
        %881 = vmatpush1.bf16.msra.mxu0 0
        %882 = vmatprep.subr.bf16.mxu0 0
        %883 = vmatpush1.bf16.msra.mxu0 0
        %884 = vmatprep.subr.bf16.mxu0 0
        %885 = vmatpush1.bf16.msra.mxu0 0
        %886 = vmatprep.subr.bf16.mxu0 0
        %887 = vmatpush1.bf16.msra.mxu0 0
        %888 = vmatprep.subr.bf16.mxu0 0
        %889 = vmatpush1.bf16.msra.mxu0 0
        %890 = vmatprep.subr.bf16.mxu0 0
        %891 = vmatpush1.bf16.msra.mxu0 0
        %892 = vmatprep.subr.bf16.mxu0 0
        %893 = vmatpush1.bf16.msra.mxu0 0
        %894 = vmatprep.subr.bf16.mxu0 0
        %895 = vmatpush1.bf16.msra.mxu0 0
        %896 = vmatprep.subr.bf16.mxu0 0
        %897 = vmatpush1.bf16.msra.mxu0 0
        %898 = vmatprep.subr.bf16.mxu0 0
        %899 = vmatpush1.bf16.msra.mxu0 0
        %900 = vmatprep.subr.bf16.mxu0 0
        %901 = vmatpush1.bf16.msra.mxu0 0
        %902 = vmatprep.subr.bf16.mxu0 0
        %903 = vmatpush1.bf16.msra.mxu0 0
        %904 = vmatprep.subr.bf16.mxu0 0
        %905 = vmatpush1.bf16.msra.mxu0 0
        %906 = vmatprep.mubr.bf16.mxu0 0
        %907 = vmatmul.mubr.bf16.gmra.mrb[0].mxu0 %v855
        %v908 = vpop.f32.mrb[0].mxu0
        %v909 = vadd.f32 %v793, %v908
        %v910 = vpop.f32.mrb[0].mxu0
        %v911 = vpop.f32.mrb[0].mxu0
        %v912 = vadd.f32 %v796, %v911
        %v913 = vpop.f32.mrb[0].mxu0
        %914 = vmatprep.mubr.bf16.mxu0 0
        %915 = vmatmul.mubr.bf16.gmra.mrb[0].mxu0 %v857
        %v916 = vpop.f32.mrb[0].mxu0
        %v917 = vadd.f32 %v801, %v916
        %v918 = vpop.f32.mrb[0].mxu0
        %v919 = vpop.f32.mrb[0].mxu0
        %v920 = vadd.f32 %v804, %v919
        %v921 = vpop.f32.mrb[0].mxu0
        %922 = vmatprep.mubr.bf16.mxu0 0
        %923 = vmatmul.mubr.bf16.gmra.mrb[0].mxu0 %v859
        %v924 = vpop.f32.mrb[0].mxu0
        %v925 = vadd.f32 %v809, %v924
        %v926 = vpop.f32.mrb[0].mxu0
        %v927 = vpop.f32.mrb[0].mxu0
        %v928 = vadd.f32 %v812, %v927
        %v929 = vpop.f32.mrb[0].mxu0
        %930 = vmatprep.mubr.bf16.mxu0 0
        %931 = vmatmul.mubr.bf16.gmra.mrb[0].mxu0 %v861
        %v932 = vpop.f32.mrb[0].mxu0
        %v933 = vadd.f32 %v817, %v932
        %v934 = vpop.f32.mrb[0].mxu0
        %v935 = vpop.f32.mrb[0].mxu0
        %v936 = vadd.f32 %v820, %v935
        %v937 = vpop.f32.mrb[0].mxu0
        %938 = vmatprep.mubr.bf16.mxu0 0
        %939 = vmatmul.mubr.bf16.gmra.mrb[0].mxu0 %v863
        %v940 = vpop.f32.mrb[0].mxu0
        %v941 = vadd.f32 %v825, %v940
        %v942 = vpop.f32.mrb[0].mxu0
        %v943 = vpop.f32.mrb[0].mxu0
        %v944 = vadd.f32 %v828, %v943
        %v945 = vpop.f32.mrb[0].mxu0
        %946 = vmatprep.mubr.bf16.mxu0 0
        %947 = vmatmul.mubr.bf16.gmra.mrb[0].mxu0 %v865
        %v948 = vpop.f32.mrb[0].mxu0
        %v949 = vadd.f32 %v833, %v948
        %v950 = vpop.f32.mrb[0].mxu0
        %v951 = vpop.f32.mrb[0].mxu0
        %v952 = vadd.f32 %v836, %v951
        %v953 = vpop.f32.mrb[0].mxu0
        %954 = vmatprep.mubr.bf16.mxu0 0
        %955 = vmatmul.mubr.bf16.gmra.mrb[0].mxu0 %v867
        %v956 = vpop.f32.mrb[0].mxu0
        %v957 = vadd.f32 %v841, %v956
        %v958 = vpop.f32.mrb[0].mxu0
        %v959 = vpop.f32.mrb[0].mxu0
        %v960 = vadd.f32 %v844, %v959
        %v961 = vpop.f32.mrb[0].mxu0
        %962 = vmatprep.mubr.bf16.mxu0 0
        %963 = vmatmul.mubr.bf16.gmra.mrb[0].mxu0 %v869
        %v964 = vpop.f32.mrb[0].mxu0
        %v965 = vadd.f32 %v849, %v964
        %v966 = vpop.f32.mrb[0].mxu0
        %v967 = vpop.f32.mrb[0].mxu0
        %v968 = vadd.f32 %v852, %v967
        %v969 = vpop.f32.mrb[0].mxu0
        %970 = vdwg.mxu0
        %v972 = vsel %vm421, %v645, 0
        %v975 = vsel %vm421, %v657, 0
        %v978 = vsel %vm421, %v669, 0
        %v981 = vsel %vm421, %v681, 0
        %v984 = vsel %vm421, %v693, 0
        %v987 = vsel %vm421, %v705, 0
        %v990 = vsel %vm421, %v717, 0
        %v993 = vsel %vm421, %v729, 0
        %v996 = vsel %vm754, %v529, 0
        %998 = vmatprep.subr.bf16.mxu0 0
        %999 = vmatpush1.bf16.msra.mxu0 %v996
        %1000 = vmatprep.subr.bf16.mxu0 0
        %1001 = vmatpush1.bf16.msra.mxu0 0
        %1002 = vmatprep.subr.bf16.mxu0 0
        %1003 = vmatpush1.bf16.msra.mxu0 0
        %1004 = vmatprep.subr.bf16.mxu0 0
        %1005 = vmatpush1.bf16.msra.mxu0 0
        %1006 = vmatprep.subr.bf16.mxu0 0
        %1007 = vmatpush1.bf16.msra.mxu0 0
        %1008 = vmatprep.subr.bf16.mxu0 0
        %1009 = vmatpush1.bf16.msra.mxu0 0
        %1010 = vmatprep.subr.bf16.mxu0 0
        %1011 = vmatpush1.bf16.msra.mxu0 0
        %1012 = vmatprep.subr.bf16.mxu0 0
        %1013 = vmatpush1.bf16.msra.mxu0 0
        %1014 = vmatprep.subr.bf16.mxu0 0
        %1015 = vmatpush1.bf16.msra.mxu0 0
        %1016 = vmatprep.subr.bf16.mxu0 0
        %1017 = vmatpush1.bf16.msra.mxu0 0
        %1018 = vmatprep.subr.bf16.mxu0 0
        %1019 = vmatpush1.bf16.msra.mxu0 0
        %1020 = vmatprep.subr.bf16.mxu0 0
        %1021 = vmatpush1.bf16.msra.mxu0 0
        %1022 = vmatprep.subr.bf16.mxu0 0
        %1023 = vmatpush1.bf16.msra.mxu0 0
        %1024 = vmatprep.subr.bf16.mxu0 0
        %1025 = vmatpush1.bf16.msra.mxu0 0
        %1026 = vmatprep.subr.bf16.mxu0 0
        %1027 = vmatpush1.bf16.msra.mxu0 0
        %1028 = vmatprep.subr.bf16.mxu0 0
        %1029 = vmatpush1.bf16.msra.mxu0 0
        %1030 = vmatprep.mubr.bf16.mxu0 0
        %1031 = vmatmul.mubr.bf16.gmra.mrb[0].mxu0 %v972
        %v1032 = vpop.f32.mrb[0].mxu0
        %v1033 = vadd.f32 0.0, %v1032
        %v1034 = vpop.f32.mrb[0].mxu0
        %v1035 = vpop.f32.mrb[0].mxu0
        %v1036 = vadd.f32 0.0, %v1035
        %v1037 = vpop.f32.mrb[0].mxu0
        %1038 = vmatprep.mubr.bf16.mxu0 0
        %1039 = vmatmul.mubr.bf16.gmra.mrb[0].mxu0 %v975
        %v1040 = vpop.f32.mrb[0].mxu0
        %v1041 = vadd.f32 0.0, %v1040
        %v1042 = vpop.f32.mrb[0].mxu0
        %v1043 = vpop.f32.mrb[0].mxu0
        %v1044 = vadd.f32 0.0, %v1043
        %v1045 = vpop.f32.mrb[0].mxu0
        %1046 = vmatprep.mubr.bf16.mxu0 0
        %1047 = vmatmul.mubr.bf16.gmra.mrb[0].mxu0 %v978
        %v1048 = vpop.f32.mrb[0].mxu0
        %v1049 = vadd.f32 0.0, %v1048
        %v1050 = vpop.f32.mrb[0].mxu0
        %v1051 = vpop.f32.mrb[0].mxu0
        %v1052 = vadd.f32 0.0, %v1051
        %v1053 = vpop.f32.mrb[0].mxu0
        %1054 = vmatprep.mubr.bf16.mxu0 0
        %1055 = vmatmul.mubr.bf16.gmra.mrb[0].mxu0 %v981
        %v1056 = vpop.f32.mrb[0].mxu0
        %v1057 = vadd.f32 0.0, %v1056
        %v1058 = vpop.f32.mrb[0].mxu0
        %v1059 = vpop.f32.mrb[0].mxu0
        %v1060 = vadd.f32 0.0, %v1059
        %v1061 = vpop.f32.mrb[0].mxu0
        %1062 = vmatprep.mubr.bf16.mxu0 0
        %1063 = vmatmul.mubr.bf16.gmra.mrb[0].mxu0 %v984
        %v1064 = vpop.f32.mrb[0].mxu0
        %v1065 = vadd.f32 0.0, %v1064
        %v1066 = vpop.f32.mrb[0].mxu0
        %v1067 = vpop.f32.mrb[0].mxu0
        %v1068 = vadd.f32 0.0, %v1067
        %v1069 = vpop.f32.mrb[0].mxu0
        %1070 = vmatprep.mubr.bf16.mxu0 0
        %1071 = vmatmul.mubr.bf16.gmra.mrb[0].mxu0 %v987
        %v1072 = vpop.f32.mrb[0].mxu0
        %v1073 = vadd.f32 0.0, %v1072
        %v1074 = vpop.f32.mrb[0].mxu0
        %v1075 = vpop.f32.mrb[0].mxu0
        %v1076 = vadd.f32 0.0, %v1075
        %v1077 = vpop.f32.mrb[0].mxu0
        %1078 = vmatprep.mubr.bf16.mxu0 0
        %1079 = vmatmul.mubr.bf16.gmra.mrb[0].mxu0 %v990
        %v1080 = vpop.f32.mrb[0].mxu0
        %v1081 = vadd.f32 0.0, %v1080
        %v1082 = vpop.f32.mrb[0].mxu0
        %v1083 = vpop.f32.mrb[0].mxu0
        %v1084 = vadd.f32 0.0, %v1083
        %v1085 = vpop.f32.mrb[0].mxu0
        %1086 = vmatprep.mubr.bf16.mxu0 0
        %1087 = vmatmul.mubr.bf16.gmra.mrb[0].mxu0 %v993
        %v1088 = vpop.f32.mrb[0].mxu0
        %v1089 = vadd.f32 0.0, %v1088
        %v1090 = vpop.f32.mrb[0].mxu0
        %v1091 = vpop.f32.mrb[0].mxu0
        %v1092 = vadd.f32 0.0, %v1091
        %v1093 = vpop.f32.mrb[0].mxu0
        %1094 = vdwg.mxu0
        %v1095 = vsel %vm421, %v499, 0
        %v1097 = vsel %vm421, %v501, 0
        %v1099 = vsel %vm421, %v503, 0
        %v1101 = vsel %vm421, %v505, 0
        %v1103 = vsel %vm421, %v507, 0
        %v1105 = vsel %vm421, %v509, 0
        %v1107 = vsel %vm421, %v511, 0
        %v1109 = vsel %vm421, %v513, 0
        %v1112 = vsel %vm754, %v528, 0
        %1114 = vmatprep.subr.bf16.mxu0 0
        %1115 = vmatpush1.bf16.msra.mxu0 %v1112
        %1116 = vmatprep.subr.bf16.mxu0 0
        %1117 = vmatpush1.bf16.msra.mxu0 0
        %1118 = vmatprep.subr.bf16.mxu0 0
        %1119 = vmatpush1.bf16.msra.mxu0 0
        %1120 = vmatprep.subr.bf16.mxu0 0
        %1121 = vmatpush1.bf16.msra.mxu0 0
        %1122 = vmatprep.subr.bf16.mxu0 0
        %1123 = vmatpush1.bf16.msra.mxu0 0
        %1124 = vmatprep.subr.bf16.mxu0 0
        %1125 = vmatpush1.bf16.msra.mxu0 0
        %1126 = vmatprep.subr.bf16.mxu0 0
        %1127 = vmatpush1.bf16.msra.mxu0 0
        %1128 = vmatprep.subr.bf16.mxu0 0
        %1129 = vmatpush1.bf16.msra.mxu0 0
        %1130 = vmatprep.subr.bf16.mxu0 0
        %1131 = vmatpush1.bf16.msra.mxu0 0
        %1132 = vmatprep.subr.bf16.mxu0 0
        %1133 = vmatpush1.bf16.msra.mxu0 0
        %1134 = vmatprep.subr.bf16.mxu0 0
        %1135 = vmatpush1.bf16.msra.mxu0 0
        %1136 = vmatprep.subr.bf16.mxu0 0
        %1137 = vmatpush1.bf16.msra.mxu0 0
        %1138 = vmatprep.subr.bf16.mxu0 0
        %1139 = vmatpush1.bf16.msra.mxu0 0
        %1140 = vmatprep.subr.bf16.mxu0 0
        %1141 = vmatpush1.bf16.msra.mxu0 0
        %1142 = vmatprep.subr.bf16.mxu0 0
        %1143 = vmatpush1.bf16.msra.mxu0 0
        %1144 = vmatprep.subr.bf16.mxu0 0
        %1145 = vmatpush1.bf16.msra.mxu0 0
        %1146 = vmatprep.mubr.bf16.mxu0 0
        %1147 = vmatmul.mubr.bf16.gmra.mrb[0].mxu0 %v1095
        %v1148 = vpop.f32.mrb[0].mxu0
        %v1149 = vadd.f32 %v1033, %v1148
        %v1150 = vpop.f32.mrb[0].mxu0
        %v1151 = vpop.f32.mrb[0].mxu0
        %v1152 = vadd.f32 %v1036, %v1151
        %v1153 = vpop.f32.mrb[0].mxu0
        %1154 = vmatprep.mubr.bf16.mxu0 0
        %1155 = vmatmul.mubr.bf16.gmra.mrb[0].mxu0 %v1097
        %v1156 = vpop.f32.mrb[0].mxu0
        %v1157 = vadd.f32 %v1041, %v1156
        %v1158 = vpop.f32.mrb[0].mxu0
        %v1159 = vpop.f32.mrb[0].mxu0
        %v1160 = vadd.f32 %v1044, %v1159
        %v1161 = vpop.f32.mrb[0].mxu0
        %1162 = vmatprep.mubr.bf16.mxu0 0
        %1163 = vmatmul.mubr.bf16.gmra.mrb[0].mxu0 %v1099
        %v1164 = vpop.f32.mrb[0].mxu0
        %v1165 = vadd.f32 %v1049, %v1164
        %v1166 = vpop.f32.mrb[0].mxu0
        %v1167 = vpop.f32.mrb[0].mxu0
        %v1168 = vadd.f32 %v1052, %v1167
        %v1169 = vpop.f32.mrb[0].mxu0
        %1170 = vmatprep.mubr.bf16.mxu0 0
        %1171 = vmatmul.mubr.bf16.gmra.mrb[0].mxu0 %v1101
        %v1172 = vpop.f32.mrb[0].mxu0
        %v1173 = vadd.f32 %v1057, %v1172
        %v1174 = vpop.f32.mrb[0].mxu0
        %v1175 = vpop.f32.mrb[0].mxu0
        %v1176 = vadd.f32 %v1060, %v1175
        %v1177 = vpop.f32.mrb[0].mxu0
        %1178 = vmatprep.mubr.bf16.mxu0 0
        %1179 = vmatmul.mubr.bf16.gmra.mrb[0].mxu0 %v1103
        %v1180 = vpop.f32.mrb[0].mxu0
        %v1181 = vadd.f32 %v1065, %v1180
        %v1182 = vpop.f32.mrb[0].mxu0
        %v1183 = vpop.f32.mrb[0].mxu0
        %v1184 = vadd.f32 %v1068, %v1183
        %v1185 = vpop.f32.mrb[0].mxu0
        %1186 = vmatprep.mubr.bf16.mxu0 0
        %1187 = vmatmul.mubr.bf16.gmra.mrb[0].mxu0 %v1105
        %v1188 = vpop.f32.mrb[0].mxu0
        %v1189 = vadd.f32 %v1073, %v1188
        %v1190 = vpop.f32.mrb[0].mxu0
        %v1191 = vpop.f32.mrb[0].mxu0
        %v1192 = vadd.f32 %v1076, %v1191
        %v1193 = vpop.f32.mrb[0].mxu0
        %1194 = vmatprep.mubr.bf16.mxu0 0
        %1195 = vmatmul.mubr.bf16.gmra.mrb[0].mxu0 %v1107
        %v1196 = vpop.f32.mrb[0].mxu0
        %v1197 = vadd.f32 %v1081, %v1196
        %v1198 = vpop.f32.mrb[0].mxu0
        %v1199 = vpop.f32.mrb[0].mxu0
        %v1200 = vadd.f32 %v1084, %v1199
        %v1201 = vpop.f32.mrb[0].mxu0
        %1202 = vmatprep.mubr.bf16.mxu0 0
        %1203 = vmatmul.mubr.bf16.gmra.mrb[0].mxu0 %v1109
        %v1204 = vpop.f32.mrb[0].mxu0
        %v1205 = vadd.f32 %v1089, %v1204
        %v1206 = vpop.f32.mrb[0].mxu0
        %v1207 = vpop.f32.mrb[0].mxu0
        %v1208 = vadd.f32 %v1092, %v1207
        %v1209 = vpop.f32.mrb[0].mxu0
        %1210 = vdwg.mxu0
        %vm1227 = vcmask 1046528
        %v1228 = vrot.slane %v479, 1
        %v1229 = vrot.slane %v480, 1
        %v1230 = vsel %vm1227, %v1228, %v1229
        %v1231 = vrot.slane %v481, 1
        %v1232 = vrot.slane %v482, 1
        %v1233 = vsel %vm1227, %v1231, %v1232
        %v1234 = vrot.slane %v483, 1
        %v1235 = vrot.slane %v484, 1
        %v1236 = vsel %vm1227, %v1234, %v1235
        %v1237 = vrot.slane %v485, 1
        %v1238 = vrot.slane %v486, 1
        %v1239 = vsel %vm1227, %v1237, %v1238
        %v1240 = vrot.slane %v487, 1
        %v1241 = vrot.slane %v488, 1
        %v1242 = vsel %vm1227, %v1240, %v1241
        %v1243 = vrot.slane %v489, 1
        %v1244 = vrot.slane %v490, 1
        %v1245 = vsel %vm1227, %v1243, %v1244
        %v1246 = vrot.slane %v491, 1
        %v1247 = vrot.slane %v492, 1
        %v1248 = vsel %vm1227, %v1246, %v1247
        %v1249 = vrot.slane %v493, 1
        %v1250 = vrot.slane %v494, 1
        %v1251 = vsel %vm1227, %v1249, %v1250
        %v1268 = vrot.slane %v499, 1
        %v1269 = vrot.slane %v500, 1
        %v1270 = vsel %vm1227, %v1268, %v1269
        %v1271 = vrot.slane %v501, 1
        %v1272 = vrot.slane %v502, 1
        %v1273 = vsel %vm1227, %v1271, %v1272
        %v1274 = vrot.slane %v503, 1
        %v1275 = vrot.slane %v504, 1
        %v1276 = vsel %vm1227, %v1274, %v1275
        %v1277 = vrot.slane %v505, 1
        %v1278 = vrot.slane %v506, 1
        %v1279 = vsel %vm1227, %v1277, %v1278
        %v1280 = vrot.slane %v507, 1
        %v1281 = vrot.slane %v508, 1
        %v1282 = vsel %vm1227, %v1280, %v1281
        %v1283 = vrot.slane %v509, 1
        %v1284 = vrot.slane %v510, 1
        %v1285 = vsel %vm1227, %v1283, %v1284
        %v1286 = vrot.slane %v511, 1
        %v1287 = vrot.slane %v512, 1
        %v1288 = vsel %vm1227, %v1286, %v1287
        %v1289 = vrot.slane %v513, 1
        %v1290 = vrot.slane %v514, 1
        %v1291 = vsel %vm1227, %v1289, %v1290
        %v1293 = vsel %vm421, %v1230, 0
        %v1296 = vsel %vm421, %v1233, 0
        %v1299 = vsel %vm421, %v1236, 0
        %v1302 = vsel %vm421, %v1239, 0
        %v1305 = vsel %vm421, %v1242, 0
        %v1308 = vsel %vm421, %v1245, 0
        %v1311 = vsel %vm421, %v1248, 0
        %v1314 = vsel %vm421, %v1251, 0
        %v1317 = vsel %vm754, %v521, 0
        %1319 = vmatprep.subr.bf16.mxu0 0
        %1320 = vmatpush1.bf16.msra.mxu0 %v1317
        %1321 = vmatprep.subr.bf16.mxu0 0
        %1322 = vmatpush1.bf16.msra.mxu0 0
        %1323 = vmatprep.subr.bf16.mxu0 0
        %1324 = vmatpush1.bf16.msra.mxu0 0
        %1325 = vmatprep.subr.bf16.mxu0 0
        %1326 = vmatpush1.bf16.msra.mxu0 0
        %1327 = vmatprep.subr.bf16.mxu0 0
        %1328 = vmatpush1.bf16.msra.mxu0 0
        %1329 = vmatprep.subr.bf16.mxu0 0
        %1330 = vmatpush1.bf16.msra.mxu0 0
        %1331 = vmatprep.subr.bf16.mxu0 0
        %1332 = vmatpush1.bf16.msra.mxu0 0
        %1333 = vmatprep.subr.bf16.mxu0 0
        %1334 = vmatpush1.bf16.msra.mxu0 0
        %1335 = vmatprep.subr.bf16.mxu0 0
        %1336 = vmatpush1.bf16.msra.mxu0 0
        %1337 = vmatprep.subr.bf16.mxu0 0
        %1338 = vmatpush1.bf16.msra.mxu0 0
        %1339 = vmatprep.subr.bf16.mxu0 0
        %1340 = vmatpush1.bf16.msra.mxu0 0
        %1341 = vmatprep.subr.bf16.mxu0 0
        %1342 = vmatpush1.bf16.msra.mxu0 0
        %1343 = vmatprep.subr.bf16.mxu0 0
        %1344 = vmatpush1.bf16.msra.mxu0 0
        %1345 = vmatprep.subr.bf16.mxu0 0
        %1346 = vmatpush1.bf16.msra.mxu0 0
        %1347 = vmatprep.subr.bf16.mxu0 0
        %1348 = vmatpush1.bf16.msra.mxu0 0
        %1349 = vmatprep.subr.bf16.mxu0 0
        %1350 = vmatpush1.bf16.msra.mxu0 0
        %1351 = vmatprep.mubr.bf16.mxu0 0
        %1352 = vmatmul.mubr.bf16.gmra.mrb[0].mxu0 %v1293
        %v1353 = vpop.f32.mrb[0].mxu0
        %v1354 = vadd.f32 0.0, %v1353
        %v1355 = vpop.f32.mrb[0].mxu0
        %v1356 = vpop.f32.mrb[0].mxu0
        %v1357 = vadd.f32 0.0, %v1356
        %v1358 = vpop.f32.mrb[0].mxu0
        %1359 = vmatprep.mubr.bf16.mxu0 0
        %1360 = vmatmul.mubr.bf16.gmra.mrb[0].mxu0 %v1296
        %v1361 = vpop.f32.mrb[0].mxu0
        %v1362 = vadd.f32 0.0, %v1361
        %v1363 = vpop.f32.mrb[0].mxu0
        %v1364 = vpop.f32.mrb[0].mxu0
        %v1365 = vadd.f32 0.0, %v1364
        %v1366 = vpop.f32.mrb[0].mxu0
        %1367 = vmatprep.mubr.bf16.mxu0 0
        %1368 = vmatmul.mubr.bf16.gmra.mrb[0].mxu0 %v1299
        %v1369 = vpop.f32.mrb[0].mxu0
        %v1370 = vadd.f32 0.0, %v1369
        %v1371 = vpop.f32.mrb[0].mxu0
        %v1372 = vpop.f32.mrb[0].mxu0
        %v1373 = vadd.f32 0.0, %v1372
        %v1374 = vpop.f32.mrb[0].mxu0
        %1375 = vmatprep.mubr.bf16.mxu0 0
        %1376 = vmatmul.mubr.bf16.gmra.mrb[0].mxu0 %v1302
        %v1377 = vpop.f32.mrb[0].mxu0
        %v1378 = vadd.f32 0.0, %v1377
        %v1379 = vpop.f32.mrb[0].mxu0
        %v1380 = vpop.f32.mrb[0].mxu0
        %v1381 = vadd.f32 0.0, %v1380
        %v1382 = vpop.f32.mrb[0].mxu0
        %1383 = vmatprep.mubr.bf16.mxu0 0
        %1384 = vmatmul.mubr.bf16.gmra.mrb[0].mxu0 %v1305
        %v1385 = vpop.f32.mrb[0].mxu0
        %v1386 = vadd.f32 0.0, %v1385
        %v1387 = vpop.f32.mrb[0].mxu0
        %v1388 = vpop.f32.mrb[0].mxu0
        %v1389 = vadd.f32 0.0, %v1388
        %v1390 = vpop.f32.mrb[0].mxu0
        %1391 = vmatprep.mubr.bf16.mxu0 0
        %1392 = vmatmul.mubr.bf16.gmra.mrb[0].mxu0 %v1308
        %v1393 = vpop.f32.mrb[0].mxu0
        %v1394 = vadd.f32 0.0, %v1393
        %v1395 = vpop.f32.mrb[0].mxu0
        %v1396 = vpop.f32.mrb[0].mxu0
        %v1397 = vadd.f32 0.0, %v1396
        %v1398 = vpop.f32.mrb[0].mxu0
        %1399 = vmatprep.mubr.bf16.mxu0 0
        %1400 = vmatmul.mubr.bf16.gmra.mrb[0].mxu0 %v1311
        %v1401 = vpop.f32.mrb[0].mxu0
        %v1402 = vadd.f32 0.0, %v1401
        %v1403 = vpop.f32.mrb[0].mxu0
        %v1404 = vpop.f32.mrb[0].mxu0
        %v1405 = vadd.f32 0.0, %v1404
        %v1406 = vpop.f32.mrb[0].mxu0
        %1407 = vmatprep.mubr.bf16.mxu0 0
        %1408 = vmatmul.mubr.bf16.gmra.mrb[0].mxu0 %v1314
        %v1409 = vpop.f32.mrb[0].mxu0
        %v1410 = vadd.f32 0.0, %v1409
        %v1411 = vpop.f32.mrb[0].mxu0
        %v1412 = vpop.f32.mrb[0].mxu0
        %v1413 = vadd.f32 0.0, %v1412
        %v1414 = vpop.f32.mrb[0].mxu0
        %1415 = vdwg.mxu0
        %v1416 = vadd.f32 %v909, %v1354
        %v1417 = vadd.f32 %v912, %v1357
        %v1418 = vadd.f32 %v917, %v1362
        %v1419 = vadd.f32 %v920, %v1365
        %v1420 = vadd.f32 %v925, %v1370
        %v1421 = vadd.f32 %v928, %v1373
        %v1422 = vadd.f32 %v933, %v1378
        %v1423 = vadd.f32 %v936, %v1381
        %v1424 = vadd.f32 %v941, %v1386
        %v1425 = vadd.f32 %v944, %v1389
        %v1426 = vadd.f32 %v949, %v1394
        %v1427 = vadd.f32 %v952, %v1397
        %v1428 = vadd.f32 %v957, %v1402
        %v1429 = vadd.f32 %v960, %v1405
        %v1430 = vadd.f32 %v965, %v1410
        %v1431 = vadd.f32 %v968, %v1413
        %v1433 = vsel %vm421, %v1270, 0
        %v1436 = vsel %vm421, %v1273, 0
        %v1439 = vsel %vm421, %v1276, 0
        %v1442 = vsel %vm421, %v1279, 0
        %v1445 = vsel %vm421, %v1282, 0
        %v1448 = vsel %vm421, %v1285, 0
        %v1451 = vsel %vm421, %v1288, 0
        %v1454 = vsel %vm421, %v1291, 0
        %v1457 = vsel %vm754, %v530, 0
        %1459 = vmatprep.subr.bf16.mxu0 0
        %1460 = vmatpush1.bf16.msra.mxu0 %v1457
        %1461 = vmatprep.subr.bf16.mxu0 0
        %1462 = vmatpush1.bf16.msra.mxu0 0
        %1463 = vmatprep.subr.bf16.mxu0 0
        %1464 = vmatpush1.bf16.msra.mxu0 0
        %1465 = vmatprep.subr.bf16.mxu0 0
        %1466 = vmatpush1.bf16.msra.mxu0 0
        %1467 = vmatprep.subr.bf16.mxu0 0
        %1468 = vmatpush1.bf16.msra.mxu0 0
        %1469 = vmatprep.subr.bf16.mxu0 0
        %1470 = vmatpush1.bf16.msra.mxu0 0
        %1471 = vmatprep.subr.bf16.mxu0 0
        %1472 = vmatpush1.bf16.msra.mxu0 0
        %1473 = vmatprep.subr.bf16.mxu0 0
        %1474 = vmatpush1.bf16.msra.mxu0 0
        %1475 = vmatprep.subr.bf16.mxu0 0
        %1476 = vmatpush1.bf16.msra.mxu0 0
        %1477 = vmatprep.subr.bf16.mxu0 0
        %1478 = vmatpush1.bf16.msra.mxu0 0
        %1479 = vmatprep.subr.bf16.mxu0 0
        %1480 = vmatpush1.bf16.msra.mxu0 0
        %1481 = vmatprep.subr.bf16.mxu0 0
        %1482 = vmatpush1.bf16.msra.mxu0 0
        %1483 = vmatprep.subr.bf16.mxu0 0
        %1484 = vmatpush1.bf16.msra.mxu0 0
        %1485 = vmatprep.subr.bf16.mxu0 0
        %1486 = vmatpush1.bf16.msra.mxu0 0
        %1487 = vmatprep.subr.bf16.mxu0 0
        %1488 = vmatpush1.bf16.msra.mxu0 0
        %1489 = vmatprep.subr.bf16.mxu0 0
        %1490 = vmatpush1.bf16.msra.mxu0 0
        %1491 = vmatprep.mubr.bf16.mxu0 0
        %1492 = vmatmul.mubr.bf16.gmra.mrb[0].mxu0 %v1433
        %v1493 = vpop.f32.mrb[0].mxu0
        %v1494 = vadd.f32 0.0, %v1493
        %v1495 = vpop.f32.mrb[0].mxu0
        %v1496 = vpop.f32.mrb[0].mxu0
        %v1497 = vadd.f32 0.0, %v1496
        %v1498 = vpop.f32.mrb[0].mxu0
        %1499 = vmatprep.mubr.bf16.mxu0 0
        %1500 = vmatmul.mubr.bf16.gmra.mrb[0].mxu0 %v1436
        %v1501 = vpop.f32.mrb[0].mxu0
        %v1502 = vadd.f32 0.0, %v1501
        %v1503 = vpop.f32.mrb[0].mxu0
        %v1504 = vpop.f32.mrb[0].mxu0
        %v1505 = vadd.f32 0.0, %v1504
        %v1506 = vpop.f32.mrb[0].mxu0
        %1507 = vmatprep.mubr.bf16.mxu0 0
        %1508 = vmatmul.mubr.bf16.gmra.mrb[0].mxu0 %v1439
        %v1509 = vpop.f32.mrb[0].mxu0
        %v1510 = vadd.f32 0.0, %v1509
        %v1511 = vpop.f32.mrb[0].mxu0
        %v1512 = vpop.f32.mrb[0].mxu0
        %v1513 = vadd.f32 0.0, %v1512
        %v1514 = vpop.f32.mrb[0].mxu0
        %1515 = vmatprep.mubr.bf16.mxu0 0
        %1516 = vmatmul.mubr.bf16.gmra.mrb[0].mxu0 %v1442
        %v1517 = vpop.f32.mrb[0].mxu0
        %v1518 = vadd.f32 0.0, %v1517
        %v1519 = vpop.f32.mrb[0].mxu0
        %v1520 = vpop.f32.mrb[0].mxu0
        %v1521 = vadd.f32 0.0, %v1520
        %v1522 = vpop.f32.mrb[0].mxu0
        %1523 = vmatprep.mubr.bf16.mxu0 0
        %1524 = vmatmul.mubr.bf16.gmra.mrb[0].mxu0 %v1445
        %v1525 = vpop.f32.mrb[0].mxu0
        %v1526 = vadd.f32 0.0, %v1525
        %v1527 = vpop.f32.mrb[0].mxu0
        %v1528 = vpop.f32.mrb[0].mxu0
        %v1529 = vadd.f32 0.0, %v1528
        %v1530 = vpop.f32.mrb[0].mxu0
        %1531 = vmatprep.mubr.bf16.mxu0 0
        %1532 = vmatmul.mubr.bf16.gmra.mrb[0].mxu0 %v1448
        %v1533 = vpop.f32.mrb[0].mxu0
        %v1534 = vadd.f32 0.0, %v1533
        %v1535 = vpop.f32.mrb[0].mxu0
        %v1536 = vpop.f32.mrb[0].mxu0
        %v1537 = vadd.f32 0.0, %v1536
        %v1538 = vpop.f32.mrb[0].mxu0
        %1539 = vmatprep.mubr.bf16.mxu0 0
        %1540 = vmatmul.mubr.bf16.gmra.mrb[0].mxu0 %v1451
        %v1541 = vpop.f32.mrb[0].mxu0
        %v1542 = vadd.f32 0.0, %v1541
        %v1543 = vpop.f32.mrb[0].mxu0
        %v1544 = vpop.f32.mrb[0].mxu0
        %v1545 = vadd.f32 0.0, %v1544
        %v1546 = vpop.f32.mrb[0].mxu0
        %1547 = vmatprep.mubr.bf16.mxu0 0
        %1548 = vmatmul.mubr.bf16.gmra.mrb[0].mxu0 %v1454
        %v1549 = vpop.f32.mrb[0].mxu0
        %v1550 = vadd.f32 0.0, %v1549
        %v1551 = vpop.f32.mrb[0].mxu0
        %v1552 = vpop.f32.mrb[0].mxu0
        %v1553 = vadd.f32 0.0, %v1552
        %v1554 = vpop.f32.mrb[0].mxu0
        %1555 = vdwg.mxu0
        %v1556 = vadd.f32 %v1149, %v1494
        %v1557 = vadd.f32 %v1152, %v1497
        %v1558 = vadd.f32 %v1157, %v1502
        %v1559 = vadd.f32 %v1160, %v1505
        %v1560 = vadd.f32 %v1165, %v1510
        %v1561 = vadd.f32 %v1168, %v1513
        %v1562 = vadd.f32 %v1173, %v1518
        %v1563 = vadd.f32 %v1176, %v1521
        %v1564 = vadd.f32 %v1181, %v1526
        %v1565 = vadd.f32 %v1184, %v1529
        %v1566 = vadd.f32 %v1189, %v1534
        %v1567 = vadd.f32 %v1192, %v1537
        %v1568 = vadd.f32 %v1197, %v1542
        %v1569 = vadd.f32 %v1200, %v1545
        %v1570 = vadd.f32 %v1205, %v1550
        %v1571 = vadd.f32 %v1208, %v1553
        %v1573 = vsel %vm421, %v495, 0
        %v1576 = vsel %vm754, %v522, 0
        %1578 = vmatprep.subr.bf16.mxu0 0
        %1579 = vmatpush1.bf16.msra.mxu0 %v1576
        %1580 = vmatprep.subr.bf16.mxu0 0
        %1581 = vmatpush1.bf16.msra.mxu0 0
        %1582 = vmatprep.subr.bf16.mxu0 0
        %1583 = vmatpush1.bf16.msra.mxu0 0
        %1584 = vmatprep.subr.bf16.mxu0 0
        %1585 = vmatpush1.bf16.msra.mxu0 0
        %1586 = vmatprep.subr.bf16.mxu0 0
        %1587 = vmatpush1.bf16.msra.mxu0 0
        %1588 = vmatprep.subr.bf16.mxu0 0
        %1589 = vmatpush1.bf16.msra.mxu0 0
        %1590 = vmatprep.subr.bf16.mxu0 0
        %1591 = vmatpush1.bf16.msra.mxu0 0
        %1592 = vmatprep.subr.bf16.mxu0 0
        %1593 = vmatpush1.bf16.msra.mxu0 0
        %1594 = vmatprep.subr.bf16.mxu0 0
        %1595 = vmatpush1.bf16.msra.mxu0 0
        %1596 = vmatprep.subr.bf16.mxu0 0
        %1597 = vmatpush1.bf16.msra.mxu0 0
        %1598 = vmatprep.subr.bf16.mxu0 0
        %1599 = vmatpush1.bf16.msra.mxu0 0
        %1600 = vmatprep.subr.bf16.mxu0 0
        %1601 = vmatpush1.bf16.msra.mxu0 0
        %1602 = vmatprep.subr.bf16.mxu0 0
        %1603 = vmatpush1.bf16.msra.mxu0 0
        %1604 = vmatprep.subr.bf16.mxu0 0
        %1605 = vmatpush1.bf16.msra.mxu0 0
        %1606 = vmatprep.subr.bf16.mxu0 0
        %1607 = vmatpush1.bf16.msra.mxu0 0
        %1608 = vmatprep.subr.bf16.mxu0 0
        %1609 = vmatpush1.bf16.msra.mxu0 0
        %1610 = vmatprep.mubr.bf16.mxu0 0
        %1611 = vmatmul.mubr.bf16.gmra.mrb[0].mxu0 %v857
        %v1612 = vpop.f32.mrb[0].mxu0
        %v1613 = vadd.f32 0.0, %v1612
        %v1614 = vpop.f32.mrb[0].mxu0
        %v1615 = vpop.f32.mrb[0].mxu0
        %v1616 = vadd.f32 0.0, %v1615
        %v1617 = vpop.f32.mrb[0].mxu0
        %1618 = vmatprep.mubr.bf16.mxu0 0
        %1619 = vmatmul.mubr.bf16.gmra.mrb[0].mxu0 %v859
        %v1620 = vpop.f32.mrb[0].mxu0
        %v1621 = vadd.f32 0.0, %v1620
        %v1622 = vpop.f32.mrb[0].mxu0
        %v1623 = vpop.f32.mrb[0].mxu0
        %v1624 = vadd.f32 0.0, %v1623
        %v1625 = vpop.f32.mrb[0].mxu0
        %1626 = vmatprep.mubr.bf16.mxu0 0
        %1627 = vmatmul.mubr.bf16.gmra.mrb[0].mxu0 %v861
        %v1628 = vpop.f32.mrb[0].mxu0
        %v1629 = vadd.f32 0.0, %v1628
        %v1630 = vpop.f32.mrb[0].mxu0
        %v1631 = vpop.f32.mrb[0].mxu0
        %v1632 = vadd.f32 0.0, %v1631
        %v1633 = vpop.f32.mrb[0].mxu0
        %1634 = vmatprep.mubr.bf16.mxu0 0
        %1635 = vmatmul.mubr.bf16.gmra.mrb[0].mxu0 %v863
        %v1636 = vpop.f32.mrb[0].mxu0
        %v1637 = vadd.f32 0.0, %v1636
        %v1638 = vpop.f32.mrb[0].mxu0
        %v1639 = vpop.f32.mrb[0].mxu0
        %v1640 = vadd.f32 0.0, %v1639
        %v1641 = vpop.f32.mrb[0].mxu0
        %1642 = vmatprep.mubr.bf16.mxu0 0
        %1643 = vmatmul.mubr.bf16.gmra.mrb[0].mxu0 %v865
        %v1644 = vpop.f32.mrb[0].mxu0
        %v1645 = vadd.f32 0.0, %v1644
        %v1646 = vpop.f32.mrb[0].mxu0
        %v1647 = vpop.f32.mrb[0].mxu0
        %v1648 = vadd.f32 0.0, %v1647
        %v1649 = vpop.f32.mrb[0].mxu0
        %1650 = vmatprep.mubr.bf16.mxu0 0
        %1651 = vmatmul.mubr.bf16.gmra.mrb[0].mxu0 %v867
        %v1652 = vpop.f32.mrb[0].mxu0
        %v1653 = vadd.f32 0.0, %v1652
        %v1654 = vpop.f32.mrb[0].mxu0
        %v1655 = vpop.f32.mrb[0].mxu0
        %v1656 = vadd.f32 0.0, %v1655
        %v1657 = vpop.f32.mrb[0].mxu0
        %1658 = vmatprep.mubr.bf16.mxu0 0
        %1659 = vmatmul.mubr.bf16.gmra.mrb[0].mxu0 %v869
        %v1660 = vpop.f32.mrb[0].mxu0
        %v1661 = vadd.f32 0.0, %v1660
        %v1662 = vpop.f32.mrb[0].mxu0
        %v1663 = vpop.f32.mrb[0].mxu0
        %v1664 = vadd.f32 0.0, %v1663
        %v1665 = vpop.f32.mrb[0].mxu0
        %1666 = vmatprep.mubr.bf16.mxu0 0
        %1667 = vmatmul.mubr.bf16.gmra.mrb[0].mxu0 %v1573
        %v1668 = vpop.f32.mrb[0].mxu0
        %v1669 = vadd.f32 0.0, %v1668
        %v1670 = vpop.f32.mrb[0].mxu0
        %v1671 = vpop.f32.mrb[0].mxu0
        %v1672 = vadd.f32 0.0, %v1671
        %v1673 = vpop.f32.mrb[0].mxu0
        %1674 = vdwg.mxu0
        %v1675 = vadd.f32 %v1416, %v1613
        %v1676 = vadd.f32 %v1417, %v1616
        %v1677 = vadd.f32 %v1418, %v1621
        %v1678 = vadd.f32 %v1419, %v1624
        %v1679 = vadd.f32 %v1420, %v1629
        %v1680 = vadd.f32 %v1421, %v1632
        %v1681 = vadd.f32 %v1422, %v1637
        %v1682 = vadd.f32 %v1423, %v1640
        %v1683 = vadd.f32 %v1424, %v1645
        %v1684 = vadd.f32 %v1425, %v1648
        %v1685 = vadd.f32 %v1426, %v1653
        %v1686 = vadd.f32 %v1427, %v1656
        %v1687 = vadd.f32 %v1428, %v1661
        %v1688 = vadd.f32 %v1429, %v1664
        %v1689 = vadd.f32 %v1430, %v1669
        %v1690 = vadd.f32 %v1431, %v1672
        %v1692 = vsel %vm421, %v515, 0
        %v1695 = vsel %vm754, %v531, 0
        %1697 = vmatprep.subr.bf16.mxu0 0
        %1698 = vmatpush1.bf16.msra.mxu0 %v1695
        %1699 = vmatprep.subr.bf16.mxu0 0
        %1700 = vmatpush1.bf16.msra.mxu0 0
        %1701 = vmatprep.subr.bf16.mxu0 0
        %1702 = vmatpush1.bf16.msra.mxu0 0
        %1703 = vmatprep.subr.bf16.mxu0 0
        %1704 = vmatpush1.bf16.msra.mxu0 0
        %1705 = vmatprep.subr.bf16.mxu0 0
        %1706 = vmatpush1.bf16.msra.mxu0 0
        %1707 = vmatprep.subr.bf16.mxu0 0
        %1708 = vmatpush1.bf16.msra.mxu0 0
        %1709 = vmatprep.subr.bf16.mxu0 0
        %1710 = vmatpush1.bf16.msra.mxu0 0
        %1711 = vmatprep.subr.bf16.mxu0 0
        %1712 = vmatpush1.bf16.msra.mxu0 0
        %1713 = vmatprep.subr.bf16.mxu0 0
        %1714 = vmatpush1.bf16.msra.mxu0 0
        %1715 = vmatprep.subr.bf16.mxu0 0
        %1716 = vmatpush1.bf16.msra.mxu0 0
        %1717 = vmatprep.subr.bf16.mxu0 0
        %1718 = vmatpush1.bf16.msra.mxu0 0
        %1719 = vmatprep.subr.bf16.mxu0 0
        %1720 = vmatpush1.bf16.msra.mxu0 0
        %1721 = vmatprep.subr.bf16.mxu0 0
        %1722 = vmatpush1.bf16.msra.mxu0 0
        %1723 = vmatprep.subr.bf16.mxu0 0
        %1724 = vmatpush1.bf16.msra.mxu0 0
        %1725 = vmatprep.subr.bf16.mxu0 0
        %1726 = vmatpush1.bf16.msra.mxu0 0
        %1727 = vmatprep.subr.bf16.mxu0 0
        %1728 = vmatpush1.bf16.msra.mxu0 0
        %1729 = vmatprep.mubr.bf16.mxu0 0
        %1730 = vmatmul.mubr.bf16.gmra.mrb[0].mxu0 %v1097
        %v1731 = vpop.f32.mrb[0].mxu0
        %v1732 = vadd.f32 0.0, %v1731
        %v1733 = vpop.f32.mrb[0].mxu0
        %v1734 = vpop.f32.mrb[0].mxu0
        %v1735 = vadd.f32 0.0, %v1734
        %v1736 = vpop.f32.mrb[0].mxu0
        %1737 = vmatprep.mubr.bf16.mxu0 0
        %1738 = vmatmul.mubr.bf16.gmra.mrb[0].mxu0 %v1099
        %v1739 = vpop.f32.mrb[0].mxu0
        %v1740 = vadd.f32 0.0, %v1739
        %v1741 = vpop.f32.mrb[0].mxu0
        %v1742 = vpop.f32.mrb[0].mxu0
        %v1743 = vadd.f32 0.0, %v1742
        %v1744 = vpop.f32.mrb[0].mxu0
        %1745 = vmatprep.mubr.bf16.mxu0 0
        %1746 = vmatmul.mubr.bf16.gmra.mrb[0].mxu0 %v1101
        %v1747 = vpop.f32.mrb[0].mxu0
        %v1748 = vadd.f32 0.0, %v1747
        %v1749 = vpop.f32.mrb[0].mxu0
        %v1750 = vpop.f32.mrb[0].mxu0
        %v1751 = vadd.f32 0.0, %v1750
        %v1752 = vpop.f32.mrb[0].mxu0
        %1753 = vmatprep.mubr.bf16.mxu0 0
        %1754 = vmatmul.mubr.bf16.gmra.mrb[0].mxu0 %v1103
        %v1755 = vpop.f32.mrb[0].mxu0
        %v1756 = vadd.f32 0.0, %v1755
        %v1757 = vpop.f32.mrb[0].mxu0
        %v1758 = vpop.f32.mrb[0].mxu0
        %v1759 = vadd.f32 0.0, %v1758
        %v1760 = vpop.f32.mrb[0].mxu0
        %1761 = vmatprep.mubr.bf16.mxu0 0
        %1762 = vmatmul.mubr.bf16.gmra.mrb[0].mxu0 %v1105
        %v1763 = vpop.f32.mrb[0].mxu0
        %v1764 = vadd.f32 0.0, %v1763
        %v1765 = vpop.f32.mrb[0].mxu0
        %v1766 = vpop.f32.mrb[0].mxu0
        %v1767 = vadd.f32 0.0, %v1766
        %v1768 = vpop.f32.mrb[0].mxu0
        %1769 = vmatprep.mubr.bf16.mxu0 0
        %1770 = vmatmul.mubr.bf16.gmra.mrb[0].mxu0 %v1107
        %v1771 = vpop.f32.mrb[0].mxu0
        %v1772 = vadd.f32 0.0, %v1771
        %v1773 = vpop.f32.mrb[0].mxu0
        %v1774 = vpop.f32.mrb[0].mxu0
        %v1775 = vadd.f32 0.0, %v1774
        %v1776 = vpop.f32.mrb[0].mxu0
        %1777 = vmatprep.mubr.bf16.mxu0 0
        %1778 = vmatmul.mubr.bf16.gmra.mrb[0].mxu0 %v1109
        %v1779 = vpop.f32.mrb[0].mxu0
        %v1780 = vadd.f32 0.0, %v1779
        %v1781 = vpop.f32.mrb[0].mxu0
        %v1782 = vpop.f32.mrb[0].mxu0
        %v1783 = vadd.f32 0.0, %v1782
        %v1784 = vpop.f32.mrb[0].mxu0
        %1785 = vmatprep.mubr.bf16.mxu0 0
        %1786 = vmatmul.mubr.bf16.gmra.mrb[0].mxu0 %v1692
        %v1787 = vpop.f32.mrb[0].mxu0
        %v1788 = vadd.f32 0.0, %v1787
        %v1789 = vpop.f32.mrb[0].mxu0
        %v1790 = vpop.f32.mrb[0].mxu0
        %v1791 = vadd.f32 0.0, %v1790
        %v1792 = vpop.f32.mrb[0].mxu0
        %1793 = vdwg.mxu0
        %v1794 = vadd.f32 %v1556, %v1732
        %v1795 = vadd.f32 %v1557, %v1735
        %v1796 = vadd.f32 %v1558, %v1740
        %v1797 = vadd.f32 %v1559, %v1743
        %v1798 = vadd.f32 %v1560, %v1748
        %v1799 = vadd.f32 %v1561, %v1751
        %v1800 = vadd.f32 %v1562, %v1756
        %v1801 = vadd.f32 %v1563, %v1759
        %v1802 = vadd.f32 %v1564, %v1764
        %v1803 = vadd.f32 %v1565, %v1767
        %v1804 = vadd.f32 %v1566, %v1772
        %v1805 = vadd.f32 %v1567, %v1775
        %v1806 = vadd.f32 %v1568, %v1780
        %v1807 = vadd.f32 %v1569, %v1783
        %v1808 = vadd.f32 %v1570, %v1788
        %v1809 = vadd.f32 %v1571, %v1791
        %v1810 = vshrl.u32 %v495, 16
        %v1812 = vshll.u32 %v495, 16
        %v1814 = vrot.slane %v1812, 1
        %v1815 = vor.u32 %v1810, %v1814
        %v1817 = vshll.u32 %v496, 16
        %v1819 = vrot.slane %v1817, 1
        %v1820 = vsel %vm537, %v1815, %v1819
        %v1821 = vshrl.u32 %v515, 16
        %v1823 = vshll.u32 %v515, 16
        %v1825 = vrot.slane %v1823, 1
        %v1826 = vor.u32 %v1821, %v1825
        %v1828 = vshll.u32 %v516, 16
        %v1830 = vrot.slane %v1828, 1
        %v1831 = vsel %vm537, %v1826, %v1830
        %v1833 = vsel %vm421, %v1820, 0
        %v1836 = vsel %vm754, %v523, 0
        %1838 = vmatprep.subr.bf16.mxu0 0
        %1839 = vmatpush1.bf16.msra.mxu0 %v1836
        %1840 = vmatprep.subr.bf16.mxu0 0
        %1841 = vmatpush1.bf16.msra.mxu0 0
        %1842 = vmatprep.subr.bf16.mxu0 0
        %1843 = vmatpush1.bf16.msra.mxu0 0
        %1844 = vmatprep.subr.bf16.mxu0 0
        %1845 = vmatpush1.bf16.msra.mxu0 0
        %1846 = vmatprep.subr.bf16.mxu0 0
        %1847 = vmatpush1.bf16.msra.mxu0 0
        %1848 = vmatprep.subr.bf16.mxu0 0
        %1849 = vmatpush1.bf16.msra.mxu0 0
        %1850 = vmatprep.subr.bf16.mxu0 0
        %1851 = vmatpush1.bf16.msra.mxu0 0
        %1852 = vmatprep.subr.bf16.mxu0 0
        %1853 = vmatpush1.bf16.msra.mxu0 0
        %1854 = vmatprep.subr.bf16.mxu0 0
        %1855 = vmatpush1.bf16.msra.mxu0 0
        %1856 = vmatprep.subr.bf16.mxu0 0
        %1857 = vmatpush1.bf16.msra.mxu0 0
        %1858 = vmatprep.subr.bf16.mxu0 0
        %1859 = vmatpush1.bf16.msra.mxu0 0
        %1860 = vmatprep.subr.bf16.mxu0 0
        %1861 = vmatpush1.bf16.msra.mxu0 0
        %1862 = vmatprep.subr.bf16.mxu0 0
        %1863 = vmatpush1.bf16.msra.mxu0 0
        %1864 = vmatprep.subr.bf16.mxu0 0
        %1865 = vmatpush1.bf16.msra.mxu0 0
        %1866 = vmatprep.subr.bf16.mxu0 0
        %1867 = vmatpush1.bf16.msra.mxu0 0
        %1868 = vmatprep.subr.bf16.mxu0 0
        %1869 = vmatpush1.bf16.msra.mxu0 0
        %1870 = vmatprep.mubr.bf16.mxu0 0
        %1871 = vmatmul.mubr.bf16.gmra.mrb[0].mxu0 %v734
        %v1872 = vpop.f32.mrb[0].mxu0
        %v1873 = vadd.f32 0.0, %v1872
        %v1874 = vpop.f32.mrb[0].mxu0
        %v1875 = vpop.f32.mrb[0].mxu0
        %v1876 = vadd.f32 0.0, %v1875
        %v1877 = vpop.f32.mrb[0].mxu0
        %1878 = vmatprep.mubr.bf16.mxu0 0
        %1879 = vmatmul.mubr.bf16.gmra.mrb[0].mxu0 %v737
        %v1880 = vpop.f32.mrb[0].mxu0
        %v1881 = vadd.f32 0.0, %v1880
        %v1882 = vpop.f32.mrb[0].mxu0
        %v1883 = vpop.f32.mrb[0].mxu0
        %v1884 = vadd.f32 0.0, %v1883
        %v1885 = vpop.f32.mrb[0].mxu0
        %1886 = vmatprep.mubr.bf16.mxu0 0
        %1887 = vmatmul.mubr.bf16.gmra.mrb[0].mxu0 %v740
        %v1888 = vpop.f32.mrb[0].mxu0
        %v1889 = vadd.f32 0.0, %v1888
        %v1890 = vpop.f32.mrb[0].mxu0
        %v1891 = vpop.f32.mrb[0].mxu0
        %v1892 = vadd.f32 0.0, %v1891
        %v1893 = vpop.f32.mrb[0].mxu0
        %1894 = vmatprep.mubr.bf16.mxu0 0
        %1895 = vmatmul.mubr.bf16.gmra.mrb[0].mxu0 %v743
        %v1896 = vpop.f32.mrb[0].mxu0
        %v1897 = vadd.f32 0.0, %v1896
        %v1898 = vpop.f32.mrb[0].mxu0
        %v1899 = vpop.f32.mrb[0].mxu0
        %v1900 = vadd.f32 0.0, %v1899
        %v1901 = vpop.f32.mrb[0].mxu0
        %1902 = vmatprep.mubr.bf16.mxu0 0
        %1903 = vmatmul.mubr.bf16.gmra.mrb[0].mxu0 %v746
        %v1904 = vpop.f32.mrb[0].mxu0
        %v1905 = vadd.f32 0.0, %v1904
        %v1906 = vpop.f32.mrb[0].mxu0
        %v1907 = vpop.f32.mrb[0].mxu0
        %v1908 = vadd.f32 0.0, %v1907
        %v1909 = vpop.f32.mrb[0].mxu0
        %1910 = vmatprep.mubr.bf16.mxu0 0
        %1911 = vmatmul.mubr.bf16.gmra.mrb[0].mxu0 %v749
        %v1912 = vpop.f32.mrb[0].mxu0
        %v1913 = vadd.f32 0.0, %v1912
        %v1914 = vpop.f32.mrb[0].mxu0
        %v1915 = vpop.f32.mrb[0].mxu0
        %v1916 = vadd.f32 0.0, %v1915
        %v1917 = vpop.f32.mrb[0].mxu0
        %1918 = vmatprep.mubr.bf16.mxu0 0
        %1919 = vmatmul.mubr.bf16.gmra.mrb[0].mxu0 %v752
        %v1920 = vpop.f32.mrb[0].mxu0
        %v1921 = vadd.f32 0.0, %v1920
        %v1922 = vpop.f32.mrb[0].mxu0
        %v1923 = vpop.f32.mrb[0].mxu0
        %v1924 = vadd.f32 0.0, %v1923
        %v1925 = vpop.f32.mrb[0].mxu0
        %1926 = vmatprep.mubr.bf16.mxu0 0
        %1927 = vmatmul.mubr.bf16.gmra.mrb[0].mxu0 %v1833
        %v1928 = vpop.f32.mrb[0].mxu0
        %v1929 = vadd.f32 0.0, %v1928
        %v1930 = vpop.f32.mrb[0].mxu0
        %v1931 = vpop.f32.mrb[0].mxu0
        %v1932 = vadd.f32 0.0, %v1931
        %v1933 = vpop.f32.mrb[0].mxu0
        %1934 = vdwg.mxu0
        %v1935 = vadd.f32 %v1675, %v1873
        %v1936 = vadd.f32 %v1676, %v1876
        %v1937 = vadd.f32 %v1677, %v1881
        %v1938 = vadd.f32 %v1678, %v1884
        %v1939 = vadd.f32 %v1679, %v1889
        %v1940 = vadd.f32 %v1680, %v1892
        %v1941 = vadd.f32 %v1681, %v1897
        %v1942 = vadd.f32 %v1682, %v1900
        %v1943 = vadd.f32 %v1683, %v1905
        %v1944 = vadd.f32 %v1684, %v1908
        %v1945 = vadd.f32 %v1685, %v1913
        %v1946 = vadd.f32 %v1686, %v1916
        %v1947 = vadd.f32 %v1687, %v1921
        %v1948 = vadd.f32 %v1688, %v1924
        %v1949 = vadd.f32 %v1689, %v1929
        %v1950 = vadd.f32 %v1690, %v1932
        %v1952 = vsel %vm421, %v1831, 0
        %v1955 = vsel %vm754, %v532, 0
        %1957 = vmatprep.subr.bf16.mxu0 0
        %1958 = vmatpush1.bf16.msra.mxu0 %v1955
        %1959 = vmatprep.subr.bf16.mxu0 0
        %1960 = vmatpush1.bf16.msra.mxu0 0
        %1961 = vmatprep.subr.bf16.mxu0 0
        %1962 = vmatpush1.bf16.msra.mxu0 0
        %1963 = vmatprep.subr.bf16.mxu0 0
        %1964 = vmatpush1.bf16.msra.mxu0 0
        %1965 = vmatprep.subr.bf16.mxu0 0
        %1966 = vmatpush1.bf16.msra.mxu0 0
        %1967 = vmatprep.subr.bf16.mxu0 0
        %1968 = vmatpush1.bf16.msra.mxu0 0
        %1969 = vmatprep.subr.bf16.mxu0 0
        %1970 = vmatpush1.bf16.msra.mxu0 0
        %1971 = vmatprep.subr.bf16.mxu0 0
        %1972 = vmatpush1.bf16.msra.mxu0 0
        %1973 = vmatprep.subr.bf16.mxu0 0
        %1974 = vmatpush1.bf16.msra.mxu0 0
        %1975 = vmatprep.subr.bf16.mxu0 0
        %1976 = vmatpush1.bf16.msra.mxu0 0
        %1977 = vmatprep.subr.bf16.mxu0 0
        %1978 = vmatpush1.bf16.msra.mxu0 0
        %1979 = vmatprep.subr.bf16.mxu0 0
        %1980 = vmatpush1.bf16.msra.mxu0 0
        %1981 = vmatprep.subr.bf16.mxu0 0
        %1982 = vmatpush1.bf16.msra.mxu0 0
        %1983 = vmatprep.subr.bf16.mxu0 0
        %1984 = vmatpush1.bf16.msra.mxu0 0
        %1985 = vmatprep.subr.bf16.mxu0 0
        %1986 = vmatpush1.bf16.msra.mxu0 0
        %1987 = vmatprep.subr.bf16.mxu0 0
        %1988 = vmatpush1.bf16.msra.mxu0 0
        %1989 = vmatprep.mubr.bf16.mxu0 0
        %1990 = vmatmul.mubr.bf16.gmra.mrb[0].mxu0 %v975
        %v1991 = vpop.f32.mrb[0].mxu0
        %v1992 = vadd.f32 0.0, %v1991
        %v1993 = vpop.f32.mrb[0].mxu0
        %v1994 = vpop.f32.mrb[0].mxu0
        %v1995 = vadd.f32 0.0, %v1994
        %v1996 = vpop.f32.mrb[0].mxu0
        %1997 = vmatprep.mubr.bf16.mxu0 0
        %1998 = vmatmul.mubr.bf16.gmra.mrb[0].mxu0 %v978
        %v1999 = vpop.f32.mrb[0].mxu0
        %v2000 = vadd.f32 0.0, %v1999
        %v2001 = vpop.f32.mrb[0].mxu0
        %v2002 = vpop.f32.mrb[0].mxu0
        %v2003 = vadd.f32 0.0, %v2002
        %v2004 = vpop.f32.mrb[0].mxu0
        %2005 = vmatprep.mubr.bf16.mxu0 0
        %2006 = vmatmul.mubr.bf16.gmra.mrb[0].mxu0 %v981
        %v2007 = vpop.f32.mrb[0].mxu0
        %v2008 = vadd.f32 0.0, %v2007
        %v2009 = vpop.f32.mrb[0].mxu0
        %v2010 = vpop.f32.mrb[0].mxu0
        %v2011 = vadd.f32 0.0, %v2010
        %v2012 = vpop.f32.mrb[0].mxu0
        %2013 = vmatprep.mubr.bf16.mxu0 0
        %2014 = vmatmul.mubr.bf16.gmra.mrb[0].mxu0 %v984
        %v2015 = vpop.f32.mrb[0].mxu0
        %v2016 = vadd.f32 0.0, %v2015
        %v2017 = vpop.f32.mrb[0].mxu0
        %v2018 = vpop.f32.mrb[0].mxu0
        %v2019 = vadd.f32 0.0, %v2018
        %v2020 = vpop.f32.mrb[0].mxu0
        %2021 = vmatprep.mubr.bf16.mxu0 0
        %2022 = vmatmul.mubr.bf16.gmra.mrb[0].mxu0 %v987
        %v2023 = vpop.f32.mrb[0].mxu0
        %v2024 = vadd.f32 0.0, %v2023
        %v2025 = vpop.f32.mrb[0].mxu0
        %v2026 = vpop.f32.mrb[0].mxu0
        %v2027 = vadd.f32 0.0, %v2026
        %v2028 = vpop.f32.mrb[0].mxu0
        %2029 = vmatprep.mubr.bf16.mxu0 0
        %2030 = vmatmul.mubr.bf16.gmra.mrb[0].mxu0 %v990
        %v2031 = vpop.f32.mrb[0].mxu0
        %v2032 = vadd.f32 0.0, %v2031
        %v2033 = vpop.f32.mrb[0].mxu0
        %v2034 = vpop.f32.mrb[0].mxu0
        %v2035 = vadd.f32 0.0, %v2034
        %v2036 = vpop.f32.mrb[0].mxu0
        %2037 = vmatprep.mubr.bf16.mxu0 0
        %2038 = vmatmul.mubr.bf16.gmra.mrb[0].mxu0 %v993
        %v2039 = vpop.f32.mrb[0].mxu0
        %v2040 = vadd.f32 0.0, %v2039
        %v2041 = vpop.f32.mrb[0].mxu0
        %v2042 = vpop.f32.mrb[0].mxu0
        %v2043 = vadd.f32 0.0, %v2042
        %v2044 = vpop.f32.mrb[0].mxu0
        %2045 = vmatprep.mubr.bf16.mxu0 0
        %2046 = vmatmul.mubr.bf16.gmra.mrb[0].mxu0 %v1952
        %v2047 = vpop.f32.mrb[0].mxu0
        %v2048 = vadd.f32 0.0, %v2047
        %v2049 = vpop.f32.mrb[0].mxu0
        %v2050 = vpop.f32.mrb[0].mxu0
        %v2051 = vadd.f32 0.0, %v2050
        %v2052 = vpop.f32.mrb[0].mxu0
        %2053 = vdwg.mxu0
        %v2054 = vadd.f32 %v1794, %v1992
        %v2055 = vadd.f32 %v1795, %v1995
        %v2056 = vadd.f32 %v1796, %v2000
        %v2057 = vadd.f32 %v1797, %v2003
        %v2058 = vadd.f32 %v1798, %v2008
        %v2059 = vadd.f32 %v1799, %v2011
        %v2060 = vadd.f32 %v1800, %v2016
        %v2061 = vadd.f32 %v1801, %v2019
        %v2062 = vadd.f32 %v1802, %v2024
        %v2063 = vadd.f32 %v1803, %v2027
        %v2064 = vadd.f32 %v1804, %v2032
        %v2065 = vadd.f32 %v1805, %v2035
        %v2066 = vadd.f32 %v1806, %v2040
        %v2067 = vadd.f32 %v1807, %v2043
        %v2068 = vadd.f32 %v1808, %v2048
        %v2069 = vadd.f32 %v1809, %v2051
        %v2072 = vrot.slane %v495, 1
        %v2073 = vrot.slane %v496, 1
        %v2074 = vsel %vm1227, %v2072, %v2073
        %v2077 = vrot.slane %v515, 1
        %v2078 = vrot.slane %v516, 1
        %v2079 = vsel %vm1227, %v2077, %v2078
        %v2081 = vsel %vm421, %v2074, 0
        %v2084 = vsel %vm754, %v524, 0
        %2086 = vmatprep.subr.bf16.mxu0 0
        %2087 = vmatpush1.bf16.msra.mxu0 %v2084
        %2088 = vmatprep.subr.bf16.mxu0 0
        %2089 = vmatpush1.bf16.msra.mxu0 0
        %2090 = vmatprep.subr.bf16.mxu0 0
        %2091 = vmatpush1.bf16.msra.mxu0 0
        %2092 = vmatprep.subr.bf16.mxu0 0
        %2093 = vmatpush1.bf16.msra.mxu0 0
        %2094 = vmatprep.subr.bf16.mxu0 0
        %2095 = vmatpush1.bf16.msra.mxu0 0
        %2096 = vmatprep.subr.bf16.mxu0 0
        %2097 = vmatpush1.bf16.msra.mxu0 0
        %2098 = vmatprep.subr.bf16.mxu0 0
        %2099 = vmatpush1.bf16.msra.mxu0 0
        %2100 = vmatprep.subr.bf16.mxu0 0
        %2101 = vmatpush1.bf16.msra.mxu0 0
        %2102 = vmatprep.subr.bf16.mxu0 0
        %2103 = vmatpush1.bf16.msra.mxu0 0
        %2104 = vmatprep.subr.bf16.mxu0 0
        %2105 = vmatpush1.bf16.msra.mxu0 0
        %2106 = vmatprep.subr.bf16.mxu0 0
        %2107 = vmatpush1.bf16.msra.mxu0 0
        %2108 = vmatprep.subr.bf16.mxu0 0
        %2109 = vmatpush1.bf16.msra.mxu0 0
        %2110 = vmatprep.subr.bf16.mxu0 0
        %2111 = vmatpush1.bf16.msra.mxu0 0
        %2112 = vmatprep.subr.bf16.mxu0 0
        %2113 = vmatpush1.bf16.msra.mxu0 0
        %2114 = vmatprep.subr.bf16.mxu0 0
        %2115 = vmatpush1.bf16.msra.mxu0 0
        %2116 = vmatprep.subr.bf16.mxu0 0
        %2117 = vmatpush1.bf16.msra.mxu0 0
        %2118 = vmatprep.mubr.bf16.mxu0 0
        %2119 = vmatmul.mubr.bf16.gmra.mrb[0].mxu0 %v1296
        %v2120 = vpop.f32.mrb[0].mxu0
        %v2121 = vadd.f32 0.0, %v2120
        %v2122 = vpop.f32.mrb[0].mxu0
        %v2123 = vpop.f32.mrb[0].mxu0
        %v2124 = vadd.f32 0.0, %v2123
        %v2125 = vpop.f32.mrb[0].mxu0
        %2126 = vmatprep.mubr.bf16.mxu0 0
        %2127 = vmatmul.mubr.bf16.gmra.mrb[0].mxu0 %v1299
        %v2128 = vpop.f32.mrb[0].mxu0
        %v2129 = vadd.f32 0.0, %v2128
        %v2130 = vpop.f32.mrb[0].mxu0
        %v2131 = vpop.f32.mrb[0].mxu0
        %v2132 = vadd.f32 0.0, %v2131
        %v2133 = vpop.f32.mrb[0].mxu0
        %2134 = vmatprep.mubr.bf16.mxu0 0
        %2135 = vmatmul.mubr.bf16.gmra.mrb[0].mxu0 %v1302
        %v2136 = vpop.f32.mrb[0].mxu0
        %v2137 = vadd.f32 0.0, %v2136
        %v2138 = vpop.f32.mrb[0].mxu0
        %v2139 = vpop.f32.mrb[0].mxu0
        %v2140 = vadd.f32 0.0, %v2139
        %v2141 = vpop.f32.mrb[0].mxu0
        %2142 = vmatprep.mubr.bf16.mxu0 0
        %2143 = vmatmul.mubr.bf16.gmra.mrb[0].mxu0 %v1305
        %v2144 = vpop.f32.mrb[0].mxu0
        %v2145 = vadd.f32 0.0, %v2144
        %v2146 = vpop.f32.mrb[0].mxu0
        %v2147 = vpop.f32.mrb[0].mxu0
        %v2148 = vadd.f32 0.0, %v2147
        %v2149 = vpop.f32.mrb[0].mxu0
        %2150 = vmatprep.mubr.bf16.mxu0 0
        %2151 = vmatmul.mubr.bf16.gmra.mrb[0].mxu0 %v1308
        %v2152 = vpop.f32.mrb[0].mxu0
        %v2153 = vadd.f32 0.0, %v2152
        %v2154 = vpop.f32.mrb[0].mxu0
        %v2155 = vpop.f32.mrb[0].mxu0
        %v2156 = vadd.f32 0.0, %v2155
        %v2157 = vpop.f32.mrb[0].mxu0
        %2158 = vmatprep.mubr.bf16.mxu0 0
        %2159 = vmatmul.mubr.bf16.gmra.mrb[0].mxu0 %v1311
        %v2160 = vpop.f32.mrb[0].mxu0
        %v2161 = vadd.f32 0.0, %v2160
        %v2162 = vpop.f32.mrb[0].mxu0
        %v2163 = vpop.f32.mrb[0].mxu0
        %v2164 = vadd.f32 0.0, %v2163
        %v2165 = vpop.f32.mrb[0].mxu0
        %2166 = vmatprep.mubr.bf16.mxu0 0
        %2167 = vmatmul.mubr.bf16.gmra.mrb[0].mxu0 %v1314
        %v2168 = vpop.f32.mrb[0].mxu0
        %v2169 = vadd.f32 0.0, %v2168
        %v2170 = vpop.f32.mrb[0].mxu0
        %v2171 = vpop.f32.mrb[0].mxu0
        %v2172 = vadd.f32 0.0, %v2171
        %v2173 = vpop.f32.mrb[0].mxu0
        %2174 = vmatprep.mubr.bf16.mxu0 0
        %2175 = vmatmul.mubr.bf16.gmra.mrb[0].mxu0 %v2081
        %v2176 = vpop.f32.mrb[0].mxu0
        %v2177 = vadd.f32 0.0, %v2176
        %v2178 = vpop.f32.mrb[0].mxu0
        %v2179 = vpop.f32.mrb[0].mxu0
        %v2180 = vadd.f32 0.0, %v2179
        %v2181 = vpop.f32.mrb[0].mxu0
        %2182 = vdwg.mxu0
        %v2183 = vadd.f32 %v1935, %v2121
        %v2184 = vadd.f32 %v1936, %v2124
        %v2185 = vadd.f32 %v1937, %v2129
        %v2186 = vadd.f32 %v1938, %v2132
        %v2187 = vadd.f32 %v1939, %v2137
        %v2188 = vadd.f32 %v1940, %v2140
        %v2189 = vadd.f32 %v1941, %v2145
        %v2190 = vadd.f32 %v1942, %v2148
        %v2191 = vadd.f32 %v1943, %v2153
        %v2192 = vadd.f32 %v1944, %v2156
        %v2193 = vadd.f32 %v1945, %v2161
        %v2194 = vadd.f32 %v1946, %v2164
        %v2195 = vadd.f32 %v1947, %v2169
        %v2196 = vadd.f32 %v1948, %v2172
        %v2197 = vadd.f32 %v1949, %v2177
        %v2198 = vadd.f32 %v1950, %v2180
        %v2200 = vsel %vm421, %v2079, 0
        %v2203 = vsel %vm754, %v533, 0
        %2205 = vmatprep.subr.bf16.mxu0 0
        %2206 = vmatpush1.bf16.msra.mxu0 %v2203
        %2207 = vmatprep.subr.bf16.mxu0 0
        %2208 = vmatpush1.bf16.msra.mxu0 0
        %2209 = vmatprep.subr.bf16.mxu0 0
        %2210 = vmatpush1.bf16.msra.mxu0 0
        %2211 = vmatprep.subr.bf16.mxu0 0
        %2212 = vmatpush1.bf16.msra.mxu0 0
        %2213 = vmatprep.subr.bf16.mxu0 0
        %2214 = vmatpush1.bf16.msra.mxu0 0
        %2215 = vmatprep.subr.bf16.mxu0 0
        %2216 = vmatpush1.bf16.msra.mxu0 0
        %2217 = vmatprep.subr.bf16.mxu0 0
        %2218 = vmatpush1.bf16.msra.mxu0 0
        %2219 = vmatprep.subr.bf16.mxu0 0
        %2220 = vmatpush1.bf16.msra.mxu0 0
        %2221 = vmatprep.subr.bf16.mxu0 0
        %2222 = vmatpush1.bf16.msra.mxu0 0
        %2223 = vmatprep.subr.bf16.mxu0 0
        %2224 = vmatpush1.bf16.msra.mxu0 0
        %2225 = vmatprep.subr.bf16.mxu0 0
        %2226 = vmatpush1.bf16.msra.mxu0 0
        %2227 = vmatprep.subr.bf16.mxu0 0
        %2228 = vmatpush1.bf16.msra.mxu0 0
        %2229 = vmatprep.subr.bf16.mxu0 0
        %2230 = vmatpush1.bf16.msra.mxu0 0
        %2231 = vmatprep.subr.bf16.mxu0 0
        %2232 = vmatpush1.bf16.msra.mxu0 0
        %2233 = vmatprep.subr.bf16.mxu0 0
        %2234 = vmatpush1.bf16.msra.mxu0 0
        %2235 = vmatprep.subr.bf16.mxu0 0
        %2236 = vmatpush1.bf16.msra.mxu0 0
        %2237 = vmatprep.mubr.bf16.mxu0 0
        %2238 = vmatmul.mubr.bf16.gmra.mrb[0].mxu0 %v1436
        %v2239 = vpop.f32.mrb[0].mxu0
        %v2240 = vadd.f32 0.0, %v2239
        %v2241 = vpop.f32.mrb[0].mxu0
        %v2242 = vpop.f32.mrb[0].mxu0
        %v2243 = vadd.f32 0.0, %v2242
        %v2244 = vpop.f32.mrb[0].mxu0
        %2245 = vmatprep.mubr.bf16.mxu0 0
        %2246 = vmatmul.mubr.bf16.gmra.mrb[0].mxu0 %v1439
        %v2247 = vpop.f32.mrb[0].mxu0
        %v2248 = vadd.f32 0.0, %v2247
        %v2249 = vpop.f32.mrb[0].mxu0
        %v2250 = vpop.f32.mrb[0].mxu0
        %v2251 = vadd.f32 0.0, %v2250
        %v2252 = vpop.f32.mrb[0].mxu0
        %2253 = vmatprep.mubr.bf16.mxu0 0
        %2254 = vmatmul.mubr.bf16.gmra.mrb[0].mxu0 %v1442
        %v2255 = vpop.f32.mrb[0].mxu0
        %v2256 = vadd.f32 0.0, %v2255
        %v2257 = vpop.f32.mrb[0].mxu0
        %v2258 = vpop.f32.mrb[0].mxu0
        %v2259 = vadd.f32 0.0, %v2258
        %v2260 = vpop.f32.mrb[0].mxu0
        %2261 = vmatprep.mubr.bf16.mxu0 0
        %2262 = vmatmul.mubr.bf16.gmra.mrb[0].mxu0 %v1445
        %v2263 = vpop.f32.mrb[0].mxu0
        %v2264 = vadd.f32 0.0, %v2263
        %v2265 = vpop.f32.mrb[0].mxu0
        %v2266 = vpop.f32.mrb[0].mxu0
        %v2267 = vadd.f32 0.0, %v2266
        %v2268 = vpop.f32.mrb[0].mxu0
        %2269 = vmatprep.mubr.bf16.mxu0 0
        %2270 = vmatmul.mubr.bf16.gmra.mrb[0].mxu0 %v1448
        %v2271 = vpop.f32.mrb[0].mxu0
        %v2272 = vadd.f32 0.0, %v2271
        %v2273 = vpop.f32.mrb[0].mxu0
        %v2274 = vpop.f32.mrb[0].mxu0
        %v2275 = vadd.f32 0.0, %v2274
        %v2276 = vpop.f32.mrb[0].mxu0
        %2277 = vmatprep.mubr.bf16.mxu0 0
        %2278 = vmatmul.mubr.bf16.gmra.mrb[0].mxu0 %v1451
        %v2279 = vpop.f32.mrb[0].mxu0
        %v2280 = vadd.f32 0.0, %v2279
        %v2281 = vpop.f32.mrb[0].mxu0
        %v2282 = vpop.f32.mrb[0].mxu0
        %v2283 = vadd.f32 0.0, %v2282
        %v2284 = vpop.f32.mrb[0].mxu0
        %2285 = vmatprep.mubr.bf16.mxu0 0
        %2286 = vmatmul.mubr.bf16.gmra.mrb[0].mxu0 %v1454
        %v2287 = vpop.f32.mrb[0].mxu0
        %v2288 = vadd.f32 0.0, %v2287
        %v2289 = vpop.f32.mrb[0].mxu0
        %v2290 = vpop.f32.mrb[0].mxu0
        %v2291 = vadd.f32 0.0, %v2290
        %v2292 = vpop.f32.mrb[0].mxu0
        %2293 = vmatprep.mubr.bf16.mxu0 0
        %2294 = vmatmul.mubr.bf16.gmra.mrb[0].mxu0 %v2200
        %v2295 = vpop.f32.mrb[0].mxu0
        %v2296 = vadd.f32 0.0, %v2295
        %v2297 = vpop.f32.mrb[0].mxu0
        %v2298 = vpop.f32.mrb[0].mxu0
        %v2299 = vadd.f32 0.0, %v2298
        %v2300 = vpop.f32.mrb[0].mxu0
        %2301 = vdwg.mxu0
        %v2302 = vadd.f32 %v2054, %v2240
        %v2303 = vadd.f32 %v2055, %v2243
        %v2304 = vadd.f32 %v2056, %v2248
        %v2305 = vadd.f32 %v2057, %v2251
        %v2306 = vadd.f32 %v2058, %v2256
        %v2307 = vadd.f32 %v2059, %v2259
        %v2308 = vadd.f32 %v2060, %v2264
        %v2309 = vadd.f32 %v2061, %v2267
        %v2310 = vadd.f32 %v2062, %v2272
        %v2311 = vadd.f32 %v2063, %v2275
        %v2312 = vadd.f32 %v2064, %v2280
        %v2313 = vadd.f32 %v2065, %v2283
        %v2314 = vadd.f32 %v2066, %v2288
        %v2315 = vadd.f32 %v2067, %v2291
        %v2316 = vadd.f32 %v2068, %v2296
        %v2317 = vadd.f32 %v2069, %v2299
        %v2319 = vsel %vm421, %v497, 0
        %v2322 = vsel %vm754, %v525, 0
        %2324 = vmatprep.subr.bf16.mxu0 0
        %2325 = vmatpush1.bf16.msra.mxu0 %v2322
        %2326 = vmatprep.subr.bf16.mxu0 0
        %2327 = vmatpush1.bf16.msra.mxu0 0
        %2328 = vmatprep.subr.bf16.mxu0 0
        %2329 = vmatpush1.bf16.msra.mxu0 0
        %2330 = vmatprep.subr.bf16.mxu0 0
        %2331 = vmatpush1.bf16.msra.mxu0 0
        %2332 = vmatprep.subr.bf16.mxu0 0
        %2333 = vmatpush1.bf16.msra.mxu0 0
        %2334 = vmatprep.subr.bf16.mxu0 0
        %2335 = vmatpush1.bf16.msra.mxu0 0
        %2336 = vmatprep.subr.bf16.mxu0 0
        %2337 = vmatpush1.bf16.msra.mxu0 0
        %2338 = vmatprep.subr.bf16.mxu0 0
        %2339 = vmatpush1.bf16.msra.mxu0 0
        %2340 = vmatprep.subr.bf16.mxu0 0
        %2341 = vmatpush1.bf16.msra.mxu0 0
        %2342 = vmatprep.subr.bf16.mxu0 0
        %2343 = vmatpush1.bf16.msra.mxu0 0
        %2344 = vmatprep.subr.bf16.mxu0 0
        %2345 = vmatpush1.bf16.msra.mxu0 0
        %2346 = vmatprep.subr.bf16.mxu0 0
        %2347 = vmatpush1.bf16.msra.mxu0 0
        %2348 = vmatprep.subr.bf16.mxu0 0
        %2349 = vmatpush1.bf16.msra.mxu0 0
        %2350 = vmatprep.subr.bf16.mxu0 0
        %2351 = vmatpush1.bf16.msra.mxu0 0
        %2352 = vmatprep.subr.bf16.mxu0 0
        %2353 = vmatpush1.bf16.msra.mxu0 0
        %2354 = vmatprep.subr.bf16.mxu0 0
        %2355 = vmatpush1.bf16.msra.mxu0 0
        %2356 = vmatprep.mubr.bf16.mxu0 0
        %2357 = vmatmul.mubr.bf16.gmra.mrb[0].mxu0 %v859
        %v2358 = vpop.f32.mrb[0].mxu0
        %v2359 = vadd.f32 0.0, %v2358
        %v2360 = vpop.f32.mrb[0].mxu0
        %v2361 = vpop.f32.mrb[0].mxu0
        %v2362 = vadd.f32 0.0, %v2361
        %v2363 = vpop.f32.mrb[0].mxu0
        %2364 = vmatprep.mubr.bf16.mxu0 0
        %2365 = vmatmul.mubr.bf16.gmra.mrb[0].mxu0 %v861
        %v2366 = vpop.f32.mrb[0].mxu0
        %v2367 = vadd.f32 0.0, %v2366
        %v2368 = vpop.f32.mrb[0].mxu0
        %v2369 = vpop.f32.mrb[0].mxu0
        %v2370 = vadd.f32 0.0, %v2369
        %v2371 = vpop.f32.mrb[0].mxu0
        %2372 = vmatprep.mubr.bf16.mxu0 0
        %2373 = vmatmul.mubr.bf16.gmra.mrb[0].mxu0 %v863
        %v2374 = vpop.f32.mrb[0].mxu0
        %v2375 = vadd.f32 0.0, %v2374
        %v2376 = vpop.f32.mrb[0].mxu0
        %v2377 = vpop.f32.mrb[0].mxu0
        %v2378 = vadd.f32 0.0, %v2377
        %v2379 = vpop.f32.mrb[0].mxu0
        %2380 = vmatprep.mubr.bf16.mxu0 0
        %2381 = vmatmul.mubr.bf16.gmra.mrb[0].mxu0 %v865
        %v2382 = vpop.f32.mrb[0].mxu0
        %v2383 = vadd.f32 0.0, %v2382
        %v2384 = vpop.f32.mrb[0].mxu0
        %v2385 = vpop.f32.mrb[0].mxu0
        %v2386 = vadd.f32 0.0, %v2385
        %v2387 = vpop.f32.mrb[0].mxu0
        %2388 = vmatprep.mubr.bf16.mxu0 0
        %2389 = vmatmul.mubr.bf16.gmra.mrb[0].mxu0 %v867
        %v2390 = vpop.f32.mrb[0].mxu0
        %v2391 = vadd.f32 0.0, %v2390
        %v2392 = vpop.f32.mrb[0].mxu0
        %v2393 = vpop.f32.mrb[0].mxu0
        %v2394 = vadd.f32 0.0, %v2393
        %v2395 = vpop.f32.mrb[0].mxu0
        %2396 = vmatprep.mubr.bf16.mxu0 0
        %2397 = vmatmul.mubr.bf16.gmra.mrb[0].mxu0 %v869
        %v2398 = vpop.f32.mrb[0].mxu0
        %v2399 = vadd.f32 0.0, %v2398
        %v2400 = vpop.f32.mrb[0].mxu0
        %v2401 = vpop.f32.mrb[0].mxu0
        %v2402 = vadd.f32 0.0, %v2401
        %v2403 = vpop.f32.mrb[0].mxu0
        %2404 = vmatprep.mubr.bf16.mxu0 0
        %2405 = vmatmul.mubr.bf16.gmra.mrb[0].mxu0 %v1573
        %v2406 = vpop.f32.mrb[0].mxu0
        %v2407 = vadd.f32 0.0, %v2406
        %v2408 = vpop.f32.mrb[0].mxu0
        %v2409 = vpop.f32.mrb[0].mxu0
        %v2410 = vadd.f32 0.0, %v2409
        %v2411 = vpop.f32.mrb[0].mxu0
        %2412 = vmatprep.mubr.bf16.mxu0 0
        %2413 = vmatmul.mubr.bf16.gmra.mrb[0].mxu0 %v2319
        %v2414 = vpop.f32.mrb[0].mxu0
        %v2415 = vadd.f32 0.0, %v2414
        %v2416 = vpop.f32.mrb[0].mxu0
        %v2417 = vpop.f32.mrb[0].mxu0
        %v2418 = vadd.f32 0.0, %v2417
        %v2419 = vpop.f32.mrb[0].mxu0
        %2420 = vdwg.mxu0
        %v2421 = vadd.f32 %v2183, %v2359
        %v2422 = vadd.f32 %v2184, %v2362
        %v2423 = vadd.f32 %v2185, %v2367
        %v2424 = vadd.f32 %v2186, %v2370
        %v2425 = vadd.f32 %v2187, %v2375
        %v2426 = vadd.f32 %v2188, %v2378
        %v2427 = vadd.f32 %v2189, %v2383
        %v2428 = vadd.f32 %v2190, %v2386
        %v2429 = vadd.f32 %v2191, %v2391
        %v2430 = vadd.f32 %v2192, %v2394
        %v2431 = vadd.f32 %v2193, %v2399
        %v2432 = vadd.f32 %v2194, %v2402
        %v2433 = vadd.f32 %v2195, %v2407
        %v2434 = vadd.f32 %v2196, %v2410
        %v2435 = vadd.f32 %v2197, %v2415
        %v2436 = vadd.f32 %v2198, %v2418
        %v2438 = vsel %vm421, %v517, 0
        %v2441 = vsel %vm754, %v534, 0
        %2443 = vmatprep.subr.bf16.mxu0 0
        %2444 = vmatpush1.bf16.msra.mxu0 %v2441
        %2445 = vmatprep.subr.bf16.mxu0 0
        %2446 = vmatpush1.bf16.msra.mxu0 0
        %2447 = vmatprep.subr.bf16.mxu0 0
        %2448 = vmatpush1.bf16.msra.mxu0 0
        %2449 = vmatprep.subr.bf16.mxu0 0
        %2450 = vmatpush1.bf16.msra.mxu0 0
        %2451 = vmatprep.subr.bf16.mxu0 0
        %2452 = vmatpush1.bf16.msra.mxu0 0
        %2453 = vmatprep.subr.bf16.mxu0 0
        %2454 = vmatpush1.bf16.msra.mxu0 0
        %2455 = vmatprep.subr.bf16.mxu0 0
        %2456 = vmatpush1.bf16.msra.mxu0 0
        %2457 = vmatprep.subr.bf16.mxu0 0
        %2458 = vmatpush1.bf16.msra.mxu0 0
        %2459 = vmatprep.subr.bf16.mxu0 0
        %2460 = vmatpush1.bf16.msra.mxu0 0
        %2461 = vmatprep.subr.bf16.mxu0 0
        %2462 = vmatpush1.bf16.msra.mxu0 0
        %2463 = vmatprep.subr.bf16.mxu0 0
        %2464 = vmatpush1.bf16.msra.mxu0 0
        %2465 = vmatprep.subr.bf16.mxu0 0
        %2466 = vmatpush1.bf16.msra.mxu0 0
        %2467 = vmatprep.subr.bf16.mxu0 0
        %2468 = vmatpush1.bf16.msra.mxu0 0
        %2469 = vmatprep.subr.bf16.mxu0 0
        %2470 = vmatpush1.bf16.msra.mxu0 0
        %2471 = vmatprep.subr.bf16.mxu0 0
        %2472 = vmatpush1.bf16.msra.mxu0 0
        %2473 = vmatprep.subr.bf16.mxu0 0
        %2474 = vmatpush1.bf16.msra.mxu0 0
        %2475 = vmatprep.mubr.bf16.mxu0 0
        %2476 = vmatmul.mubr.bf16.gmra.mrb[0].mxu0 %v1099
        %v2477 = vpop.f32.mrb[0].mxu0
        %v2478 = vadd.f32 0.0, %v2477
        %v2479 = vpop.f32.mrb[0].mxu0
        %v2480 = vpop.f32.mrb[0].mxu0
        %v2481 = vadd.f32 0.0, %v2480
        %v2482 = vpop.f32.mrb[0].mxu0
        %2483 = vmatprep.mubr.bf16.mxu0 0
        %2484 = vmatmul.mubr.bf16.gmra.mrb[0].mxu0 %v1101
        %v2485 = vpop.f32.mrb[0].mxu0
        %v2486 = vadd.f32 0.0, %v2485
        %v2487 = vpop.f32.mrb[0].mxu0
        %v2488 = vpop.f32.mrb[0].mxu0
        %v2489 = vadd.f32 0.0, %v2488
        %v2490 = vpop.f32.mrb[0].mxu0
        %2491 = vmatprep.mubr.bf16.mxu0 0
        %2492 = vmatmul.mubr.bf16.gmra.mrb[0].mxu0 %v1103
        %v2493 = vpop.f32.mrb[0].mxu0
        %v2494 = vadd.f32 0.0, %v2493
        %v2495 = vpop.f32.mrb[0].mxu0
        %v2496 = vpop.f32.mrb[0].mxu0
        %v2497 = vadd.f32 0.0, %v2496
        %v2498 = vpop.f32.mrb[0].mxu0
        %2499 = vmatprep.mubr.bf16.mxu0 0
        %2500 = vmatmul.mubr.bf16.gmra.mrb[0].mxu0 %v1105
        %v2501 = vpop.f32.mrb[0].mxu0
        %v2502 = vadd.f32 0.0, %v2501
        %v2503 = vpop.f32.mrb[0].mxu0
        %v2504 = vpop.f32.mrb[0].mxu0
        %v2505 = vadd.f32 0.0, %v2504
        %v2506 = vpop.f32.mrb[0].mxu0
        %2507 = vmatprep.mubr.bf16.mxu0 0
        %2508 = vmatmul.mubr.bf16.gmra.mrb[0].mxu0 %v1107
        %v2509 = vpop.f32.mrb[0].mxu0
        %v2510 = vadd.f32 0.0, %v2509
        %v2511 = vpop.f32.mrb[0].mxu0
        %v2512 = vpop.f32.mrb[0].mxu0
        %v2513 = vadd.f32 0.0, %v2512
        %v2514 = vpop.f32.mrb[0].mxu0
        %2515 = vmatprep.mubr.bf16.mxu0 0
        %2516 = vmatmul.mubr.bf16.gmra.mrb[0].mxu0 %v1109
        %v2517 = vpop.f32.mrb[0].mxu0
        %v2518 = vadd.f32 0.0, %v2517
        %v2519 = vpop.f32.mrb[0].mxu0
        %v2520 = vpop.f32.mrb[0].mxu0
        %v2521 = vadd.f32 0.0, %v2520
        %v2522 = vpop.f32.mrb[0].mxu0
        %2523 = vmatprep.mubr.bf16.mxu0 0
        %2524 = vmatmul.mubr.bf16.gmra.mrb[0].mxu0 %v1692
        %v2525 = vpop.f32.mrb[0].mxu0
        %v2526 = vadd.f32 0.0, %v2525
        %v2527 = vpop.f32.mrb[0].mxu0
        %v2528 = vpop.f32.mrb[0].mxu0
        %v2529 = vadd.f32 0.0, %v2528
        %v2530 = vpop.f32.mrb[0].mxu0
        %2531 = vmatprep.mubr.bf16.mxu0 0
        %2532 = vmatmul.mubr.bf16.gmra.mrb[0].mxu0 %v2438
        %v2533 = vpop.f32.mrb[0].mxu0
        %v2534 = vadd.f32 0.0, %v2533
        %v2535 = vpop.f32.mrb[0].mxu0
        %v2536 = vpop.f32.mrb[0].mxu0
        %v2537 = vadd.f32 0.0, %v2536
        %v2538 = vpop.f32.mrb[0].mxu0
        %2539 = vdwg.mxu0
        %v2540 = vadd.f32 %v2302, %v2478
        %v2541 = vadd.f32 %v2303, %v2481
        %v2542 = vadd.f32 %v2304, %v2486
        %v2543 = vadd.f32 %v2305, %v2489
        %v2544 = vadd.f32 %v2306, %v2494
        %v2545 = vadd.f32 %v2307, %v2497
        %v2546 = vadd.f32 %v2308, %v2502
        %v2547 = vadd.f32 %v2309, %v2505
        %v2548 = vadd.f32 %v2310, %v2510
        %v2549 = vadd.f32 %v2311, %v2513
        %v2550 = vadd.f32 %v2312, %v2518
        %v2551 = vadd.f32 %v2313, %v2521
        %v2552 = vadd.f32 %v2314, %v2526
        %v2553 = vadd.f32 %v2315, %v2529
        %v2554 = vadd.f32 %v2316, %v2534
        %v2555 = vadd.f32 %v2317, %v2537
        %v2556 = vshrl.u32 %v497, 16
        %v2558 = vshll.u32 %v497, 16
        %v2560 = vrot.slane %v2558, 1
        %v2561 = vor.u32 %v2556, %v2560
        %v2563 = vshll.u32 %v498, 16
        %v2565 = vrot.slane %v2563, 1
        %v2566 = vsel %vm537, %v2561, %v2565
        %v2567 = vshrl.u32 %v517, 16
        %v2569 = vshll.u32 %v517, 16
        %v2571 = vrot.slane %v2569, 1
        %v2572 = vor.u32 %v2567, %v2571
        %v2574 = vshll.u32 %v518, 16
        %v2576 = vrot.slane %v2574, 1
        %v2577 = vsel %vm537, %v2572, %v2576
        %v2579 = vsel %vm421, %v2566, 0
        %v2582 = vsel %vm754, %v526, 0
        %2584 = vmatprep.subr.bf16.mxu0 0
        %2585 = vmatpush1.bf16.msra.mxu0 %v2582
        %2586 = vmatprep.subr.bf16.mxu0 0
        %2587 = vmatpush1.bf16.msra.mxu0 0
        %2588 = vmatprep.subr.bf16.mxu0 0
        %2589 = vmatpush1.bf16.msra.mxu0 0
        %2590 = vmatprep.subr.bf16.mxu0 0
        %2591 = vmatpush1.bf16.msra.mxu0 0
        %2592 = vmatprep.subr.bf16.mxu0 0
        %2593 = vmatpush1.bf16.msra.mxu0 0
        %2594 = vmatprep.subr.bf16.mxu0 0
        %2595 = vmatpush1.bf16.msra.mxu0 0
        %2596 = vmatprep.subr.bf16.mxu0 0
        %2597 = vmatpush1.bf16.msra.mxu0 0
        %2598 = vmatprep.subr.bf16.mxu0 0
        %2599 = vmatpush1.bf16.msra.mxu0 0
        %2600 = vmatprep.subr.bf16.mxu0 0
        %2601 = vmatpush1.bf16.msra.mxu0 0
        %2602 = vmatprep.subr.bf16.mxu0 0
        %2603 = vmatpush1.bf16.msra.mxu0 0
        %2604 = vmatprep.subr.bf16.mxu0 0
        %2605 = vmatpush1.bf16.msra.mxu0 0
        %2606 = vmatprep.subr.bf16.mxu0 0
        %2607 = vmatpush1.bf16.msra.mxu0 0
        %2608 = vmatprep.subr.bf16.mxu0 0
        %2609 = vmatpush1.bf16.msra.mxu0 0
        %2610 = vmatprep.subr.bf16.mxu0 0
        %2611 = vmatpush1.bf16.msra.mxu0 0
        %2612 = vmatprep.subr.bf16.mxu0 0
        %2613 = vmatpush1.bf16.msra.mxu0 0
        %2614 = vmatprep.subr.bf16.mxu0 0
        %2615 = vmatpush1.bf16.msra.mxu0 0
        %2616 = vmatprep.mubr.bf16.mxu0 0
        %2617 = vmatmul.mubr.bf16.gmra.mrb[0].mxu0 %v737
        %v2618 = vpop.f32.mrb[0].mxu0
        %v2619 = vadd.f32 0.0, %v2618
        %v2620 = vpop.f32.mrb[0].mxu0
        %v2621 = vpop.f32.mrb[0].mxu0
        %v2622 = vadd.f32 0.0, %v2621
        %v2623 = vpop.f32.mrb[0].mxu0
        %2624 = vmatprep.mubr.bf16.mxu0 0
        %2625 = vmatmul.mubr.bf16.gmra.mrb[0].mxu0 %v740
        %v2626 = vpop.f32.mrb[0].mxu0
        %v2627 = vadd.f32 0.0, %v2626
        %v2628 = vpop.f32.mrb[0].mxu0
        %v2629 = vpop.f32.mrb[0].mxu0
        %v2630 = vadd.f32 0.0, %v2629
        %v2631 = vpop.f32.mrb[0].mxu0
        %2632 = vmatprep.mubr.bf16.mxu0 0
        %2633 = vmatmul.mubr.bf16.gmra.mrb[0].mxu0 %v743
        %v2634 = vpop.f32.mrb[0].mxu0
        %v2635 = vadd.f32 0.0, %v2634
        %v2636 = vpop.f32.mrb[0].mxu0
        %v2637 = vpop.f32.mrb[0].mxu0
        %v2638 = vadd.f32 0.0, %v2637
        %v2639 = vpop.f32.mrb[0].mxu0
        %2640 = vmatprep.mubr.bf16.mxu0 0
        %2641 = vmatmul.mubr.bf16.gmra.mrb[0].mxu0 %v746
        %v2642 = vpop.f32.mrb[0].mxu0
        %v2643 = vadd.f32 0.0, %v2642
        %v2644 = vpop.f32.mrb[0].mxu0
        %v2645 = vpop.f32.mrb[0].mxu0
        %v2646 = vadd.f32 0.0, %v2645
        %v2647 = vpop.f32.mrb[0].mxu0
        %2648 = vmatprep.mubr.bf16.mxu0 0
        %2649 = vmatmul.mubr.bf16.gmra.mrb[0].mxu0 %v749
        %v2650 = vpop.f32.mrb[0].mxu0
        %v2651 = vadd.f32 0.0, %v2650
        %v2652 = vpop.f32.mrb[0].mxu0
        %v2653 = vpop.f32.mrb[0].mxu0
        %v2654 = vadd.f32 0.0, %v2653
        %v2655 = vpop.f32.mrb[0].mxu0
        %2656 = vmatprep.mubr.bf16.mxu0 0
        %2657 = vmatmul.mubr.bf16.gmra.mrb[0].mxu0 %v752
        %v2658 = vpop.f32.mrb[0].mxu0
        %v2659 = vadd.f32 0.0, %v2658
        %v2660 = vpop.f32.mrb[0].mxu0
        %v2661 = vpop.f32.mrb[0].mxu0
        %v2662 = vadd.f32 0.0, %v2661
        %v2663 = vpop.f32.mrb[0].mxu0
        %2664 = vmatprep.mubr.bf16.mxu0 0
        %2665 = vmatmul.mubr.bf16.gmra.mrb[0].mxu0 %v1833
        %v2666 = vpop.f32.mrb[0].mxu0
        %v2667 = vadd.f32 0.0, %v2666
        %v2668 = vpop.f32.mrb[0].mxu0
        %v2669 = vpop.f32.mrb[0].mxu0
        %v2670 = vadd.f32 0.0, %v2669
        %v2671 = vpop.f32.mrb[0].mxu0
        %2672 = vmatprep.mubr.bf16.mxu0 0
        %2673 = vmatmul.mubr.bf16.gmra.mrb[0].mxu0 %v2579
        %v2674 = vpop.f32.mrb[0].mxu0
        %v2675 = vadd.f32 0.0, %v2674
        %v2676 = vpop.f32.mrb[0].mxu0
        %v2677 = vpop.f32.mrb[0].mxu0
        %v2678 = vadd.f32 0.0, %v2677
        %v2679 = vpop.f32.mrb[0].mxu0
        %2680 = vdwg.mxu0
        %v2681 = vadd.f32 %v2421, %v2619
        %v2682 = vadd.f32 %v2422, %v2622
        %v2683 = vadd.f32 %v2423, %v2627
        %v2684 = vadd.f32 %v2424, %v2630
        %v2685 = vadd.f32 %v2425, %v2635
        %v2686 = vadd.f32 %v2426, %v2638
        %v2687 = vadd.f32 %v2427, %v2643
        %v2688 = vadd.f32 %v2428, %v2646
        %v2689 = vadd.f32 %v2429, %v2651
        %v2690 = vadd.f32 %v2430, %v2654
        %v2691 = vadd.f32 %v2431, %v2659
        %v2692 = vadd.f32 %v2432, %v2662
        %v2693 = vadd.f32 %v2433, %v2667
        %v2694 = vadd.f32 %v2434, %v2670
        %v2695 = vadd.f32 %v2435, %v2675
        %v2696 = vadd.f32 %v2436, %v2678
        %v2698 = vsel %vm421, %v2577, 0
        %v2701 = vsel %vm754, %v535, 0
        %2703 = vmatprep.subr.bf16.mxu0 0
        %2704 = vmatpush1.bf16.msra.mxu0 %v2701
        %2705 = vmatprep.subr.bf16.mxu0 0
        %2706 = vmatpush1.bf16.msra.mxu0 0
        %2707 = vmatprep.subr.bf16.mxu0 0
        %2708 = vmatpush1.bf16.msra.mxu0 0
        %2709 = vmatprep.subr.bf16.mxu0 0
        %2710 = vmatpush1.bf16.msra.mxu0 0
        %2711 = vmatprep.subr.bf16.mxu0 0
        %2712 = vmatpush1.bf16.msra.mxu0 0
        %2713 = vmatprep.subr.bf16.mxu0 0
        %2714 = vmatpush1.bf16.msra.mxu0 0
        %2715 = vmatprep.subr.bf16.mxu0 0
        %2716 = vmatpush1.bf16.msra.mxu0 0
        %2717 = vmatprep.subr.bf16.mxu0 0
        %2718 = vmatpush1.bf16.msra.mxu0 0
        %2719 = vmatprep.subr.bf16.mxu0 0
        %2720 = vmatpush1.bf16.msra.mxu0 0
        %2721 = vmatprep.subr.bf16.mxu0 0
        %2722 = vmatpush1.bf16.msra.mxu0 0
        %2723 = vmatprep.subr.bf16.mxu0 0
        %2724 = vmatpush1.bf16.msra.mxu0 0
        %2725 = vmatprep.subr.bf16.mxu0 0
        %2726 = vmatpush1.bf16.msra.mxu0 0
        %2727 = vmatprep.subr.bf16.mxu0 0
        %2728 = vmatpush1.bf16.msra.mxu0 0
        %2729 = vmatprep.subr.bf16.mxu0 0
        %2730 = vmatpush1.bf16.msra.mxu0 0
        %2731 = vmatprep.subr.bf16.mxu0 0
        %2732 = vmatpush1.bf16.msra.mxu0 0
        %2733 = vmatprep.subr.bf16.mxu0 0
        %2734 = vmatpush1.bf16.msra.mxu0 0
        %2735 = vmatprep.mubr.bf16.mxu0 0
        %2736 = vmatmul.mubr.bf16.gmra.mrb[0].mxu0 %v978
        %v2737 = vpop.f32.mrb[0].mxu0
        %v2738 = vadd.f32 0.0, %v2737
        %v2739 = vpop.f32.mrb[0].mxu0
        %v2740 = vpop.f32.mrb[0].mxu0
        %v2741 = vadd.f32 0.0, %v2740
        %v2742 = vpop.f32.mrb[0].mxu0
        %2743 = vmatprep.mubr.bf16.mxu0 0
        %2744 = vmatmul.mubr.bf16.gmra.mrb[0].mxu0 %v981
        %v2745 = vpop.f32.mrb[0].mxu0
        %v2746 = vadd.f32 0.0, %v2745
        %v2747 = vpop.f32.mrb[0].mxu0
        %v2748 = vpop.f32.mrb[0].mxu0
        %v2749 = vadd.f32 0.0, %v2748
        %v2750 = vpop.f32.mrb[0].mxu0
        %2751 = vmatprep.mubr.bf16.mxu0 0
        %2752 = vmatmul.mubr.bf16.gmra.mrb[0].mxu0 %v984
        %v2753 = vpop.f32.mrb[0].mxu0
        %v2754 = vadd.f32 0.0, %v2753
        %v2755 = vpop.f32.mrb[0].mxu0
        %v2756 = vpop.f32.mrb[0].mxu0
        %v2757 = vadd.f32 0.0, %v2756
        %v2758 = vpop.f32.mrb[0].mxu0
        %2759 = vmatprep.mubr.bf16.mxu0 0
        %2760 = vmatmul.mubr.bf16.gmra.mrb[0].mxu0 %v987
        %v2761 = vpop.f32.mrb[0].mxu0
        %v2762 = vadd.f32 0.0, %v2761
        %v2763 = vpop.f32.mrb[0].mxu0
        %v2764 = vpop.f32.mrb[0].mxu0
        %v2765 = vadd.f32 0.0, %v2764
        %v2766 = vpop.f32.mrb[0].mxu0
        %2767 = vmatprep.mubr.bf16.mxu0 0
        %2768 = vmatmul.mubr.bf16.gmra.mrb[0].mxu0 %v990
        %v2769 = vpop.f32.mrb[0].mxu0
        %v2770 = vadd.f32 0.0, %v2769
        %v2771 = vpop.f32.mrb[0].mxu0
        %v2772 = vpop.f32.mrb[0].mxu0
        %v2773 = vadd.f32 0.0, %v2772
        %v2774 = vpop.f32.mrb[0].mxu0
        %2775 = vmatprep.mubr.bf16.mxu0 0
        %2776 = vmatmul.mubr.bf16.gmra.mrb[0].mxu0 %v993
        %v2777 = vpop.f32.mrb[0].mxu0
        %v2778 = vadd.f32 0.0, %v2777
        %v2779 = vpop.f32.mrb[0].mxu0
        %v2780 = vpop.f32.mrb[0].mxu0
        %v2781 = vadd.f32 0.0, %v2780
        %v2782 = vpop.f32.mrb[0].mxu0
        %2783 = vmatprep.mubr.bf16.mxu0 0
        %2784 = vmatmul.mubr.bf16.gmra.mrb[0].mxu0 %v1952
        %v2785 = vpop.f32.mrb[0].mxu0
        %v2786 = vadd.f32 0.0, %v2785
        %v2787 = vpop.f32.mrb[0].mxu0
        %v2788 = vpop.f32.mrb[0].mxu0
        %v2789 = vadd.f32 0.0, %v2788
        %v2790 = vpop.f32.mrb[0].mxu0
        %2791 = vmatprep.mubr.bf16.mxu0 0
        %2792 = vmatmul.mubr.bf16.gmra.mrb[0].mxu0 %v2698
        %v2793 = vpop.f32.mrb[0].mxu0
        %v2794 = vadd.f32 0.0, %v2793
        %v2795 = vpop.f32.mrb[0].mxu0
        %v2796 = vpop.f32.mrb[0].mxu0
        %v2797 = vadd.f32 0.0, %v2796
        %v2798 = vpop.f32.mrb[0].mxu0
        %2799 = vdwg.mxu0
        %v2800 = vadd.f32 %v2540, %v2738
        %v2801 = vadd.f32 %v2541, %v2741
        %v2802 = vadd.f32 %v2542, %v2746
        %v2803 = vadd.f32 %v2543, %v2749
        %v2804 = vadd.f32 %v2544, %v2754
        %v2805 = vadd.f32 %v2545, %v2757
        %v2806 = vadd.f32 %v2546, %v2762
        %v2807 = vadd.f32 %v2547, %v2765
        %v2808 = vadd.f32 %v2548, %v2770
        %v2809 = vadd.f32 %v2549, %v2773
        %v2810 = vadd.f32 %v2550, %v2778
        %v2811 = vadd.f32 %v2551, %v2781
        %v2812 = vadd.f32 %v2552, %v2786
        %v2813 = vadd.f32 %v2553, %v2789
        %v2814 = vadd.f32 %v2554, %v2794
        %v2815 = vadd.f32 %v2555, %v2797
        %v2818 = vrot.slane %v497, 1
        %v2819 = vrot.slane %v498, 1
        %v2820 = vsel %vm1227, %v2818, %v2819
        %v2823 = vrot.slane %v517, 1
        %v2824 = vrot.slane %v518, 1
        %v2825 = vsel %vm1227, %v2823, %v2824
        %v2827 = vsel %vm421, %v2820, 0
        %v2830 = vsel %vm754, %v527, 0
        %2832 = vmatprep.subr.bf16.mxu0 0
        %2833 = vmatpush1.bf16.msra.mxu0 %v2830
        %2834 = vmatprep.subr.bf16.mxu0 0
        %2835 = vmatpush1.bf16.msra.mxu0 0
        %2836 = vmatprep.subr.bf16.mxu0 0
        %2837 = vmatpush1.bf16.msra.mxu0 0
        %2838 = vmatprep.subr.bf16.mxu0 0
        %2839 = vmatpush1.bf16.msra.mxu0 0
        %2840 = vmatprep.subr.bf16.mxu0 0
        %2841 = vmatpush1.bf16.msra.mxu0 0
        %2842 = vmatprep.subr.bf16.mxu0 0
        %2843 = vmatpush1.bf16.msra.mxu0 0
        %2844 = vmatprep.subr.bf16.mxu0 0
        %2845 = vmatpush1.bf16.msra.mxu0 0
        %2846 = vmatprep.subr.bf16.mxu0 0
        %2847 = vmatpush1.bf16.msra.mxu0 0
        %2848 = vmatprep.subr.bf16.mxu0 0
        %2849 = vmatpush1.bf16.msra.mxu0 0
        %2850 = vmatprep.subr.bf16.mxu0 0
        %2851 = vmatpush1.bf16.msra.mxu0 0
        %2852 = vmatprep.subr.bf16.mxu0 0
        %2853 = vmatpush1.bf16.msra.mxu0 0
        %2854 = vmatprep.subr.bf16.mxu0 0
        %2855 = vmatpush1.bf16.msra.mxu0 0
        %2856 = vmatprep.subr.bf16.mxu0 0
        %2857 = vmatpush1.bf16.msra.mxu0 0
        %2858 = vmatprep.subr.bf16.mxu0 0
        %2859 = vmatpush1.bf16.msra.mxu0 0
        %2860 = vmatprep.subr.bf16.mxu0 0
        %2861 = vmatpush1.bf16.msra.mxu0 0
        %2862 = vmatprep.subr.bf16.mxu0 0
        %2863 = vmatpush1.bf16.msra.mxu0 0
        %2864 = vmatprep.mubr.bf16.mxu0 0
        %2865 = vmatmul.mubr.bf16.gmra.mrb[0].mxu0 %v1299
        %v2866 = vpop.f32.mrb[0].mxu0
        %v2867 = vadd.f32 0.0, %v2866
        %v2868 = vpop.f32.mrb[0].mxu0
        %v2869 = vpop.f32.mrb[0].mxu0
        %v2870 = vadd.f32 0.0, %v2869
        %v2871 = vpop.f32.mrb[0].mxu0
        %2872 = vmatprep.mubr.bf16.mxu0 0
        %2873 = vmatmul.mubr.bf16.gmra.mrb[0].mxu0 %v1302
        %v2874 = vpop.f32.mrb[0].mxu0
        %v2875 = vadd.f32 0.0, %v2874
        %v2876 = vpop.f32.mrb[0].mxu0
        %v2877 = vpop.f32.mrb[0].mxu0
        %v2878 = vadd.f32 0.0, %v2877
        %v2879 = vpop.f32.mrb[0].mxu0
        %2880 = vmatprep.mubr.bf16.mxu0 0
        %2881 = vmatmul.mubr.bf16.gmra.mrb[0].mxu0 %v1305
        %v2882 = vpop.f32.mrb[0].mxu0
        %v2883 = vadd.f32 0.0, %v2882
        %v2884 = vpop.f32.mrb[0].mxu0
        %v2885 = vpop.f32.mrb[0].mxu0
        %v2886 = vadd.f32 0.0, %v2885
        %v2887 = vpop.f32.mrb[0].mxu0
        %2888 = vmatprep.mubr.bf16.mxu0 0
        %2889 = vmatmul.mubr.bf16.gmra.mrb[0].mxu0 %v1308
        %v2890 = vpop.f32.mrb[0].mxu0
        %v2891 = vadd.f32 0.0, %v2890
        %v2892 = vpop.f32.mrb[0].mxu0
        %v2893 = vpop.f32.mrb[0].mxu0
        %v2894 = vadd.f32 0.0, %v2893
        %v2895 = vpop.f32.mrb[0].mxu0
        %2896 = vmatprep.mubr.bf16.mxu0 0
        %2897 = vmatmul.mubr.bf16.gmra.mrb[0].mxu0 %v1311
        %v2898 = vpop.f32.mrb[0].mxu0
        %v2899 = vadd.f32 0.0, %v2898
        %v2900 = vpop.f32.mrb[0].mxu0
        %v2901 = vpop.f32.mrb[0].mxu0
        %v2902 = vadd.f32 0.0, %v2901
        %v2903 = vpop.f32.mrb[0].mxu0
        %2904 = vmatprep.mubr.bf16.mxu0 0
        %2905 = vmatmul.mubr.bf16.gmra.mrb[0].mxu0 %v1314
        %v2906 = vpop.f32.mrb[0].mxu0
        %v2907 = vadd.f32 0.0, %v2906
        %v2908 = vpop.f32.mrb[0].mxu0
        %v2909 = vpop.f32.mrb[0].mxu0
        %v2910 = vadd.f32 0.0, %v2909
        %v2911 = vpop.f32.mrb[0].mxu0
        %2912 = vmatprep.mubr.bf16.mxu0 0
        %2913 = vmatmul.mubr.bf16.gmra.mrb[0].mxu0 %v2081
        %v2914 = vpop.f32.mrb[0].mxu0
        %v2915 = vadd.f32 0.0, %v2914
        %v2916 = vpop.f32.mrb[0].mxu0
        %v2917 = vpop.f32.mrb[0].mxu0
        %v2918 = vadd.f32 0.0, %v2917
        %v2919 = vpop.f32.mrb[0].mxu0
        %2920 = vmatprep.mubr.bf16.mxu0 0
        %2921 = vmatmul.mubr.bf16.gmra.mrb[0].mxu0 %v2827
        %v2922 = vpop.f32.mrb[0].mxu0
        %v2923 = vadd.f32 0.0, %v2922
        %v2924 = vpop.f32.mrb[0].mxu0
        %v2925 = vpop.f32.mrb[0].mxu0
        %v2926 = vadd.f32 0.0, %v2925
        %v2927 = vpop.f32.mrb[0].mxu0
        %2928 = vdwg.mxu0
        %v2929 = vadd.f32 %v2681, %v2867
        %v2930 = vadd.f32 %v2682, %v2870
        %v2931 = vadd.f32 %v2683, %v2875
        %v2932 = vadd.f32 %v2684, %v2878
        %v2933 = vadd.f32 %v2685, %v2883
        %v2934 = vadd.f32 %v2686, %v2886
        %v2935 = vadd.f32 %v2687, %v2891
        %v2936 = vadd.f32 %v2688, %v2894
        %v2937 = vadd.f32 %v2689, %v2899
        %v2938 = vadd.f32 %v2690, %v2902
        %v2939 = vadd.f32 %v2691, %v2907
        %v2940 = vadd.f32 %v2692, %v2910
        %v2941 = vadd.f32 %v2693, %v2915
        %v2942 = vadd.f32 %v2694, %v2918
        %v2943 = vadd.f32 %v2695, %v2923
        %v2944 = vadd.f32 %v2696, %v2926
        %v2946 = vsel %vm421, %v2825, 0
        %v2949 = vsel %vm754, %v536, 0
        %2951 = vmatprep.subr.bf16.mxu0 0
        %2952 = vmatpush1.bf16.msra.mxu0 %v2949
        %2953 = vmatprep.subr.bf16.mxu0 0
        %2954 = vmatpush1.bf16.msra.mxu0 0
        %2955 = vmatprep.subr.bf16.mxu0 0
        %2956 = vmatpush1.bf16.msra.mxu0 0
        %2957 = vmatprep.subr.bf16.mxu0 0
        %2958 = vmatpush1.bf16.msra.mxu0 0
        %2959 = vmatprep.subr.bf16.mxu0 0
        %2960 = vmatpush1.bf16.msra.mxu0 0
        %2961 = vmatprep.subr.bf16.mxu0 0
        %2962 = vmatpush1.bf16.msra.mxu0 0
        %2963 = vmatprep.subr.bf16.mxu0 0
        %2964 = vmatpush1.bf16.msra.mxu0 0
        %2965 = vmatprep.subr.bf16.mxu0 0
        %2966 = vmatpush1.bf16.msra.mxu0 0
        %2967 = vmatprep.subr.bf16.mxu0 0
        %2968 = vmatpush1.bf16.msra.mxu0 0
        %2969 = vmatprep.subr.bf16.mxu0 0
        %2970 = vmatpush1.bf16.msra.mxu0 0
        %2971 = vmatprep.subr.bf16.mxu0 0
        %2972 = vmatpush1.bf16.msra.mxu0 0
        %2973 = vmatprep.subr.bf16.mxu0 0
        %2974 = vmatpush1.bf16.msra.mxu0 0
        %2975 = vmatprep.subr.bf16.mxu0 0
        %2976 = vmatpush1.bf16.msra.mxu0 0
        %2977 = vmatprep.subr.bf16.mxu0 0
        %2978 = vmatpush1.bf16.msra.mxu0 0
        %2979 = vmatprep.subr.bf16.mxu0 0
        %2980 = vmatpush1.bf16.msra.mxu0 0
        %2981 = vmatprep.subr.bf16.mxu0 0
        %2982 = vmatpush1.bf16.msra.mxu0 0
        %2983 = vmatprep.mubr.bf16.mxu0 0
        %2984 = vmatmul.mubr.bf16.gmra.mrb[0].mxu0 %v1439
        %v2985 = vpop.f32.mrb[0].mxu0
        %v2986 = vadd.f32 0.0, %v2985
        %v2987 = vpop.f32.mrb[0].mxu0
        %v2988 = vpop.f32.mrb[0].mxu0
        %v2989 = vadd.f32 0.0, %v2988
        %v2990 = vpop.f32.mrb[0].mxu0
        %2991 = vmatprep.mubr.bf16.mxu0 0
        %2992 = vmatmul.mubr.bf16.gmra.mrb[0].mxu0 %v1442
        %v2993 = vpop.f32.mrb[0].mxu0
        %v2994 = vadd.f32 0.0, %v2993
        %v2995 = vpop.f32.mrb[0].mxu0
        %v2996 = vpop.f32.mrb[0].mxu0
        %v2997 = vadd.f32 0.0, %v2996
        %v2998 = vpop.f32.mrb[0].mxu0
        %2999 = vmatprep.mubr.bf16.mxu0 0
        %3000 = vmatmul.mubr.bf16.gmra.mrb[0].mxu0 %v1445
        %v3001 = vpop.f32.mrb[0].mxu0
        %v3002 = vadd.f32 0.0, %v3001
        %v3003 = vpop.f32.mrb[0].mxu0
        %v3004 = vpop.f32.mrb[0].mxu0
        %v3005 = vadd.f32 0.0, %v3004
        %v3006 = vpop.f32.mrb[0].mxu0
        %3007 = vmatprep.mubr.bf16.mxu0 0
        %3008 = vmatmul.mubr.bf16.gmra.mrb[0].mxu0 %v1448
        %v3009 = vpop.f32.mrb[0].mxu0
        %v3010 = vadd.f32 0.0, %v3009
        %v3011 = vpop.f32.mrb[0].mxu0
        %v3012 = vpop.f32.mrb[0].mxu0
        %v3013 = vadd.f32 0.0, %v3012
        %v3014 = vpop.f32.mrb[0].mxu0
        %3015 = vmatprep.mubr.bf16.mxu0 0
        %3016 = vmatmul.mubr.bf16.gmra.mrb[0].mxu0 %v1451
        %v3017 = vpop.f32.mrb[0].mxu0
        %v3018 = vadd.f32 0.0, %v3017
        %v3019 = vpop.f32.mrb[0].mxu0
        %v3020 = vpop.f32.mrb[0].mxu0
        %v3021 = vadd.f32 0.0, %v3020
        %v3022 = vpop.f32.mrb[0].mxu0
        %3023 = vmatprep.mubr.bf16.mxu0 0
        %3024 = vmatmul.mubr.bf16.gmra.mrb[0].mxu0 %v1454
        %v3025 = vpop.f32.mrb[0].mxu0
        %v3026 = vadd.f32 0.0, %v3025
        %v3027 = vpop.f32.mrb[0].mxu0
        %v3028 = vpop.f32.mrb[0].mxu0
        %v3029 = vadd.f32 0.0, %v3028
        %v3030 = vpop.f32.mrb[0].mxu0
        %3031 = vmatprep.mubr.bf16.mxu0 0
        %3032 = vmatmul.mubr.bf16.gmra.mrb[0].mxu0 %v2200
        %v3033 = vpop.f32.mrb[0].mxu0
        %v3034 = vadd.f32 0.0, %v3033
        %v3035 = vpop.f32.mrb[0].mxu0
        %v3036 = vpop.f32.mrb[0].mxu0
        %v3037 = vadd.f32 0.0, %v3036
        %v3038 = vpop.f32.mrb[0].mxu0
        %3039 = vmatprep.mubr.bf16.mxu0 0
        %3040 = vmatmul.mubr.bf16.gmra.mrb[0].mxu0 %v2946
        %v3041 = vpop.f32.mrb[0].mxu0
        %v3042 = vadd.f32 0.0, %v3041
        %v3043 = vpop.f32.mrb[0].mxu0
        %v3044 = vpop.f32.mrb[0].mxu0
        %v3045 = vadd.f32 0.0, %v3044
        %v3046 = vpop.f32.mrb[0].mxu0
        %3047 = vdwg.mxu0
        %v3048 = vadd.f32 %v2800, %v2986
        %v3049 = vadd.f32 %v2801, %v2989
        %v3050 = vadd.f32 %v2802, %v2994
        %v3051 = vadd.f32 %v2803, %v2997
        %v3052 = vadd.f32 %v2804, %v3002
        %v3053 = vadd.f32 %v2805, %v3005
        %v3054 = vadd.f32 %v2806, %v3010
        %v3055 = vadd.f32 %v2807, %v3013
        %v3056 = vadd.f32 %v2808, %v3018
        %v3057 = vadd.f32 %v2809, %v3021
        %v3058 = vadd.f32 %v2810, %v3026
        %v3059 = vadd.f32 %v2811, %v3029
        %v3060 = vadd.f32 %v2812, %v3034
        %v3061 = vadd.f32 %v2813, %v3037
        %v3062 = vadd.f32 %v2814, %v3042
        %v3063 = vadd.f32 %v2815, %v3045
        %v3064 = vand.u32 2147483647, %v2929
        %v3065 = vand.u32 2147483647, %v2930
        %v3066 = vand.u32 2147483647, %v2931
        %v3067 = vand.u32 2147483647, %v2932
        %v3068 = vand.u32 2147483647, %v2933
        %v3069 = vand.u32 2147483647, %v2934
        %v3070 = vand.u32 2147483647, %v2935
        %v3071 = vand.u32 2147483647, %v2936
        %v3072 = vand.u32 2147483647, %v2937
        %v3073 = vand.u32 2147483647, %v2938
        %v3074 = vand.u32 2147483647, %v2939
        %v3075 = vand.u32 2147483647, %v2940
        %v3076 = vand.u32 2147483647, %v2941
        %v3077 = vand.u32 2147483647, %v2942
        %v3078 = vand.u32 2147483647, %v2943
        %v3079 = vand.u32 2147483647, %v2944
        %v3080 = vadd.f32 %v3064, %v3065
        %v3081 = vadd.f32 %v3080, %v3066
        %v3082 = vadd.f32 %v3081, %v3067
        %v3083 = vadd.f32 %v3082, %v3068
        %v3084 = vadd.f32 %v3083, %v3069
        %v3085 = vadd.f32 %v3084, %v3070
        %v3086 = vadd.f32 %v3085, %v3071
        %v3087 = vadd.f32 %v3086, %v3072
        %v3088 = vadd.f32 %v3087, %v3073
        %v3089 = vadd.f32 %v3088, %v3074
        %v3090 = vadd.f32 %v3089, %v3075
        %v3091 = vadd.f32 %v3090, %v3076
        %v3092 = vadd.f32 %v3091, %v3077
        %v3093 = vadd.f32 %v3092, %v3078
        %v3094 = vadd.f32 %v3093, %v3079
        %3095 = vadd.xlane.f32.xlu0 %v3094
        %v3096 = vpop.xlane.xlu0 %3095
        %v3097 = vrot.slane %v3096, 4
        %v3098 = vadd.f32 %v3096, %v3097
        %v3099 = vrot.slane %v3098, 2
        %v3100 = vadd.f32 %v3098, %v3099
        %v3101 = vrot.slane %v3100, 1
        %v3102 = vadd.f32 %v3100, %v3101
        %s3103 = vtos %v3102
        %v3104 = vand.u32 2147483647, %v3048
        %v3105 = vand.u32 2147483647, %v3049
        %v3106 = vand.u32 2147483647, %v3050
        %v3107 = vand.u32 2147483647, %v3051
        %v3108 = vand.u32 2147483647, %v3052
        %v3109 = vand.u32 2147483647, %v3053
        %v3110 = vand.u32 2147483647, %v3054
        %v3111 = vand.u32 2147483647, %v3055
        %v3112 = vand.u32 2147483647, %v3056
        %v3113 = vand.u32 2147483647, %v3057
        %v3114 = vand.u32 2147483647, %v3058
        %v3115 = vand.u32 2147483647, %v3059
        %v3116 = vand.u32 2147483647, %v3060
        %v3117 = vand.u32 2147483647, %v3061
        %v3118 = vand.u32 2147483647, %v3062
        %v3119 = vand.u32 2147483647, %v3063
        %v3120 = vadd.f32 %v3104, %v3105
        %v3121 = vadd.f32 %v3120, %v3106
        %v3122 = vadd.f32 %v3121, %v3107
        %v3123 = vadd.f32 %v3122, %v3108
        %v3124 = vadd.f32 %v3123, %v3109
        %v3125 = vadd.f32 %v3124, %v3110
        %v3126 = vadd.f32 %v3125, %v3111
        %v3127 = vadd.f32 %v3126, %v3112
        %v3128 = vadd.f32 %v3127, %v3113
        %v3129 = vadd.f32 %v3128, %v3114
        %v3130 = vadd.f32 %v3129, %v3115
        %v3131 = vadd.f32 %v3130, %v3116
        %v3132 = vadd.f32 %v3131, %v3117
        %v3133 = vadd.f32 %v3132, %v3118
        %v3134 = vadd.f32 %v3133, %v3119
        %3135 = vadd.xlane.f32.xlu0 %v3134
        %v3136 = vpop.xlane.xlu0 %3135
        %v3137 = vrot.slane %v3136, 4
        %v3138 = vadd.f32 %v3136, %v3137
        %v3139 = vrot.slane %v3138, 2
        %v3140 = vadd.f32 %v3138, %v3139
        %v3141 = vrot.slane %v3140, 1
        %v3142 = vadd.f32 %v3140, %v3141
        %s3143 = vtos %v3142
        %s3144 = smul.f32 %s3103, 0.00012207031
        %s3145 = smul.f32 %s478, 0.00024414063
        %s3146 = sadd.f32 %s3144, %s3145
        %s3147 = smul.f32 %s3143, 0.00024414063
        %s3148 = sadd.f32 %s3146, %s3147
        %s3149 = smul.f32 %s3148, 0.33333334
        %v3150 = vstv %s3149
        %3151 = vst [vmem:[%s205] sm:$0xff] %v3150
        %s3152 = sand.u32 %s120, 1
        %s3153 = scalar_lea.sflag [#allocation3], %s3152
        %s3154 = sand.u32 %s120, 1
        %s3155 = smul.addr %s3154, 8
        %s3156 = scalar_lea.vmem [#allocation2], %s3155
        // Predicated region
        $region37: #{tpu_custom_call.1} parent=35 // pred_check
          %p3157 = pneg %p130
        $region38: #{tpu_custom_call.1} parent=35 // pred_check_branch
          %3159 = sbr.rel (%p3157) target = $region40
        $region39: #{tpu_custom_call.1} parent=35 // pred_region
          %s3161 = ssub.s32 128, 128
          %3162 = vsyncadd %s3153, %s3161
          %s3163 = smul.addr %s18, 128
          %s3164 = scalar_lea.hbm %s4, %s3163
          %s3166 = sshll.u32 %s3156, 4
          %s3167 = int_to_ptr.vmem [resolvable:$true] %s3166
          %3169 = dma.vmem_to_hbm [thread:$0]  %s3167, 128, %s3164, %s3153
        $region40: #{tpu_custom_call.1} parent=35 // pred_fallthru
          _
      $region36: #{tpu_custom_call.1} parent=5 // pred_fallthru
        _
      %p3170 = scmp.le.s32.totalorder 2, %s13
      // Predicated region
      $region41: #{tpu_custom_call.1} parent=5 // pred_check
        %p3171 = pneg %p3170
      $region42: #{tpu_custom_call.1} parent=5 // pred_check_branch
        %3173 = sbr.rel (%p3171) target = $region44
      $region43: #{tpu_custom_call.1} parent=5 // pred_region
        %s3174 = ssub.s32 %s13, 2
        // Predicated region
        $region45: #{tpu_custom_call.1} parent=43 // pred_check
          %p3175 = pneg %p136
        $region46: #{tpu_custom_call.1} parent=43 // pred_check_branch
          %3177 = sbr.rel (%p3175) target = $region48
        $region47: #{tpu_custom_call.1} parent=43 // pred_region
          %s3178 = sand.u32 %s121, 1
          %s3179 = scalar_lea.sflag [#allocation3], %s3178
          %s3180 = sand.u32 %s121, 1
          %s3181 = smul.addr %s3180, 8
          %s3182 = scalar_lea.vmem [#allocation2], %s3181
          %3183 = dma.done %s3179, 128
        $region48: #{tpu_custom_call.1} parent=43 // pred_fallthru
          _
      $region44: #{tpu_custom_call.1} parent=5 // pred_fallthru
        _
    $region6: #{tpu_custom_call.1} parent=1 // loop_footer
      %s17 = sadd.s32 1, %s13
    $region7: #{tpu_custom_call.1} parent=1 // loop_footer_branch
      %12 = sbr.rel target = $region3
    $region8: #{tpu_custom_call.1} parent=1 // loop_exit
      _
    %3184 = vsyncpa [#allocation3], 1
    %s3185 = scalar_lea.sflag [#allocation3], 1
    %3186 = vsyncpa %s3185, 1

</llo_original>
